<compile_context>
chip_gen: v6e
topology: v6e:2x2x1
jax: 0.10.0
libtpu: 0.0.40
codegen_flags: <defaults>
</compile_context>

<pallas_src>
import numpy as np
import jax
import jax.numpy as jnp
from jax import lax
from jax.experimental import pallas as pl
from jax.experimental.pallas import tpu as pltpu


def _loss_kernel(i_tab_ref, j_tab_ref, cnt_ref,
                 ti_ref, pi_ref, mi_ref,
                 tj_ref, pj_ref, mj_ref,
                 out_ref, acc_ref):
    b = pl.program_id(0)
    t = pl.program_id(1)
    n_steps = pl.num_programs(1)
    bi = i_tab_ref[t]          # i block index (triangular enumeration)
    bj = j_tab_ref[t]          # j block index, bj >= bi
    tile = acc_ref.shape[-1]

    @pl.when(t == 0)
    def _():
        acc_ref[...] = jnp.zeros_like(acc_ref)

    # Skip blocks that lie entirely in the masked / padded tail of this batch.
    # (bi <= bj always holds on the triangular grid, so gating on bj suffices.)
    @pl.when(bj * tile < cnt_ref[b])
    def _():
        t_i = ti_ref[0]        # (T, D) i-side true positions (row layout)
        p_i = pi_ref[0]        # (T, D) i-side predicted positions
        m_i = mi_ref[0]        # (T, 1) i-side node mask
        t_j = tj_ref[0]        # (D, T) j-side true positions (lane layout)
        p_j = pj_ref[0]        # (D, T) j-side predicted positions
        m_j = mj_ref[0]        # (1, T) j-side node mask

        T, D = t_i.shape

        # Squared norms: static D unroll, pure VPU column/row slices, no transposes.
        t_sq_i = jnp.zeros((T, 1), jnp.float32)
        p_sq_i = jnp.zeros((T, 1), jnp.float32)
        t_sq_j = jnp.zeros((1, T), jnp.float32)
        p_sq_j = jnp.zeros((1, T), jnp.float32)
        for d in range(D):
            t_sq_i = t_sq_i + t_i[:, d:d + 1] * t_i[:, d:d + 1]
            p_sq_i = p_sq_i + p_i[:, d:d + 1] * p_i[:, d:d + 1]
            t_sq_j = t_sq_j + t_j[d:d + 1, :] * t_j[d:d + 1, :]
            p_sq_j = p_sq_j + p_j[d:d + 1, :] * p_j[d:d + 1, :]

        # Gram matrices on the MXU (K = D contraction, full-f32 precision so the
        # |x|^2 + |y|^2 - 2 x.y cancellation stays accurate).
        dot_kwargs = dict(preferred_element_type=jnp.float32,
                          precision=lax.Precision.HIGHEST)
        t_gram = jnp.dot(t_i, t_j, **dot_kwargs)                       # (T, T)
        p_gram = jnp.dot(p_i, p_j, **dot_kwargs)                       # (T, T)

        td = jnp.sqrt(jnp.maximum(t_sq_i + t_sq_j - 2.0 * t_gram, 0.0))
        pd = jnp.sqrt(jnp.maximum(p_sq_i + p_sq_j - 2.0 * p_gram, 0.0))
        diff = pd - td                                                 # (T, T)

        # Exactly zero the self-distance entries on diagonal blocks (the gram
        # trick leaves tiny positive residues there).
        ri = lax.broadcasted_iota(jnp.int32, (T, 1), 0)
        ci = lax.broadcasted_iota(jnp.int32, (1, T), 1)
        eye = (ri == ci).astype(jnp.float32)                           # (T, T)
        keep = 1.0 - eye * (bi == bj).astype(jnp.float32)

        # Off-diagonal blocks contribute twice (the masked squared-difference
        # matrix is symmetric and i/j tiles are equal-sized).
        weight = jnp.where(bj > bi, 2.0, 1.0)

        sq = diff * diff * (keep * m_i)                                # row mask
        col_sums = jnp.sum(sq, axis=0, keepdims=True)                  # (1, T)
        acc_ref[...] += (weight * col_sums) * m_j                      # col mask

    @pl.when(t == n_steps - 1)
    def _():
        out_ref[0] = acc_ref[...]


def position_mse_loss(true_pos, pred_pos, node_mask, *, tile=128):
    """true_pos, pred_pos: (B, N, D) float; node_mask: (B, N) bool."""
    B, N, D = true_pos.shape
    n_pad = tile * pl.cdiv(N, tile)
    pad = n_pad - N

    tp = true_pos.astype(jnp.float32)
    pp = pred_pos.astype(jnp.float32)
    mf = node_mask.astype(jnp.float32)
    if pad:
        tp = jnp.pad(tp, ((0, 0), (0, pad), (0, 0)))
        pp = jnp.pad(pp, ((0, 0), (0, pad), (0, 0)))
        mf = jnp.pad(mf, ((0, 0), (0, pad)))

    # Dual layouts: i-side row layout (B, N, D); j-side lane-dense (B, D, N).
    tp_dn = jnp.transpose(tp, (0, 2, 1))
    pp_dn = jnp.transpose(pp, (0, 2, 1))
    m_i = mf.reshape(B, n_pad, 1)
    m_j = mf.reshape(B, 1, n_pad)

    nb = n_pad // tile
    # Triangular (i, j >= i) enumeration tables, scalar-prefetched into SMEM.
    ii, jj = np.triu_indices(nb)
    i_tab = jnp.asarray(ii, dtype=jnp.int32)
    j_tab = jnp.asarray(jj, dtype=jnp.int32)
    n_tri = int(ii.shape[0])
    cnt = jnp.sum(node_mask.astype(jnp.int32), axis=-1)                # (B,) = n_b

    pos_i_spec = pl.BlockSpec((1, tile, D), lambda b, t, it, jt, c: (b, it[t], 0))
    pos_j_spec = pl.BlockSpec((1, D, tile), lambda b, t, it, jt, c: (b, 0, jt[t]))
    msk_i_spec = pl.BlockSpec((1, tile, 1), lambda b, t, it, jt, c: (b, it[t], 0))
    msk_j_spec = pl.BlockSpec((1, 1, tile), lambda b, t, it, jt, c: (b, 0, jt[t]))
    out_spec = pl.BlockSpec((1, 1, tile), lambda b, t, it, jt, c: (b, 0, 0))

    sums = pl.pallas_call(
        _loss_kernel,
        out_shape=jax.ShapeDtypeStruct((B, 1, tile), jnp.float32),
        grid_spec=pltpu.PrefetchScalarGridSpec(
            num_scalar_prefetch=3,
            grid=(B, n_tri),
            in_specs=[pos_i_spec, pos_i_spec, msk_i_spec,
                      pos_j_spec, pos_j_spec, msk_j_spec],
            out_specs=out_spec,
            scratch_shapes=[pltpu.VMEM((1, tile), jnp.float32)],
        ),
        compiler_params=pltpu.CompilerParams(
            dimension_semantics=("parallel", "arbitrary"),
            vmem_limit_bytes=32 * 1024 * 1024,
        ),
    )(i_tab, j_tab, cnt, tp, pp, m_i, tp_dn, pp_dn, m_j)

    masked_sq_sum = jnp.sum(sums[:, 0, :], axis=-1)                    # (B,)
    cnt_f = cnt.astype(jnp.float32)
    denom = cnt_f * cnt_f
    # Normalization (/ n_b^2) and the mean over batches are hoisted out of the
    # kernel.  A fully-masked batch returns 0 here (the PyTorch reference would
    # produce NaN for that degenerate case).
    per_batch = jnp.where(denom > 0.0,
                          masked_sq_sum / jnp.maximum(denom, 1.0),
                          0.0)
    return jnp.mean(per_batch)


def _reference_loss(true_pos, pred_pos, node_mask):
    """Pure numpy reference mirroring the PyTorch module exactly."""
    tp = np.asarray(true_pos, dtype=np.float64)
    pp = np.asarray(pred_pos, dtype=np.float64)
    nm = np.asarray(node_mask)
    losses = []
    for b in range(tp.shape[0]):
        t = tp[b][nm[b]]
        p = pp[b][nm[b]]
        td = np.sqrt(((t[:, None, :] - t[None, :, :]) ** 2).sum(-1))
        pd = np.sqrt(((p[:, None, :] - p[None, :, :]) ** 2).sum(-1))
        losses.append(((pd - td) ** 2).mean())
    return float(np.mean(losses))


if __name__ == "__main__":
    B, N, D = 2, 8, 3
    key = jax.random.PRNGKey(0)
    k1, k2 = jax.random.split(key)
    true_pos = jax.random.normal(k1, (B, N, D), dtype=jnp.float32)
    pred_pos = true_pos + 0.1 * jax.random.normal(k2, (B, N, D), dtype=jnp.float32)
    # Deterministic node masks: 6 valid nodes in batch 0, 5 in batch 1.
    lengths = jnp.array([6, 5], dtype=jnp.int32)
    node_mask = jnp.arange(N)[None, :] < lengths[:, None]              # (B, N) bool

    loss = jax.jit(position_mse_loss)(true_pos, pred_pos, node_mask)
    loss = jax.block_until_ready(loss)

    ref = _reference_loss(true_pos, pred_pos, node_mask)
    assert np.allclose(float(loss), ref, rtol=1e-3, atol=1e-6), (float(loss), ref)
    print("KERNEL_OK")
</pallas_src>

<mosaic_0001>
module attributes {stable_mosaic.version = 11 : i64} {
  func.func @_loss_kernel(%arg0: i32, %arg1: i32, %arg2: memref<1xi32, #tpu.memory_space<smem>>, %arg3: memref<1xi32, #tpu.memory_space<smem>>, %arg4: memref<2xi32, #tpu.memory_space<smem>>, %arg5: memref<1x128x3xf32, #tpu.memory_space<vmem>>, %arg6: memref<1x128x3xf32, #tpu.memory_space<vmem>>, %arg7: memref<1x128x1xf32, #tpu.memory_space<vmem>>, %arg8: memref<1x3x128xf32, #tpu.memory_space<vmem>>, %arg9: memref<1x3x128xf32, #tpu.memory_space<vmem>>, %arg10: memref<1x1x128xf32, #tpu.memory_space<vmem>>, %arg11: memref<1x1x128xf32, #tpu.memory_space<vmem>>, %arg12: memref<1x128xf32, #tpu.memory_space<vmem>>) attributes {dimension_semantics = [#tpu.dimension_semantics<parallel>, #tpu.dimension_semantics<arbitrary>], iteration_bounds = array<i64: 2, 1>, scalar_prefetch = 3 : i64, scratch_operands = 1 : i64, tpu.core_type = #tpu.core_type<tc>, window_params = [{transform_indices = @transform_0, window_bounds = array<i64: 1, 128, 3>}, {transform_indices = @transform_1, window_bounds = array<i64: 1, 128, 3>}, {transform_indices = @transform_2, window_bounds = array<i64: 1, 128, 1>}, {transform_indices = @transform_3, window_bounds = array<i64: 1, 3, 128>}, {transform_indices = @transform_4, window_bounds = array<i64: 1, 3, 128>}, {transform_indices = @transform_5, window_bounds = array<i64: 1, 1, 128>}, {transform_indices = @transform_6, window_bounds = array<i64: 1, 1, 128>}]} {
    %0 = arith.index_cast %arg1 : i32 to index
    %1 = memref.load %arg2[%0] : memref<1xi32, #tpu.memory_space<smem>>
    %2 = arith.index_cast %arg1 : i32 to index
    %3 = memref.load %arg3[%2] : memref<1xi32, #tpu.memory_space<smem>>
    %c0_i32 = arith.constant 0 : i32
    %4 = arith.cmpi eq, %arg1, %c0_i32 : i32
    %5 = arith.extui %4 : i1 to i32
    %c0_i32_0 = arith.constant 0 : i32
    %6 = arith.cmpi ne, %5, %c0_i32_0 : i32
    scf.if %6 {
      %cst = arith.constant 0.000000e+00 : f32
      %16 = vector.broadcast %cst : f32 to vector<1x128xf32>
      %c0 = arith.constant 0 : index
      %c0_4 = arith.constant 0 : index
      %17 = vector.load %arg12[%c0, %c0_4] : memref<1x128xf32, #tpu.memory_space<vmem>>, vector<1x128xf32>
      tpu.vector_store %arg12[%c0, %c0_4], %16 {strides = array<i32>} : memref<1x128xf32, #tpu.memory_space<vmem>>, vector<1x128xf32>,
    } else {
    }
    %c128_i32 = arith.constant 128 : i32
    %7 = arith.muli %3, %c128_i32 : i32
    %8 = arith.index_cast %arg0 : i32 to index
    %9 = memref.load %arg4[%8] : memref<2xi32, #tpu.memory_space<smem>>
    %10 = arith.cmpi slt, %7, %9 : i32
    %11 = arith.extui %10 : i1 to i32
    %c0_i32_1 = arith.constant 0 : i32
    %12 = arith.cmpi ne, %11, %c0_i32_1 : i32
    scf.if %12 {
      %c0 = arith.constant 0 : index
      %c0_4 = arith.constant 0 : index
      %c0_5 = arith.constant 0 : index
      %16 = vector.load %arg5[%c0, %c0_4, %c0_5] : memref<1x128x3xf32, #tpu.memory_space<vmem>>, vector<1x128x3xf32>
      %17 = vector.shape_cast %16 : vector<1x128x3xf32> to vector<128x3xf32>
      %c0_6 = arith.constant 0 : index
      %c0_7 = arith.constant 0 : index
      %c0_8 = arith.constant 0 : index
      %18 = vector.load %arg6[%c0_6, %c0_7, %c0_8] : memref<1x128x3xf32, #tpu.memory_space<vmem>>, vector<1x128x3xf32>
      %19 = vector.shape_cast %18 : vector<1x128x3xf32> to vector<128x3xf32>
      %c0_9 = arith.constant 0 : index
      %c0_10 = arith.constant 0 : index
      %c0_11 = arith.constant 0 : index
      %20 = vector.load %arg7[%c0_9, %c0_10, %c0_11] : memref<1x128x1xf32, #tpu.memory_space<vmem>>, vector<1x128x1xf32>
      %21 = vector.shape_cast %20 : vector<1x128x1xf32> to vector<128x1xf32>
      %c0_12 = arith.constant 0 : index
      %c0_13 = arith.constant 0 : index
      %c0_14 = arith.constant 0 : index
      %22 = vector.load %arg8[%c0_12, %c0_13, %c0_14] : memref<1x3x128xf32, #tpu.memory_space<vmem>>, vector<1x3x128xf32>
      %23 = vector.shape_cast %22 : vector<1x3x128xf32> to vector<3x128xf32>
      %c0_15 = arith.constant 0 : index
      %c0_16 = arith.constant 0 : index
      %c0_17 = arith.constant 0 : index
      %24 = vector.load %arg9[%c0_15, %c0_16, %c0_17] : memref<1x3x128xf32, #tpu.memory_space<vmem>>, vector<1x3x128xf32>
      %25 = vector.shape_cast %24 : vector<1x3x128xf32> to vector<3x128xf32>
      %c0_18 = arith.constant 0 : index
      %c0_19 = arith.constant 0 : index
      %c0_20 = arith.constant 0 : index
      %26 = vector.load %arg10[%c0_18, %c0_19, %c0_20] : memref<1x1x128xf32, #tpu.memory_space<vmem>>, vector<1x1x128xf32>
      %27 = vector.shape_cast %26 : vector<1x1x128xf32> to vector<1x128xf32>
      %cst = arith.constant 0.000000e+00 : f32
      %28 = vector.broadcast %cst : f32 to vector<128x1xf32>
      %cst_21 = arith.constant 0.000000e+00 : f32
      %29 = vector.broadcast %cst_21 : f32 to vector<128x1xf32>
      %cst_22 = arith.constant 0.000000e+00 : f32
      %30 = vector.broadcast %cst_22 : f32 to vector<1x128xf32>
      %cst_23 = arith.constant 0.000000e+00 : f32
      %31 = vector.broadcast %cst_23 : f32 to vector<1x128xf32>
      %32 = vector.extract_strided_slice %17 {offsets = [0, 0], sizes = [128, 1], strides = [1, 1]} : vector<128x3xf32> to vector<128x1xf32>
      %33 = vector.extract_strided_slice %17 {offsets = [0, 0], sizes = [128, 1], strides = [1, 1]} : vector<128x3xf32> to vector<128x1xf32>
      %34 = arith.mulf %32, %33 : vector<128x1xf32>
      %35 = arith.addf %28, %34 : vector<128x1xf32>
      %36 = vector.extract_strided_slice %19 {offsets = [0, 0], sizes = [128, 1], strides = [1, 1]} : vector<128x3xf32> to vector<128x1xf32>
      %37 = vector.extract_strided_slice %19 {offsets = [0, 0], sizes = [128, 1], strides = [1, 1]} : vector<128x3xf32> to vector<128x1xf32>
      %38 = arith.mulf %36, %37 : vector<128x1xf32>
      %39 = arith.addf %29, %38 : vector<128x1xf32>
      %40 = vector.extract_strided_slice %23 {offsets = [0, 0], sizes = [1, 128], strides = [1, 1]} : vector<3x128xf32> to vector<1x128xf32>
      %41 = vector.extract_strided_slice %23 {offsets = [0, 0], sizes = [1, 128], strides = [1, 1]} : vector<3x128xf32> to vector<1x128xf32>
      %42 = arith.mulf %40, %41 : vector<1x128xf32>
      %43 = arith.addf %30, %42 : vector<1x128xf32>
      %44 = vector.extract_strided_slice %25 {offsets = [0, 0], sizes = [1, 128], strides = [1, 1]} : vector<3x128xf32> to vector<1x128xf32>
      %45 = vector.extract_strided_slice %25 {offsets = [0, 0], sizes = [1, 128], strides = [1, 1]} : vector<3x128xf32> to vector<1x128xf32>
      %46 = arith.mulf %44, %45 : vector<1x128xf32>
      %47 = arith.addf %31, %46 : vector<1x128xf32>
      %48 = vector.extract_strided_slice %17 {offsets = [0, 1], sizes = [128, 1], strides = [1, 1]} : vector<128x3xf32> to vector<128x1xf32>
      %49 = vector.extract_strided_slice %17 {offsets = [0, 1], sizes = [128, 1], strides = [1, 1]} : vector<128x3xf32> to vector<128x1xf32>
      %50 = arith.mulf %48, %49 : vector<128x1xf32>
      %51 = arith.addf %35, %50 : vector<128x1xf32>
      %52 = vector.extract_strided_slice %19 {offsets = [0, 1], sizes = [128, 1], strides = [1, 1]} : vector<128x3xf32> to vector<128x1xf32>
      %53 = vector.extract_strided_slice %19 {offsets = [0, 1], sizes = [128, 1], strides = [1, 1]} : vector<128x3xf32> to vector<128x1xf32>
      %54 = arith.mulf %52, %53 : vector<128x1xf32>
      %55 = arith.addf %39, %54 : vector<128x1xf32>
      %56 = vector.extract_strided_slice %23 {offsets = [1, 0], sizes = [1, 128], strides = [1, 1]} : vector<3x128xf32> to vector<1x128xf32>
      %57 = vector.extract_strided_slice %23 {offsets = [1, 0], sizes = [1, 128], strides = [1, 1]} : vector<3x128xf32> to vector<1x128xf32>
      %58 = arith.mulf %56, %57 : vector<1x128xf32>
      %59 = arith.addf %43, %58 : vector<1x128xf32>
      %60 = vector.extract_strided_slice %25 {offsets = [1, 0], sizes = [1, 128], strides = [1, 1]} : vector<3x128xf32> to vector<1x128xf32>
      %61 = vector.extract_strided_slice %25 {offsets = [1, 0], sizes = [1, 128], strides = [1, 1]} : vector<3x128xf32> to vector<1x128xf32>
      %62 = arith.mulf %60, %61 : vector<1x128xf32>
      %63 = arith.addf %47, %62 : vector<1x128xf32>
      %64 = vector.extract_strided_slice %17 {offsets = [0, 2], sizes = [128, 1], strides = [1, 1]} : vector<128x3xf32> to vector<128x1xf32>
      %65 = vector.extract_strided_slice %17 {offsets = [0, 2], sizes = [128, 1], strides = [1, 1]} : vector<128x3xf32> to vector<128x1xf32>
      %66 = arith.mulf %64, %65 : vector<128x1xf32>
      %67 = arith.addf %51, %66 : vector<128x1xf32>
      %68 = vector.extract_strided_slice %19 {offsets = [0, 2], sizes = [128, 1], strides = [1, 1]} : vector<128x3xf32> to vector<128x1xf32>
      %69 = vector.extract_strided_slice %19 {offsets = [0, 2], sizes = [128, 1], strides = [1, 1]} : vector<128x3xf32> to vector<128x1xf32>
      %70 = arith.mulf %68, %69 : vector<128x1xf32>
      %71 = arith.addf %55, %70 : vector<128x1xf32>
      %72 = vector.extract_strided_slice %23 {offsets = [2, 0], sizes = [1, 128], strides = [1, 1]} : vector<3x128xf32> to vector<1x128xf32>
      %73 = vector.extract_strided_slice %23 {offsets = [2, 0], sizes = [1, 128], strides = [1, 1]} : vector<3x128xf32> to vector<1x128xf32>
      %74 = arith.mulf %72, %73 : vector<1x128xf32>
      %75 = arith.addf %59, %74 : vector<1x128xf32>
      %76 = vector.extract_strided_slice %25 {offsets = [2, 0], sizes = [1, 128], strides = [1, 1]} : vector<3x128xf32> to vector<1x128xf32>
      %77 = vector.extract_strided_slice %25 {offsets = [2, 0], sizes = [1, 128], strides = [1, 1]} : vector<3x128xf32> to vector<1x128xf32>
      %78 = arith.mulf %76, %77 : vector<1x128xf32>
      %79 = arith.addf %63, %78 : vector<1x128xf32>
      %cst_24 = arith.constant dense<0.000000e+00> : vector<128x128xf32>
      %80 = tpu.matmul %17, %23, %cst_24 {dimension_numbers = #tpu.dot_dimension_numbers<[1], [0], [0], [1], [0, 0, 1, 1], [], []>, precision = #tpu.contract_precision<fp32>} : vector<128x3xf32>, vector<3x128xf32>, vector<128x128xf32> -> vector<128x128xf32>
      %cst_25 = arith.constant dense<0.000000e+00> : vector<128x128xf32>
      %81 = tpu.matmul %19, %25, %cst_25 {dimension_numbers = #tpu.dot_dimension_numbers<[1], [0], [0], [1], [0, 0, 1, 1], [], []>, precision = #tpu.contract_precision<fp32>} : vector<128x3xf32>, vector<3x128xf32>, vector<128x128xf32> -> vector<128x128xf32>
      %82 = vector.broadcast %67 : vector<128x1xf32> to vector<128x128xf32>
      %83 = vector.broadcast %75 : vector<1x128xf32> to vector<128x128xf32>
      %84 = arith.addf %82, %83 : vector<128x128xf32>
      %cst_26 = arith.constant 2.000000e+00 : f32
      %85 = vector.broadcast %cst_26 : f32 to vector<128x128xf32>
      %86 = arith.mulf %85, %80 : vector<128x128xf32>
      %87 = arith.subf %84, %86 : vector<128x128xf32>
      %cst_27 = arith.constant 0.000000e+00 : f32
      %88 = vector.broadcast %cst_27 : f32 to vector<128x128xf32>
      %89 = arith.maximumf %87, %88 : vector<128x128xf32>
      %90 = math.sqrt %89 : vector<128x128xf32>
      %91 = vector.broadcast %71 : vector<128x1xf32> to vector<128x128xf32>
      %92 = vector.broadcast %79 : vector<1x128xf32> to vector<128x128xf32>
      %93 = arith.addf %91, %92 : vector<128x128xf32>
      %cst_28 = arith.constant 2.000000e+00 : f32
      %94 = vector.broadcast %cst_28 : f32 to vector<128x128xf32>
      %95 = arith.mulf %94, %81 : vector<128x128xf32>
      %96 = arith.subf %93, %95 : vector<128x128xf32>
      %cst_29 = arith.constant 0.000000e+00 : f32
      %97 = vector.broadcast %cst_29 : f32 to vector<128x128xf32>
      %98 = arith.maximumf %96, %97 : vector<128x128xf32>
      %99 = math.sqrt %98 : vector<128x128xf32>
      %100 = arith.subf %99, %90 : vector<128x128xf32>
      %101 = tpu.iota {dimensions = array<i32: 0>} : vector<128x1xi32>
      %102 = tpu.iota {dimensions = array<i32: 1>} : vector<1x128xi32>
      %103 = vector.broadcast %101 : vector<128x1xi32> to vector<128x128xi32>
      %104 = vector.broadcast %102 : vector<1x128xi32> to vector<128x128xi32>
      %105 = arith.cmpi eq, %103, %104 : vector<128x128xi32>
      %106 = arith.extui %105 : vector<128x128xi1> to vector<128x128xi32>
      %107 = arith.sitofp %106 : vector<128x128xi32> to vector<128x128xf32>
      %108 = arith.cmpi eq, %1, %3 : i32
      %109 = arith.extui %108 : i1 to i32
      %110 = arith.sitofp %109 : i32 to f32
      %111 = vector.broadcast %110 : f32 to vector<128x128xf32>
      %112 = arith.mulf %107, %111 : vector<128x128xf32>
      %cst_30 = arith.constant 1.000000e+00 : f32
      %113 = vector.broadcast %cst_30 : f32 to vector<128x128xf32>
      %114 = arith.subf %113, %112 : vector<128x128xf32>
      %115 = arith.cmpi sgt, %3, %1 : i32
      %cst_31 = arith.constant 2.000000e+00 : f32
      %cst_32 = arith.constant 1.000000e+00 : f32
      %116 = arith.select %115, %cst_31, %cst_32 : f32
      %117 = arith.mulf %100, %100 : vector<128x128xf32>
      %118 = vector.broadcast %21 : vector<128x1xf32> to vector<128x128xf32>
      %119 = arith.mulf %114, %118 : vector<128x128xf32>
      %120 = arith.mulf %117, %119 : vector<128x128xf32>
      %cst_33 = arith.constant dense<0.000000e+00> : vector<128xf32>
      %121 = vector.multi_reduction <add>, %120, %cst_33 [0] : vector<128x128xf32> to vector<128xf32>
      %122 = vector.shape_cast %121 : vector<128xf32> to vector<1x128xf32>
      %c0_34 = arith.constant 0 : index
      %c0_35 = arith.constant 0 : index
      %123 = vector.load %arg12[%c0_34, %c0_35] : memref<1x128xf32, #tpu.memory_space<vmem>>, vector<1x128xf32>
      %124 = vector.broadcast %116 : f32 to vector<1x128xf32>
      %125 = arith.mulf %124, %122 : vector<1x128xf32>
      %126 = arith.mulf %125, %27 : vector<1x128xf32>
      %127 = arith.addf %123, %126 : vector<1x128xf32>
      %c0_36 = arith.constant 0 : index
      %c0_37 = arith.constant 0 : index
      %128 = vector.load %arg12[%c0_36, %c0_37] : memref<1x128xf32, #tpu.memory_space<vmem>>, vector<1x128xf32>
      tpu.vector_store %arg12[%c0_36, %c0_37], %127 {strides = array<i32>} : memref<1x128xf32, #tpu.memory_space<vmem>>, vector<1x128xf32>,
    } else {
    }
    %c0_i32_2 = arith.constant 0 : i32
    %13 = arith.cmpi eq, %arg1, %c0_i32_2 : i32
    %14 = arith.extui %13 : i1 to i32
    %c0_i32_3 = arith.constant 0 : i32
    %15 = arith.cmpi ne, %14, %c0_i32_3 : i32
    scf.if %15 {
      %c0 = arith.constant 0 : index
      %c0_4 = arith.constant 0 : index
      %16 = vector.load %arg12[%c0, %c0_4] : memref<1x128xf32, #tpu.memory_space<vmem>>, vector<1x128xf32>
      %c0_5 = arith.constant 0 : index
      %c0_6 = arith.constant 0 : index
      %c0_7 = arith.constant 0 : index
      %17 = vector.load %arg11[%c0_5, %c0_6, %c0_7] : memref<1x1x128xf32, #tpu.memory_space<vmem>>, vector<1x1x128xf32>
      %18 = vector.shape_cast %17 : vector<1x1x128xf32> to vector<1x128xf32>
      %19 = vector.shape_cast %16 : vector<1x128xf32> to vector<1x1x128xf32>
      tpu.vector_store %arg11[%c0_5, %c0_6, %c0_7], %19 {strides = array<i32>} : memref<1x1x128xf32, #tpu.memory_space<vmem>>, vector<1x1x128xf32>,
    } else {
    }
    return
  }
  func.func @transform_0(%arg0: i32, %arg1: i32, %arg2: memref<1xi32, #tpu.memory_space<smem>>, %arg3: memref<1xi32, #tpu.memory_space<smem>>, %arg4: memref<2xi32, #tpu.memory_space<smem>>) -> (i32, i32, i32) {
    %0 = arith.index_cast %arg1 : i32 to index
    %1 = memref.load %arg2[%0] : memref<1xi32, #tpu.memory_space<smem>>
    %c0_i32 = arith.constant 0 : i32
    %c0_i32_0 = arith.constant 0 : i32
    return %arg0, %1, %c0_i32 : i32, i32, i32
  }
  func.func @transform_1(%arg0: i32, %arg1: i32, %arg2: memref<1xi32, #tpu.memory_space<smem>>, %arg3: memref<1xi32, #tpu.memory_space<smem>>, %arg4: memref<2xi32, #tpu.memory_space<smem>>) -> (i32, i32, i32) {
    %0 = arith.index_cast %arg1 : i32 to index
    %1 = memref.load %arg2[%0] : memref<1xi32, #tpu.memory_space<smem>>
    %c0_i32 = arith.constant 0 : i32
    %c0_i32_0 = arith.constant 0 : i32
    return %arg0, %1, %c0_i32 : i32, i32, i32
  }
  func.func @transform_2(%arg0: i32, %arg1: i32, %arg2: memref<1xi32, #tpu.memory_space<smem>>, %arg3: memref<1xi32, #tpu.memory_space<smem>>, %arg4: memref<2xi32, #tpu.memory_space<smem>>) -> (i32, i32, i32) {
    %0 = arith.index_cast %arg1 : i32 to index
    %1 = memref.load %arg2[%0] : memref<1xi32, #tpu.memory_space<smem>>
    %c0_i32 = arith.constant 0 : i32
    %c0_i32_0 = arith.constant 0 : i32
    return %arg0, %1, %c0_i32 : i32, i32, i32
  }
  func.func @transform_3(%arg0: i32, %arg1: i32, %arg2: memref<1xi32, #tpu.memory_space<smem>>, %arg3: memref<1xi32, #tpu.memory_space<smem>>, %arg4: memref<2xi32, #tpu.memory_space<smem>>) -> (i32, i32, i32) {
    %0 = arith.index_cast %arg1 : i32 to index
    %1 = memref.load %arg3[%0] : memref<1xi32, #tpu.memory_space<smem>>
    %c0_i32 = arith.constant 0 : i32
    %c0_i32_0 = arith.constant 0 : i32
    return %arg0, %c0_i32, %1 : i32, i32, i32
  }
  func.func @transform_4(%arg0: i32, %arg1: i32, %arg2: memref<1xi32, #tpu.memory_space<smem>>, %arg3: memref<1xi32, #tpu.memory_space<smem>>, %arg4: memref<2xi32, #tpu.memory_space<smem>>) -> (i32, i32, i32) {
    %0 = arith.index_cast %arg1 : i32 to index
    %1 = memref.load %arg3[%0] : memref<1xi32, #tpu.memory_space<smem>>
    %c0_i32 = arith.constant 0 : i32
    %c0_i32_0 = arith.constant 0 : i32
    return %arg0, %c0_i32, %1 : i32, i32, i32
  }
  func.func @transform_5(%arg0: i32, %arg1: i32, %arg2: memref<1xi32, #tpu.memory_space<smem>>, %arg3: memref<1xi32, #tpu.memory_space<smem>>, %arg4: memref<2xi32, #tpu.memory_space<smem>>) -> (i32, i32, i32) {
    %0 = arith.index_cast %arg1 : i32 to index
    %1 = memref.load %arg3[%0] : memref<1xi32, #tpu.memory_space<smem>>
    %c0_i32 = arith.constant 0 : i32
    %c0_i32_0 = arith.constant 0 : i32
    return %arg0, %c0_i32, %1 : i32, i32, i32
  }
  func.func @transform_6(%arg0: i32, %arg1: i32, %arg2: memref<1xi32, #tpu.memory_space<smem>>, %arg3: memref<1xi32, #tpu.memory_space<smem>>, %arg4: memref<2xi32, #tpu.memory_space<smem>>) -> (i32, i32, i32) {
    %c0_i32 = arith.constant 0 : i32
    %c0_i32_0 = arith.constant 0 : i32
    %c0_i32_1 = arith.constant 0 : i32
    return %arg0, %c0_i32, %c0_i32_0 : i32, i32, i32
  }
}

</mosaic_0001>

<llo_original>
// kernel: position_mse_loss.1
$region0: #{position_mse_loss.1}
  #allocation0 [shape = 'u32[]', space=smem, size = 0x4, offset = 0x4, fixed_abs, tag = 'smem constant byte address 0x4 - core index']
  #allocation1 [shape = 'u32[144,128]{1,0:T(1,128)}', space=vmem, size = 0x12000, scoped, tag = 'internal scratch']
  #allocation2 [shape = 'f32[1,128]{1,0:T(1,128)}', space=vmem, size = 0x200, scoped, tag = 'scratch operand']
  #allocation3 [shape = 's32[1]{0}', space=sflag, size = 0x4, scoped, tag = 'scoped memory for position_mse_loss.1']
  #allocation4 [shape = 's32[1]{0:T(128)S(6)}', space=smem, size = 0x200, scoped, tag = 'prefetched SMEM operand 0']
  #allocation5 [shape = 's32[1]{0:T(128)S(6)}', space=smem, size = 0x200, scoped, tag = 'prefetched SMEM operand 1']
  #allocation6 [shape = 'u8[512]{0}', space=smem, size = 0x200, scoped, tag = 'prefetched SMEM operand 2']
  %s0 = inlined_call_operand.<no memory space> [shape: s32[1], index: 0, kind: input, shape index: {}, may-alias: {0,1}]
  %s1 = inlined_call_operand.<no memory space> [shape: s32[1], index: 1, kind: input, shape index: {}, may-alias: {0,1}]
  %s2 = inlined_call_operand.vmem [shape: s32[2], index: 2, kind: input, shape index: {}]
  %s3 = inlined_call_operand.vmem [shape: f32[2,128,3], index: 3, kind: input, shape index: {}]
  %s4 = inlined_call_operand.vmem [shape: f32[2,128,3], index: 4, kind: input, shape index: {}]
  %s5 = inlined_call_operand.vmem [shape: f32[2,128,1], index: 5, kind: input, shape index: {}]
  %s6 = inlined_call_operand.vmem [shape: f32[2,3,128], index: 6, kind: input, shape index: {}]
  %s7 = inlined_call_operand.vmem [shape: f32[2,3,128], index: 7, kind: input, shape index: {}]
  %s8 = inlined_call_operand.vmem [shape: f32[2,1,128], index: 8, kind: input, shape index: {}]
  %s9 = inlined_call_operand.vmem [shape: f32[2,1,128], index: 9, kind: output, shape index: {}]
  %s10 = sld [smem:[#allocation0]]
  $region69: #{position_mse_loss.1} parent=0
    _
  %s12 = ssub.s32 1, %s10
  %s13 = scalar_select 0, %s12, %s10
  %14 = sst [smem:[#allocation4]] %s0
  %15 = sst [smem:[#allocation5]] %s1
  %s16 = sshll.u32 %s2, 4
  %s17 = int_to_ptr.vmem [resolvable:$true] %s16
  %19 = dma.vmem_to_smem %s17, 16, [#allocation6], [#allocation3]
  %20 = dma.done [#allocation3], 16
  %21 = sfence
  loop: start=0, step=1, limit=4
  $region2: #{position_mse_loss.1} parent=0 // loop_pre_header
    _
  $region3: #{position_mse_loss.1} parent=0 // loop_header
    %s23 = sphi 0, %s27
    %p24 = scmp.ge.s32.totalorder %s23, 4
    %s30 = sphi 0, %s42
    %s31 = sphi 0, %s38
    %s32 = sphi 0, %s30
    %s33 = sphi 0, %s31
    %s34 = sphi 0, %s32
    %s35 = sphi 0, %s33
    %s49 = sphi 0, %s51
    %s52 = sphi 0, %s49
    %s53 = sphi 0, %s52
    %s69 = sphi 0, %s53
    %s79 = sphi 0, %s81
    %s82 = sphi 0, %s79
    %s83 = sphi 0, %s82
    %s99 = sphi 0, %s83
    %s109 = sphi 0, %s111
    %s112 = sphi 0, %s109
    %s113 = sphi 0, %s112
    %s129 = sphi 0, %s113
    %s139 = sphi 0, %s141
    %s142 = sphi 0, %s139
    %s143 = sphi 0, %s142
    %s159 = sphi 0, %s143
    %s169 = sphi 0, %s171
    %s172 = sphi 0, %s169
    %s173 = sphi 0, %s172
    %s189 = sphi 0, %s173
    %s199 = sphi 0, %s201
    %s202 = sphi 0, %s199
    %s203 = sphi 0, %s202
    %s219 = sphi 0, %s203
    %s225 = sphi 0, %s227
    %s228 = sphi 0, %s225
    %s229 = sphi 0, %s228
    %s245 = sphi 0, %s229
  $region4: #{position_mse_loss.1} parent=0 // loop_header_branch
    %26 = sbr.rel (%p24) target = $region8
  $region5: #{position_mse_loss.1} parent=0 // loop_body
    %s28 = ssub.s32 %s23, 1
    %s29 = ssub.s32 %s23, 2
    %s36 = sadd.s32 1, %s31
    %p37 = scmp.ge.s32.totalorder %s36, 1
    %s38 = scalar_select %p37, 0, %s36
    %s39 = sadd.s32 1, %s30
    %s40 = scalar_select %p37, %s39, %s30
    %p41 = scmp.ge.s32.totalorder %s40, 2
    %s42 = scalar_select %p41, 0, %s40
    %s43 = sld [smem:[#allocation4 + %s31]]
    %s44 = sld [smem:[#allocation4 + %s38]]
    %s45 = ssub.s32 %s30, %s42
    %s46 = ssub.s32 %s43, %s44
    %s47 = sor.u32 %s45, %s46
    %p48 = scmp.eq.s32.totalorder %s47, 0
    %s50 = sadd.s32 %s49, 1
    %s51 = scalar_select %p48, %s49, %s50
    %p54 = pneg %p48
    %p55 = scmp.eq.s32.totalorder %s23, 1
    %p56 = por %p54, %p55
    %p57 = scmp.ne.s32.totalorder %s49, %s52
    %p58 = scmp.eq.s32.totalorder %s23, 0
    %p59 = por %p57, %p58
    %p60 = scmp.ne.s32.totalorder %s49, %s52
    %p61 = scmp.eq.s32.totalorder %s28, 1
    %p62 = por %p60, %p61
    %p63 = scmp.ne.s32.totalorder %s52, %s53
    %p64 = scmp.eq.s32.totalorder %s28, 0
    %p65 = por %p63, %p64
    %p66 = scmp.ne.s32.totalorder %s52, %s53
    %p67 = scmp.eq.s32.totalorder %s29, 1
    %p68 = por %p66, %p67
    %p70 = scmp.ne.s32.totalorder %s53, %s69
    %p71 = scmp.eq.s32.totalorder %s29, 0
    %p72 = por %p70, %p71
    %s73 = sld [smem:[#allocation4 + %s31]]
    %s74 = sld [smem:[#allocation4 + %s38]]
    %s75 = ssub.s32 %s30, %s42
    %s76 = ssub.s32 %s73, %s74
    %s77 = sor.u32 %s75, %s76
    %p78 = scmp.eq.s32.totalorder %s77, 0
    %s80 = sadd.s32 %s79, 1
    %s81 = scalar_select %p78, %s79, %s80
    %p84 = pneg %p78
    %p85 = scmp.eq.s32.totalorder %s23, 1
    %p86 = por %p84, %p85
    %p87 = scmp.ne.s32.totalorder %s79, %s82
    %p88 = scmp.eq.s32.totalorder %s23, 0
    %p89 = por %p87, %p88
    %p90 = scmp.ne.s32.totalorder %s79, %s82
    %p91 = scmp.eq.s32.totalorder %s28, 1
    %p92 = por %p90, %p91
    %p93 = scmp.ne.s32.totalorder %s82, %s83
    %p94 = scmp.eq.s32.totalorder %s28, 0
    %p95 = por %p93, %p94
    %p96 = scmp.ne.s32.totalorder %s82, %s83
    %p97 = scmp.eq.s32.totalorder %s29, 1
    %p98 = por %p96, %p97
    %p100 = scmp.ne.s32.totalorder %s83, %s99
    %p101 = scmp.eq.s32.totalorder %s29, 0
    %p102 = por %p100, %p101
    %s103 = sld [smem:[#allocation4 + %s31]]
    %s104 = sld [smem:[#allocation4 + %s38]]
    %s105 = ssub.s32 %s30, %s42
    %s106 = ssub.s32 %s103, %s104
    %s107 = sor.u32 %s105, %s106
    %p108 = scmp.eq.s32.totalorder %s107, 0
    %s110 = sadd.s32 %s109, 1
    %s111 = scalar_select %p108, %s109, %s110
    %p114 = pneg %p108
    %p115 = scmp.eq.s32.totalorder %s23, 1
    %p116 = por %p114, %p115
    %p117 = scmp.ne.s32.totalorder %s109, %s112
    %p118 = scmp.eq.s32.totalorder %s23, 0
    %p119 = por %p117, %p118
    %p120 = scmp.ne.s32.totalorder %s109, %s112
    %p121 = scmp.eq.s32.totalorder %s28, 1
    %p122 = por %p120, %p121
    %p123 = scmp.ne.s32.totalorder %s112, %s113
    %p124 = scmp.eq.s32.totalorder %s28, 0
    %p125 = por %p123, %p124
    %p126 = scmp.ne.s32.totalorder %s112, %s113
    %p127 = scmp.eq.s32.totalorder %s29, 1
    %p128 = por %p126, %p127
    %p130 = scmp.ne.s32.totalorder %s113, %s129
    %p131 = scmp.eq.s32.totalorder %s29, 0
    %p132 = por %p130, %p131
    %s133 = sld [smem:[#allocation5 + %s31]]
    %s134 = sld [smem:[#allocation5 + %s38]]
    %s135 = ssub.s32 %s30, %s42
    %s136 = ssub.s32 %s133, %s134
    %s137 = sor.u32 %s135, %s136
    %p138 = scmp.eq.s32.totalorder %s137, 0
    %s140 = sadd.s32 %s139, 1
    %s141 = scalar_select %p138, %s139, %s140
    %p144 = pneg %p138
    %p145 = scmp.eq.s32.totalorder %s23, 1
    %p146 = por %p144, %p145
    %p147 = scmp.ne.s32.totalorder %s139, %s142
    %p148 = scmp.eq.s32.totalorder %s23, 0
    %p149 = por %p147, %p148
    %p150 = scmp.ne.s32.totalorder %s139, %s142
    %p151 = scmp.eq.s32.totalorder %s28, 1
    %p152 = por %p150, %p151
    %p153 = scmp.ne.s32.totalorder %s142, %s143
    %p154 = scmp.eq.s32.totalorder %s28, 0
    %p155 = por %p153, %p154
    %p156 = scmp.ne.s32.totalorder %s142, %s143
    %p157 = scmp.eq.s32.totalorder %s29, 1
    %p158 = por %p156, %p157
    %p160 = scmp.ne.s32.totalorder %s143, %s159
    %p161 = scmp.eq.s32.totalorder %s29, 0
    %p162 = por %p160, %p161
    %s163 = sld [smem:[#allocation5 + %s31]]
    %s164 = sld [smem:[#allocation5 + %s38]]
    %s165 = ssub.s32 %s30, %s42
    %s166 = ssub.s32 %s163, %s164
    %s167 = sor.u32 %s165, %s166
    %p168 = scmp.eq.s32.totalorder %s167, 0
    %s170 = sadd.s32 %s169, 1
    %s171 = scalar_select %p168, %s169, %s170
    %p174 = pneg %p168
    %p175 = scmp.eq.s32.totalorder %s23, 1
    %p176 = por %p174, %p175
    %p177 = scmp.ne.s32.totalorder %s169, %s172
    %p178 = scmp.eq.s32.totalorder %s23, 0
    %p179 = por %p177, %p178
    %p180 = scmp.ne.s32.totalorder %s169, %s172
    %p181 = scmp.eq.s32.totalorder %s28, 1
    %p182 = por %p180, %p181
    %p183 = scmp.ne.s32.totalorder %s172, %s173
    %p184 = scmp.eq.s32.totalorder %s28, 0
    %p185 = por %p183, %p184
    %p186 = scmp.ne.s32.totalorder %s172, %s173
    %p187 = scmp.eq.s32.totalorder %s29, 1
    %p188 = por %p186, %p187
    %p190 = scmp.ne.s32.totalorder %s173, %s189
    %p191 = scmp.eq.s32.totalorder %s29, 0
    %p192 = por %p190, %p191
    %s193 = sld [smem:[#allocation5 + %s31]]
    %s194 = sld [smem:[#allocation5 + %s38]]
    %s195 = ssub.s32 %s30, %s42
    %s196 = ssub.s32 %s193, %s194
    %s197 = sor.u32 %s195, %s196
    %p198 = scmp.eq.s32.totalorder %s197, 0
    %s200 = sadd.s32 %s199, 1
    %s201 = scalar_select %p198, %s199, %s200
    %p204 = pneg %p198
    %p205 = scmp.eq.s32.totalorder %s23, 1
    %p206 = por %p204, %p205
    %p207 = scmp.ne.s32.totalorder %s199, %s202
    %p208 = scmp.eq.s32.totalorder %s23, 0
    %p209 = por %p207, %p208
    %p210 = scmp.ne.s32.totalorder %s199, %s202
    %p211 = scmp.eq.s32.totalorder %s28, 1
    %p212 = por %p210, %p211
    %p213 = scmp.ne.s32.totalorder %s202, %s203
    %p214 = scmp.eq.s32.totalorder %s28, 0
    %p215 = por %p213, %p214
    %p216 = scmp.ne.s32.totalorder %s202, %s203
    %p217 = scmp.eq.s32.totalorder %s29, 1
    %p218 = por %p216, %p217
    %p220 = scmp.ne.s32.totalorder %s203, %s219
    %p221 = scmp.eq.s32.totalorder %s29, 0
    %p222 = por %p220, %p221
    %s223 = ssub.s32 %s30, %s42
    %p224 = scmp.eq.s32.totalorder %s223, 0
    %s226 = sadd.s32 %s225, 1
    %s227 = scalar_select %p224, %s225, %s226
    %p230 = pneg %p224
    %p231 = scmp.eq.s32.totalorder %s23, 1
    %p232 = por %p230, %p231
    %p233 = scmp.ne.s32.totalorder %s225, %s228
    %p234 = scmp.eq.s32.totalorder %s23, 0
    %p235 = por %p233, %p234
    %p236 = scmp.ne.s32.totalorder %s225, %s228
    %p237 = scmp.eq.s32.totalorder %s28, 1
    %p238 = por %p236, %p237
    %p239 = scmp.ne.s32.totalorder %s228, %s229
    %p240 = scmp.eq.s32.totalorder %s28, 0
    %p241 = por %p239, %p240
    %p242 = scmp.ne.s32.totalorder %s228, %s229
    %p243 = scmp.eq.s32.totalorder %s29, 1
    %p244 = por %p242, %p243
    %p246 = scmp.ne.s32.totalorder %s229, %s245
    %p247 = scmp.eq.s32.totalorder %s29, 0
    %p248 = por %p246, %p247
    %p249 = scmp.le.s32.totalorder 1, %s23
    %p250 = scmp.lt.s32.totalorder %s23, 3
    %p251 = pnand %p249, %p250
    %p252 = pneg %p251
    // Predicated region
    $region9: #{position_mse_loss.1} parent=5 // pred_check
      _
    $region10: #{position_mse_loss.1} parent=5 // pred_check_branch
      %254 = sbr.rel (%p251) target = $region12
    $region11: #{position_mse_loss.1} parent=5 // pred_region
      %s255 = ssub.s32 %s23, 1
    $region12: #{position_mse_loss.1} parent=5 // pred_fallthru
      _
    %p256 = scmp.lt.s32.totalorder %s23, 2
    // Predicated region
    $region13: #{position_mse_loss.1} parent=5 // pred_check
      %p257 = pneg %p256
    $region14: #{position_mse_loss.1} parent=5 // pred_check_branch
      %259 = sbr.rel (%p257) target = $region16
    $region15: #{position_mse_loss.1} parent=5 // pred_region
      // Predicated region
      $region17: #{position_mse_loss.1} parent=15 // pred_check
        %p260 = pneg %p59
      $region18: #{position_mse_loss.1} parent=15 // pred_check_branch
        %262 = sbr.rel (%p260) target = $region20
      $region19: #{position_mse_loss.1} parent=15 // pred_region
        %s263 = sld [smem:[#allocation4 + %s31]]
        %s264 = smul.u32 16, %s263
        %p265 = scmp.lt.s32.totalorder %s30, 1
        %s266 = scalar_select %p265, %s30, 1
        %p267 = scmp.lt.s32.totalorder %s264, 15
        %s268 = scalar_select %p267, %s264, 15
        %s269 = smul.addr %s266, 16
        %s270 = sadd.s32 %s268, %s269
        %s271 = smul.addr %s270, 8
        %s272 = scalar_lea.vmem %s3, %s271
        %s273 = sld [smem:[#allocation4 + %s31]]
        %s274 = smul.u32 16, %s273
      $region20: #{position_mse_loss.1} parent=15 // pred_fallthru
        _
      // Predicated region
      $region21: #{position_mse_loss.1} parent=15 // pred_check
        %p275 = pneg %p89
      $region22: #{position_mse_loss.1} parent=15 // pred_check_branch
        %277 = sbr.rel (%p275) target = $region24
      $region23: #{position_mse_loss.1} parent=15 // pred_region
        %s278 = sld [smem:[#allocation4 + %s31]]
        %s279 = smul.u32 16, %s278
        %p280 = scmp.lt.s32.totalorder %s30, 1
        %s281 = scalar_select %p280, %s30, 1
        %p282 = scmp.lt.s32.totalorder %s279, 15
        %s283 = scalar_select %p282, %s279, 15
        %s284 = smul.addr %s281, 16
        %s285 = sadd.s32 %s283, %s284
        %s286 = smul.addr %s285, 8
        %s287 = scalar_lea.vmem %s4, %s286
        %s288 = sld [smem:[#allocation4 + %s31]]
        %s289 = smul.u32 16, %s288
      $region24: #{position_mse_loss.1} parent=15 // pred_fallthru
        _
      // Predicated region
      $region25: #{position_mse_loss.1} parent=15 // pred_check
        %p290 = pneg %p119
      $region26: #{position_mse_loss.1} parent=15 // pred_check_branch
        %292 = sbr.rel (%p290) target = $region28
      $region27: #{position_mse_loss.1} parent=15 // pred_region
        %s293 = sld [smem:[#allocation4 + %s31]]
        %s294 = smul.u32 16, %s293
        %p295 = scmp.lt.s32.totalorder %s30, 1
        %s296 = scalar_select %p295, %s30, 1
        %p297 = scmp.lt.s32.totalorder %s294, 15
        %s298 = scalar_select %p297, %s294, 15
        %s299 = smul.addr %s296, 16
        %s300 = sadd.s32 %s298, %s299
        %s301 = smul.addr %s300, 8
        %s302 = scalar_lea.vmem %s5, %s301
        %s303 = sld [smem:[#allocation4 + %s31]]
        %s304 = smul.u32 16, %s303
      $region28: #{position_mse_loss.1} parent=15 // pred_fallthru
        _
      // Predicated region
      $region29: #{position_mse_loss.1} parent=15 // pred_check
        %p305 = pneg %p149
      $region30: #{position_mse_loss.1} parent=15 // pred_check_branch
        %307 = sbr.rel (%p305) target = $region32
      $region31: #{position_mse_loss.1} parent=15 // pred_region
        %s308 = sld [smem:[#allocation5 + %s31]]
        %p309 = scmp.lt.s32.totalorder %s30, 1
        %s310 = scalar_select %p309, %s30, 1
        %p311 = scmp.lt.s32.totalorder %s308, 0
        %s312 = scalar_select %p311, %s308, 0
        %s313 = sadd.s32 %s312, %s310
        %s314 = smul.addr %s313, 4
        %s315 = scalar_lea.vmem %s6, %s314
        %s316 = sld [smem:[#allocation5 + %s31]]
      $region32: #{position_mse_loss.1} parent=15 // pred_fallthru
        _
      // Predicated region
      $region33: #{position_mse_loss.1} parent=15 // pred_check
        %p317 = pneg %p179
      $region34: #{position_mse_loss.1} parent=15 // pred_check_branch
        %319 = sbr.rel (%p317) target = $region36
      $region35: #{position_mse_loss.1} parent=15 // pred_region
        %s320 = sld [smem:[#allocation5 + %s31]]
        %p321 = scmp.lt.s32.totalorder %s30, 1
        %s322 = scalar_select %p321, %s30, 1
        %p323 = scmp.lt.s32.totalorder %s320, 0
        %s324 = scalar_select %p323, %s320, 0
        %s325 = sadd.s32 %s324, %s322
        %s326 = smul.addr %s325, 4
        %s327 = scalar_lea.vmem %s7, %s326
        %s328 = sld [smem:[#allocation5 + %s31]]
      $region36: #{position_mse_loss.1} parent=15 // pred_fallthru
        _
      // Predicated region
      $region37: #{position_mse_loss.1} parent=15 // pred_check
        %p329 = pneg %p209
      $region38: #{position_mse_loss.1} parent=15 // pred_check_branch
        %331 = sbr.rel (%p329) target = $region40
      $region39: #{position_mse_loss.1} parent=15 // pred_region
        %s332 = sld [smem:[#allocation5 + %s31]]
        %p333 = scmp.lt.s32.totalorder %s30, 1
        %s334 = scalar_select %p333, %s30, 1
        %p335 = scmp.lt.s32.totalorder %s332, 0
        %s336 = scalar_select %p335, %s332, 0
        %s337 = sadd.s32 %s336, %s334
        %s338 = scalar_lea.vmem %s8, %s337
        %s339 = sld [smem:[#allocation5 + %s31]]
      $region40: #{position_mse_loss.1} parent=15 // pred_fallthru
        _
    $region16: #{position_mse_loss.1} parent=5 // pred_fallthru
      _
    %p340 = scmp.le.s32.totalorder 1, %s23
    %p341 = scmp.lt.s32.totalorder %s23, 3
    %p342 = pnand %p340, %p341
    %p343 = pneg %p342
    // Predicated region
    $region41: #{position_mse_loss.1} parent=5 // pred_check
      _
    $region42: #{position_mse_loss.1} parent=5 // pred_check_branch
      %345 = sbr.rel (%p342) target = $region44
    $region43: #{position_mse_loss.1} parent=5 // pred_region
      %s346 = ssub.s32 %s23, 1
      %s347 = sld [smem:[#allocation4 + %s33]]
      %s348 = smul.u32 16, %s347
      %p349 = scmp.lt.s32.totalorder %s32, 1
      %s350 = scalar_select %p349, %s32, 1
      %p351 = scmp.lt.s32.totalorder %s348, 15
      %s352 = scalar_select %p351, %s348, 15
      %s353 = smul.addr %s350, 16
      %s354 = sadd.s32 %s352, %s353
      %s355 = smul.addr %s354, 8
      %s356 = scalar_lea.vmem %s3, %s355
      %p357 = pneg %p65
      %p358 = pneg %p62
      %s359 = sld [smem:[#allocation4 + %s33]]
      %s360 = smul.u32 16, %s359
      %p361 = scmp.lt.s32.totalorder %s32, 1
      %s362 = scalar_select %p361, %s32, 1
      %p363 = scmp.lt.s32.totalorder %s360, 15
      %s364 = scalar_select %p363, %s360, 15
      %s365 = smul.addr %s362, 16
      %s366 = sadd.s32 %s364, %s365
      %s367 = smul.addr %s366, 8
      %s368 = scalar_lea.vmem %s4, %s367
      %p369 = pneg %p95
      %p370 = pneg %p92
      %s371 = sld [smem:[#allocation4 + %s33]]
      %s372 = smul.u32 16, %s371
      %p373 = scmp.lt.s32.totalorder %s32, 1
      %s374 = scalar_select %p373, %s32, 1
      %p375 = scmp.lt.s32.totalorder %s372, 15
      %s376 = scalar_select %p375, %s372, 15
      %s377 = smul.addr %s374, 16
      %s378 = sadd.s32 %s376, %s377
      %s379 = smul.addr %s378, 8
      %s380 = scalar_lea.vmem %s5, %s379
      %p381 = pneg %p125
      %p382 = pneg %p122
      %s383 = sld [smem:[#allocation5 + %s33]]
      %p384 = scmp.lt.s32.totalorder %s32, 1
      %s385 = scalar_select %p384, %s32, 1
      %p386 = scmp.lt.s32.totalorder %s383, 0
      %s387 = scalar_select %p386, %s383, 0
      %s388 = sadd.s32 %s387, %s385
      %s389 = smul.addr %s388, 4
      %s390 = scalar_lea.vmem %s6, %s389
      %p391 = pneg %p155
      %p392 = pneg %p152
      %s393 = sld [smem:[#allocation5 + %s33]]
      %p394 = scmp.lt.s32.totalorder %s32, 1
      %s395 = scalar_select %p394, %s32, 1
      %p396 = scmp.lt.s32.totalorder %s393, 0
      %s397 = scalar_select %p396, %s393, 0
      %s398 = sadd.s32 %s397, %s395
      %s399 = smul.addr %s398, 4
      %s400 = scalar_lea.vmem %s7, %s399
      %p401 = pneg %p185
      %p402 = pneg %p182
      %s403 = sld [smem:[#allocation5 + %s33]]
      %p404 = scmp.lt.s32.totalorder %s32, 1
      %s405 = scalar_select %p404, %s32, 1
      %p406 = scmp.lt.s32.totalorder %s403, 0
      %s407 = scalar_select %p406, %s403, 0
      %s408 = sadd.s32 %s407, %s405
      %s409 = scalar_lea.vmem %s8, %s408
      %p410 = pneg %p215
      %p411 = pneg %p212
      %p412 = pneg %p241
      %p413 = pneg %p238
      %p414 = scmp.lt.s32.totalorder %s32, 1
      %s415 = scalar_select %p414, %s32, 1
      %s416 = scalar_lea.vmem %s9, %s415
      %s417 = sld [smem:[#allocation4 + %s33]]
      %s418 = smul.u32 16, %s417
      %p419 = scmp.lt.s32.totalorder %s32, 1
      %s420 = scalar_select %p419, %s32, 1
      %p421 = scmp.lt.s32.totalorder %s418, 15
      %s422 = scalar_select %p421, %s418, 15
      %s423 = smul.addr %s420, 16
      %s424 = sadd.s32 %s422, %s423
      %s425 = smul.addr %s424, 8
      %s426 = scalar_lea.vmem %s3, %s425
      %s427 = sld [smem:[#allocation4 + %s33]]
      %s428 = smul.u32 16, %s427
      %s429 = sld [smem:[#allocation4 + %s33]]
      %s430 = smul.u32 16, %s429
      %p431 = scmp.lt.s32.totalorder %s32, 1
      %s432 = scalar_select %p431, %s32, 1
      %p433 = scmp.lt.s32.totalorder %s430, 15
      %s434 = scalar_select %p433, %s430, 15
      %s435 = smul.addr %s432, 16
      %s436 = sadd.s32 %s434, %s435
      %s437 = smul.addr %s436, 8
      %s438 = scalar_lea.vmem %s4, %s437
      %s439 = sld [smem:[#allocation4 + %s33]]
      %s440 = smul.u32 16, %s439
      %s441 = sld [smem:[#allocation4 + %s33]]
      %s442 = smul.u32 16, %s441
      %p443 = scmp.lt.s32.totalorder %s32, 1
      %s444 = scalar_select %p443, %s32, 1
      %p445 = scmp.lt.s32.totalorder %s442, 15
      %s446 = scalar_select %p445, %s442, 15
      %s447 = smul.addr %s444, 16
      %s448 = sadd.s32 %s446, %s447
      %s449 = smul.addr %s448, 8
      %s450 = scalar_lea.vmem %s5, %s449
      %s451 = sld [smem:[#allocation4 + %s33]]
      %s452 = smul.u32 16, %s451
      %s453 = sld [smem:[#allocation5 + %s33]]
      %p454 = scmp.lt.s32.totalorder %s32, 1
      %s455 = scalar_select %p454, %s32, 1
      %p456 = scmp.lt.s32.totalorder %s453, 0
      %s457 = scalar_select %p456, %s453, 0
      %s458 = sadd.s32 %s457, %s455
      %s459 = smul.addr %s458, 4
      %s460 = scalar_lea.vmem %s6, %s459
      %s461 = sld [smem:[#allocation5 + %s33]]
      %s462 = sld [smem:[#allocation5 + %s33]]
      %p463 = scmp.lt.s32.totalorder %s32, 1
      %s464 = scalar_select %p463, %s32, 1
      %p465 = scmp.lt.s32.totalorder %s462, 0
      %s466 = scalar_select %p465, %s462, 0
      %s467 = sadd.s32 %s466, %s464
      %s468 = smul.addr %s467, 4
      %s469 = scalar_lea.vmem %s7, %s468
      %s470 = sld [smem:[#allocation5 + %s33]]
      %s471 = sld [smem:[#allocation5 + %s33]]
      %p472 = scmp.lt.s32.totalorder %s32, 1
      %s473 = scalar_select %p472, %s32, 1
      %p474 = scmp.lt.s32.totalorder %s471, 0
      %s475 = scalar_select %p474, %s471, 0
      %s476 = sadd.s32 %s475, %s473
      %s477 = scalar_lea.vmem %s8, %s476
      %s478 = sld [smem:[#allocation5 + %s33]]
      %p479 = scmp.lt.s32.totalorder %s32, 1
      %s480 = scalar_select %p479, %s32, 1
      %s481 = scalar_lea.vmem %s9, %s480
      %s482 = sld [smem:[#allocation4 + %s33]]
      %s483 = sld [smem:[#allocation5 + %s33]]
      %p484 = scmp.eq.s32.totalorder %s33, 0
      // Predicated region
      $region45: #{position_mse_loss.1} parent=43 // pred_check
        %p485 = pneg %p484
      $region46: #{position_mse_loss.1} parent=43 // pred_check_branch
        %487 = sbr.rel (%p485) target = $region48
      $region47: #{position_mse_loss.1} parent=43 // pred_region
        %488 = vst [vmem:[#allocation2] sm:$0x1] 0.0
      $region48: #{position_mse_loss.1} parent=43 // pred_fallthru
        _
      %s489 = smul.u32 %s483, 128
      %s490 = sld [smem:[#allocation6 + %s32]]
      %p491 = scmp.lt.s32.totalorder %s489, %s490
      // Predicated region
      $region49: #{position_mse_loss.1} parent=43 // pred_check
        %p492 = pneg %p491
      $region50: #{position_mse_loss.1} parent=43 // pred_check_branch
        %494 = sbr.rel (%p492) target = $region52
      $region51: #{position_mse_loss.1} parent=43 // pred_region
        %v495 = vld [vmem:[%s426] sm:$0xff]
        %v496 = vld [vmem:[%s426 + $0x8] sm:$0xff]
        %v497 = vld [vmem:[%s426 + $0x10] sm:$0xff]
        %v498 = vld [vmem:[%s426 + $0x18] sm:$0xff]
        %v499 = vld [vmem:[%s426 + $0x20] sm:$0xff]
        %v500 = vld [vmem:[%s426 + $0x28] sm:$0xff]
        %v501 = vld [vmem:[%s426 + $0x30] sm:$0xff]
        %v502 = vld [vmem:[%s426 + $0x38] sm:$0xff]
        %v503 = vld [vmem:[%s426 + $0x40] sm:$0xff]
        %v504 = vld [vmem:[%s426 + $0x48] sm:$0xff]
        %v505 = vld [vmem:[%s426 + $0x50] sm:$0xff]
        %v506 = vld [vmem:[%s426 + $0x58] sm:$0xff]
        %v507 = vld [vmem:[%s426 + $0x60] sm:$0xff]
        %v508 = vld [vmem:[%s426 + $0x68] sm:$0xff]
        %v509 = vld [vmem:[%s426 + $0x70] sm:$0xff]
        %v510 = vld [vmem:[%s426 + $0x78] sm:$0xff]
        %v511 = vld [vmem:[%s438] sm:$0xff]
        %v512 = vld [vmem:[%s438 + $0x8] sm:$0xff]
        %v513 = vld [vmem:[%s438 + $0x10] sm:$0xff]
        %v514 = vld [vmem:[%s438 + $0x18] sm:$0xff]
        %v515 = vld [vmem:[%s438 + $0x20] sm:$0xff]
        %v516 = vld [vmem:[%s438 + $0x28] sm:$0xff]
        %v517 = vld [vmem:[%s438 + $0x30] sm:$0xff]
        %v518 = vld [vmem:[%s438 + $0x38] sm:$0xff]
        %v519 = vld [vmem:[%s438 + $0x40] sm:$0xff]
        %v520 = vld [vmem:[%s438 + $0x48] sm:$0xff]
        %v521 = vld [vmem:[%s438 + $0x50] sm:$0xff]
        %v522 = vld [vmem:[%s438 + $0x58] sm:$0xff]
        %v523 = vld [vmem:[%s438 + $0x60] sm:$0xff]
        %v524 = vld [vmem:[%s438 + $0x68] sm:$0xff]
        %v525 = vld [vmem:[%s438 + $0x70] sm:$0xff]
        %v526 = vld [vmem:[%s438 + $0x78] sm:$0xff]
        %v527 = vld [vmem:[%s450] sm:$0xff]
        %v528 = vld [vmem:[%s450 + $0x8] sm:$0xff]
        %v529 = vld [vmem:[%s450 + $0x10] sm:$0xff]
        %v530 = vld [vmem:[%s450 + $0x18] sm:$0xff]
        %v531 = vld [vmem:[%s450 + $0x20] sm:$0xff]
        %v532 = vld [vmem:[%s450 + $0x28] sm:$0xff]
        %v533 = vld [vmem:[%s450 + $0x30] sm:$0xff]
        %v534 = vld [vmem:[%s450 + $0x38] sm:$0xff]
        %v535 = vld [vmem:[%s450 + $0x40] sm:$0xff]
        %v536 = vld [vmem:[%s450 + $0x48] sm:$0xff]
        %v537 = vld [vmem:[%s450 + $0x50] sm:$0xff]
        %v538 = vld [vmem:[%s450 + $0x58] sm:$0xff]
        %v539 = vld [vmem:[%s450 + $0x60] sm:$0xff]
        %v540 = vld [vmem:[%s450 + $0x68] sm:$0xff]
        %v541 = vld [vmem:[%s450 + $0x70] sm:$0xff]
        %v542 = vld [vmem:[%s450 + $0x78] sm:$0xff]
        %v543 = vld [vmem:[%s460] sm:$0x7]
        %v544 = vld [vmem:[%s469] sm:$0x7]
        %v545 = vld [vmem:[%s477] sm:$0x1]
        %v546 = vmul.f32 %v495, %v495
        %v547 = vmul.f32 %v496, %v496
        %v548 = vmul.f32 %v497, %v497
        %v549 = vmul.f32 %v498, %v498
        %v550 = vmul.f32 %v499, %v499
        %v551 = vmul.f32 %v500, %v500
        %v552 = vmul.f32 %v501, %v501
        %v553 = vmul.f32 %v502, %v502
        %v554 = vmul.f32 %v503, %v503
        %v555 = vmul.f32 %v504, %v504
        %v556 = vmul.f32 %v505, %v505
        %v557 = vmul.f32 %v506, %v506
        %v558 = vmul.f32 %v507, %v507
        %v559 = vmul.f32 %v508, %v508
        %v560 = vmul.f32 %v509, %v509
        %v561 = vmul.f32 %v510, %v510
        %v562 = vadd.f32 %v546, 0.0
        %v563 = vadd.f32 %v547, 0.0
        %v564 = vadd.f32 %v548, 0.0
        %v565 = vadd.f32 %v549, 0.0
        %v566 = vadd.f32 %v550, 0.0
        %v567 = vadd.f32 %v551, 0.0
        %v568 = vadd.f32 %v552, 0.0
        %v569 = vadd.f32 %v553, 0.0
        %v570 = vadd.f32 %v554, 0.0
        %v571 = vadd.f32 %v555, 0.0
        %v572 = vadd.f32 %v556, 0.0
        %v573 = vadd.f32 %v557, 0.0
        %v574 = vadd.f32 %v558, 0.0
        %v575 = vadd.f32 %v559, 0.0
        %v576 = vadd.f32 %v560, 0.0
        %v577 = vadd.f32 %v561, 0.0
        %v578 = vmul.f32 %v511, %v511
        %v579 = vmul.f32 %v512, %v512
        %v580 = vmul.f32 %v513, %v513
        %v581 = vmul.f32 %v514, %v514
        %v582 = vmul.f32 %v515, %v515
        %v583 = vmul.f32 %v516, %v516
        %v584 = vmul.f32 %v517, %v517
        %v585 = vmul.f32 %v518, %v518
        %v586 = vmul.f32 %v519, %v519
        %v587 = vmul.f32 %v520, %v520
        %v588 = vmul.f32 %v521, %v521
        %v589 = vmul.f32 %v522, %v522
        %v590 = vmul.f32 %v523, %v523
        %v591 = vmul.f32 %v524, %v524
        %v592 = vmul.f32 %v525, %v525
        %v593 = vmul.f32 %v526, %v526
        %v594 = vadd.f32 %v578, 0.0
        %v595 = vadd.f32 %v579, 0.0
        %v596 = vadd.f32 %v580, 0.0
        %v597 = vadd.f32 %v581, 0.0
        %v598 = vadd.f32 %v582, 0.0
        %v599 = vadd.f32 %v583, 0.0
        %v600 = vadd.f32 %v584, 0.0
        %v601 = vadd.f32 %v585, 0.0
        %v602 = vadd.f32 %v586, 0.0
        %v603 = vadd.f32 %v587, 0.0
        %v604 = vadd.f32 %v588, 0.0
        %v605 = vadd.f32 %v589, 0.0
        %v606 = vadd.f32 %v590, 0.0
        %v607 = vadd.f32 %v591, 0.0
        %v608 = vadd.f32 %v592, 0.0
        %v609 = vadd.f32 %v593, 0.0
        %v610 = vmul.f32 %v543, %v543
        %v611 = vadd.f32 %v610, 0.0
        %v612 = vmul.f32 %v544, %v544
        %v613 = vadd.f32 %v612, 0.0
        %630 = vrot.lane.b32.xlu0 %v546, 127
        %v631 = vpop.permute.xlu0 %630
        %632 = vrot.lane.b32.xlu0 %v547, 127
        %v633 = vpop.permute.xlu0 %632
        %634 = vrot.lane.b32.xlu0 %v548, 127
        %v635 = vpop.permute.xlu0 %634
        %636 = vrot.lane.b32.xlu0 %v549, 127
        %v637 = vpop.permute.xlu0 %636
        %638 = vrot.lane.b32.xlu0 %v550, 127
        %v639 = vpop.permute.xlu0 %638
        %640 = vrot.lane.b32.xlu0 %v551, 127
        %v641 = vpop.permute.xlu0 %640
        %642 = vrot.lane.b32.xlu0 %v552, 127
        %v643 = vpop.permute.xlu0 %642
        %644 = vrot.lane.b32.xlu0 %v553, 127
        %v645 = vpop.permute.xlu0 %644
        %646 = vrot.lane.b32.xlu0 %v554, 127
        %v647 = vpop.permute.xlu0 %646
        %648 = vrot.lane.b32.xlu0 %v555, 127
        %v649 = vpop.permute.xlu0 %648
        %650 = vrot.lane.b32.xlu0 %v556, 127
        %v651 = vpop.permute.xlu0 %650
        %652 = vrot.lane.b32.xlu0 %v557, 127
        %v653 = vpop.permute.xlu0 %652
        %654 = vrot.lane.b32.xlu0 %v558, 127
        %v655 = vpop.permute.xlu0 %654
        %656 = vrot.lane.b32.xlu0 %v559, 127
        %v657 = vpop.permute.xlu0 %656
        %658 = vrot.lane.b32.xlu0 %v560, 127
        %v659 = vpop.permute.xlu0 %658
        %660 = vrot.lane.b32.xlu0 %v561, 127
        %v661 = vpop.permute.xlu0 %660
        %v678 = vadd.f32 %v562, %v631
        %v679 = vadd.f32 %v563, %v633
        %v680 = vadd.f32 %v564, %v635
        %v681 = vadd.f32 %v565, %v637
        %v682 = vadd.f32 %v566, %v639
        %v683 = vadd.f32 %v567, %v641
        %v684 = vadd.f32 %v568, %v643
        %v685 = vadd.f32 %v569, %v645
        %v686 = vadd.f32 %v570, %v647
        %v687 = vadd.f32 %v571, %v649
        %v688 = vadd.f32 %v572, %v651
        %v689 = vadd.f32 %v573, %v653
        %v690 = vadd.f32 %v574, %v655
        %v691 = vadd.f32 %v575, %v657
        %v692 = vadd.f32 %v576, %v659
        %v693 = vadd.f32 %v577, %v661
        %710 = vrot.lane.b32.xlu0 %v578, 127
        %v711 = vpop.permute.xlu0 %710
        %712 = vrot.lane.b32.xlu0 %v579, 127
        %v713 = vpop.permute.xlu0 %712
        %714 = vrot.lane.b32.xlu0 %v580, 127
        %v715 = vpop.permute.xlu0 %714
        %716 = vrot.lane.b32.xlu0 %v581, 127
        %v717 = vpop.permute.xlu0 %716
        %718 = vrot.lane.b32.xlu0 %v582, 127
        %v719 = vpop.permute.xlu0 %718
        %720 = vrot.lane.b32.xlu0 %v583, 127
        %v721 = vpop.permute.xlu0 %720
        %722 = vrot.lane.b32.xlu0 %v584, 127
        %v723 = vpop.permute.xlu0 %722
        %724 = vrot.lane.b32.xlu0 %v585, 127
        %v725 = vpop.permute.xlu0 %724
        %726 = vrot.lane.b32.xlu0 %v586, 127
        %v727 = vpop.permute.xlu0 %726
        %728 = vrot.lane.b32.xlu0 %v587, 127
        %v729 = vpop.permute.xlu0 %728
        %730 = vrot.lane.b32.xlu0 %v588, 127
        %v731 = vpop.permute.xlu0 %730
        %732 = vrot.lane.b32.xlu0 %v589, 127
        %v733 = vpop.permute.xlu0 %732
        %734 = vrot.lane.b32.xlu0 %v590, 127
        %v735 = vpop.permute.xlu0 %734
        %736 = vrot.lane.b32.xlu0 %v591, 127
        %v737 = vpop.permute.xlu0 %736
        %738 = vrot.lane.b32.xlu0 %v592, 127
        %v739 = vpop.permute.xlu0 %738
        %740 = vrot.lane.b32.xlu0 %v593, 127
        %v741 = vpop.permute.xlu0 %740
        %v758 = vadd.f32 %v594, %v711
        %v759 = vadd.f32 %v595, %v713
        %v760 = vadd.f32 %v596, %v715
        %v761 = vadd.f32 %v597, %v717
        %v762 = vadd.f32 %v598, %v719
        %v763 = vadd.f32 %v599, %v721
        %v764 = vadd.f32 %v600, %v723
        %v765 = vadd.f32 %v601, %v725
        %v766 = vadd.f32 %v602, %v727
        %v767 = vadd.f32 %v603, %v729
        %v768 = vadd.f32 %v604, %v731
        %v769 = vadd.f32 %v605, %v733
        %v770 = vadd.f32 %v606, %v735
        %v771 = vadd.f32 %v607, %v737
        %v772 = vadd.f32 %v608, %v739
        %v773 = vadd.f32 %v609, %v741
        %v775 = vrot.slane %v610, 1
        %v777 = vadd.f32 %v611, %v775
        %v779 = vrot.slane %v612, 1
        %v781 = vadd.f32 %v613, %v779
        %782 = vrot.lane.b32.xlu0 %v546, 126
        %v783 = vpop.permute.xlu0 %782
        %784 = vrot.lane.b32.xlu0 %v547, 126
        %v785 = vpop.permute.xlu0 %784
        %786 = vrot.lane.b32.xlu0 %v548, 126
        %v787 = vpop.permute.xlu0 %786
        %788 = vrot.lane.b32.xlu0 %v549, 126
        %v789 = vpop.permute.xlu0 %788
        %790 = vrot.lane.b32.xlu0 %v550, 126
        %v791 = vpop.permute.xlu0 %790
        %792 = vrot.lane.b32.xlu0 %v551, 126
        %v793 = vpop.permute.xlu0 %792
        %794 = vrot.lane.b32.xlu0 %v552, 126
        %v795 = vpop.permute.xlu0 %794
        %796 = vrot.lane.b32.xlu0 %v553, 126
        %v797 = vpop.permute.xlu0 %796
        %798 = vrot.lane.b32.xlu0 %v554, 126
        %v799 = vpop.permute.xlu0 %798
        %800 = vrot.lane.b32.xlu0 %v555, 126
        %v801 = vpop.permute.xlu0 %800
        %802 = vrot.lane.b32.xlu0 %v556, 126
        %v803 = vpop.permute.xlu0 %802
        %804 = vrot.lane.b32.xlu0 %v557, 126
        %v805 = vpop.permute.xlu0 %804
        %806 = vrot.lane.b32.xlu0 %v558, 126
        %v807 = vpop.permute.xlu0 %806
        %808 = vrot.lane.b32.xlu0 %v559, 126
        %v809 = vpop.permute.xlu0 %808
        %810 = vrot.lane.b32.xlu0 %v560, 126
        %v811 = vpop.permute.xlu0 %810
        %812 = vrot.lane.b32.xlu0 %v561, 126
        %v813 = vpop.permute.xlu0 %812
        %v830 = vadd.f32 %v678, %v783
        %v831 = vadd.f32 %v679, %v785
        %v832 = vadd.f32 %v680, %v787
        %v833 = vadd.f32 %v681, %v789
        %v834 = vadd.f32 %v682, %v791
        %v835 = vadd.f32 %v683, %v793
        %v836 = vadd.f32 %v684, %v795
        %v837 = vadd.f32 %v685, %v797
        %v838 = vadd.f32 %v686, %v799
        %v839 = vadd.f32 %v687, %v801
        %v840 = vadd.f32 %v688, %v803
        %v841 = vadd.f32 %v689, %v805
        %v842 = vadd.f32 %v690, %v807
        %v843 = vadd.f32 %v691, %v809
        %v844 = vadd.f32 %v692, %v811
        %v845 = vadd.f32 %v693, %v813
        %846 = vrot.lane.b32.xlu0 %v578, 126
        %v847 = vpop.permute.xlu0 %846
        %848 = vrot.lane.b32.xlu0 %v579, 126
        %v849 = vpop.permute.xlu0 %848
        %850 = vrot.lane.b32.xlu0 %v580, 126
        %v851 = vpop.permute.xlu0 %850
        %852 = vrot.lane.b32.xlu0 %v581, 126
        %v853 = vpop.permute.xlu0 %852
        %854 = vrot.lane.b32.xlu0 %v582, 126
        %v855 = vpop.permute.xlu0 %854
        %856 = vrot.lane.b32.xlu0 %v583, 126
        %v857 = vpop.permute.xlu0 %856
        %858 = vrot.lane.b32.xlu0 %v584, 126
        %v859 = vpop.permute.xlu0 %858
        %860 = vrot.lane.b32.xlu0 %v585, 126
        %v861 = vpop.permute.xlu0 %860
        %862 = vrot.lane.b32.xlu0 %v586, 126
        %v863 = vpop.permute.xlu0 %862
        %864 = vrot.lane.b32.xlu0 %v587, 126
        %v865 = vpop.permute.xlu0 %864
        %866 = vrot.lane.b32.xlu0 %v588, 126
        %v867 = vpop.permute.xlu0 %866
        %868 = vrot.lane.b32.xlu0 %v589, 126
        %v869 = vpop.permute.xlu0 %868
        %870 = vrot.lane.b32.xlu0 %v590, 126
        %v871 = vpop.permute.xlu0 %870
        %872 = vrot.lane.b32.xlu0 %v591, 126
        %v873 = vpop.permute.xlu0 %872
        %874 = vrot.lane.b32.xlu0 %v592, 126
        %v875 = vpop.permute.xlu0 %874
        %876 = vrot.lane.b32.xlu0 %v593, 126
        %v877 = vpop.permute.xlu0 %876
        %v894 = vadd.f32 %v758, %v847
        %v895 = vadd.f32 %v759, %v849
        %v896 = vadd.f32 %v760, %v851
        %v897 = vadd.f32 %v761, %v853
        %v898 = vadd.f32 %v762, %v855
        %v899 = vadd.f32 %v763, %v857
        %v900 = vadd.f32 %v764, %v859
        %v901 = vadd.f32 %v765, %v861
        %v902 = vadd.f32 %v766, %v863
        %v903 = vadd.f32 %v767, %v865
        %v904 = vadd.f32 %v768, %v867
        %v905 = vadd.f32 %v769, %v869
        %v906 = vadd.f32 %v770, %v871
        %v907 = vadd.f32 %v771, %v873
        %v908 = vadd.f32 %v772, %v875
        %v909 = vadd.f32 %v773, %v877
        %v910 = vrot.slane %v610, 2
        %v912 = vadd.f32 %v777, %v910
        %v913 = vrot.slane %v612, 2
        %v915 = vadd.f32 %v781, %v913
        %vm916 = vcmask 23552
        %v918 = vsel %vm916, %v495, 0
        %v921 = vsel %vm916, %v496, 0
        %v924 = vsel %vm916, %v497, 0
        %v927 = vsel %vm916, %v498, 0
        %v930 = vsel %vm916, %v499, 0
        %v933 = vsel %vm916, %v500, 0
        %v936 = vsel %vm916, %v501, 0
        %v939 = vsel %vm916, %v502, 0
        %v942 = vsel %vm916, %v503, 0
        %v945 = vsel %vm916, %v504, 0
        %v948 = vsel %vm916, %v505, 0
        %v951 = vsel %vm916, %v506, 0
        %v954 = vsel %vm916, %v507, 0
        %v957 = vsel %vm916, %v508, 0
        %v960 = vsel %vm916, %v509, 0
        %v963 = vsel %vm916, %v510, 0
        %vm965 = vcmask 1042432
        %v967 = vsel %vm965, %v543, 0
        %969 = vmatprep.subr.mxu0 0.0
        %970 = vmatpush1.msra.mxu0 0.0
        %971 = vmatprep.subr.mxu0 0.0
        %972 = vmatpush1.msra.mxu0 0.0
        %973 = vmatprep.subr.mxu0 0.0
        %974 = vmatpush1.msra.mxu0 0.0
        %975 = vmatprep.subr.mxu0 0.0
        %976 = vmatpush1.msra.mxu0 0.0
        %977 = vmatprep.subr.mxu0 0.0
        %978 = vmatpush1.msra.mxu0 0.0
        %979 = vmatprep.subr.mxu0 0.0
        %980 = vmatpush1.msra.mxu0 0.0
        %981 = vmatprep.subr.mxu0 0.0
        %982 = vmatpush1.msra.mxu0 0.0
        %983 = vmatprep.subr.mxu0 0.0
        %984 = vmatpush1.msra.mxu0 0.0
        %985 = vmatprep.subr.mxu0 0.0
        %986 = vmatpush1.msra.mxu0 0.0
        %987 = vmatprep.subr.mxu0 0.0
        %988 = vmatpush1.msra.mxu0 0.0
        %989 = vmatprep.subr.mxu0 0.0
        %990 = vmatpush1.msra.mxu0 0.0
        %991 = vmatprep.subr.mxu0 0.0
        %992 = vmatpush1.msra.mxu0 0.0
        %993 = vmatprep.subr.mxu0 0.0
        %994 = vmatpush1.msra.mxu0 0.0
        %995 = vmatprep.subr.mxu0 0.0
        %996 = vmatpush1.msra.mxu0 0.0
        %997 = vmatprep.subr.mxu0 0.0
        %998 = vmatpush1.msra.mxu0 0.0
        %999 = vmatprep.subr.mxu0 0.0
        %v1000 = vand.u32 %v967, 4294901760
        %1001 = vmatpush1.msra.mxu0 %v1000
        %1002 = vmatprep.subr.mxu0 0.0
        %1003 = vmatpush2.msra.mxu0 0.0
        %1004 = vmatprep.subr.mxu0 0.0
        %1005 = vmatpush2.msra.mxu0 0.0
        %1006 = vmatprep.subr.mxu0 0.0
        %1007 = vmatpush2.msra.mxu0 0.0
        %1008 = vmatprep.subr.mxu0 0.0
        %1009 = vmatpush2.msra.mxu0 0.0
        %1010 = vmatprep.subr.mxu0 0.0
        %1011 = vmatpush2.msra.mxu0 0.0
        %1012 = vmatprep.subr.mxu0 0.0
        %1013 = vmatpush2.msra.mxu0 0.0
        %1014 = vmatprep.subr.mxu0 0.0
        %1015 = vmatpush2.msra.mxu0 0.0
        %1016 = vmatprep.subr.mxu0 0.0
        %1017 = vmatpush2.msra.mxu0 0.0
        %1018 = vmatprep.subr.mxu0 0.0
        %1019 = vmatpush2.msra.mxu0 0.0
        %1020 = vmatprep.subr.mxu0 0.0
        %1021 = vmatpush2.msra.mxu0 0.0
        %1022 = vmatprep.subr.mxu0 0.0
        %1023 = vmatpush2.msra.mxu0 0.0
        %1024 = vmatprep.subr.mxu0 0.0
        %1025 = vmatpush2.msra.mxu0 0.0
        %1026 = vmatprep.subr.mxu0 0.0
        %1027 = vmatpush2.msra.mxu0 0.0
        %1028 = vmatprep.subr.mxu0 0.0
        %1029 = vmatpush2.msra.mxu0 0.0
        %1030 = vmatprep.subr.mxu0 0.0
        %1031 = vmatpush2.msra.mxu0 0.0
        %1032 = vmatprep.subr.mxu0 0.0
        %1033 = vmatpush2.msra.mxu0 0.0
        %1034 = vmatprep.mubr.f32.mxu0 0.0
        %v1035 = vand.u32 %v918, 4294901760
        %v1036 = vsub.f32 %v918, %v1035
        %v1037 = vand.u32 %v1036, 4294901760
        %v1038 = vsub.f32 %v1036, %v1037
        %v1039 = vand.u32 %v1038, 4294901760
        %1040 = vmatmul.mubr.f32.gmra.mxu0 %v1039
        %v1041 = vpop.f32.mrf.mxu0
        %v1042 = vadd.f32 0.0, %v1041
        %v1043 = vpop.f32.mrf.mxu0
        %1044 = vmatprep.mubr.f32.mxu0 0.0
        %v1045 = vand.u32 %v921, 4294901760
        %v1046 = vsub.f32 %v921, %v1045
        %v1047 = vand.u32 %v1046, 4294901760
        %v1048 = vsub.f32 %v1046, %v1047
        %v1049 = vand.u32 %v1048, 4294901760
        %1050 = vmatmul.mubr.f32.gmra.mxu0 %v1049
        %v1051 = vpop.f32.mrf.mxu0
        %v1052 = vadd.f32 0.0, %v1051
        %v1053 = vpop.f32.mrf.mxu0
        %1054 = vmatprep.mubr.f32.mxu0 0.0
        %v1055 = vand.u32 %v924, 4294901760
        %v1056 = vsub.f32 %v924, %v1055
        %v1057 = vand.u32 %v1056, 4294901760
        %v1058 = vsub.f32 %v1056, %v1057
        %v1059 = vand.u32 %v1058, 4294901760
        %1060 = vmatmul.mubr.f32.gmra.mxu0 %v1059
        %v1061 = vpop.f32.mrf.mxu0
        %v1062 = vadd.f32 0.0, %v1061
        %v1063 = vpop.f32.mrf.mxu0
        %1064 = vmatprep.mubr.f32.mxu0 0.0
        %v1065 = vand.u32 %v927, 4294901760
        %v1066 = vsub.f32 %v927, %v1065
        %v1067 = vand.u32 %v1066, 4294901760
        %v1068 = vsub.f32 %v1066, %v1067
        %v1069 = vand.u32 %v1068, 4294901760
        %1070 = vmatmul.mubr.f32.gmra.mxu0 %v1069
        %v1071 = vpop.f32.mrf.mxu0
        %v1072 = vadd.f32 0.0, %v1071
        %v1073 = vpop.f32.mrf.mxu0
        %1074 = vmatprep.mubr.f32.mxu0 0.0
        %v1075 = vand.u32 %v930, 4294901760
        %v1076 = vsub.f32 %v930, %v1075
        %v1077 = vand.u32 %v1076, 4294901760
        %v1078 = vsub.f32 %v1076, %v1077
        %v1079 = vand.u32 %v1078, 4294901760
        %1080 = vmatmul.mubr.f32.gmra.mxu0 %v1079
        %v1081 = vpop.f32.mrf.mxu0
        %v1082 = vadd.f32 0.0, %v1081
        %v1083 = vpop.f32.mrf.mxu0
        %1084 = vmatprep.mubr.f32.mxu0 0.0
        %v1085 = vand.u32 %v933, 4294901760
        %v1086 = vsub.f32 %v933, %v1085
        %v1087 = vand.u32 %v1086, 4294901760
        %v1088 = vsub.f32 %v1086, %v1087
        %v1089 = vand.u32 %v1088, 4294901760
        %1090 = vmatmul.mubr.f32.gmra.mxu0 %v1089
        %v1091 = vpop.f32.mrf.mxu0
        %v1092 = vadd.f32 0.0, %v1091
        %v1093 = vpop.f32.mrf.mxu0
        %1094 = vmatprep.mubr.f32.mxu0 0.0
        %v1095 = vand.u32 %v936, 4294901760
        %v1096 = vsub.f32 %v936, %v1095
        %v1097 = vand.u32 %v1096, 4294901760
        %v1098 = vsub.f32 %v1096, %v1097
        %v1099 = vand.u32 %v1098, 4294901760
        %1100 = vmatmul.mubr.f32.gmra.mxu0 %v1099
        %v1101 = vpop.f32.mrf.mxu0
        %v1102 = vadd.f32 0.0, %v1101
        %v1103 = vpop.f32.mrf.mxu0
        %1104 = vmatprep.mubr.f32.mxu0 0.0
        %v1105 = vand.u32 %v939, 4294901760
        %v1106 = vsub.f32 %v939, %v1105
        %v1107 = vand.u32 %v1106, 4294901760
        %v1108 = vsub.f32 %v1106, %v1107
        %v1109 = vand.u32 %v1108, 4294901760
        %1110 = vmatmul.mubr.f32.gmra.mxu0 %v1109
        %v1111 = vpop.f32.mrf.mxu0
        %v1112 = vadd.f32 0.0, %v1111
        %v1113 = vpop.f32.mrf.mxu0
        %1114 = vmatprep.mubr.f32.mxu0 0.0
        %v1115 = vand.u32 %v942, 4294901760
        %v1116 = vsub.f32 %v942, %v1115
        %v1117 = vand.u32 %v1116, 4294901760
        %v1118 = vsub.f32 %v1116, %v1117
        %v1119 = vand.u32 %v1118, 4294901760
        %1120 = vmatmul.mubr.f32.gmra.mxu0 %v1119
        %v1121 = vpop.f32.mrf.mxu0
        %v1122 = vadd.f32 0.0, %v1121
        %v1123 = vpop.f32.mrf.mxu0
        %1124 = vmatprep.mubr.f32.mxu0 0.0
        %v1125 = vand.u32 %v945, 4294901760
        %v1126 = vsub.f32 %v945, %v1125
        %v1127 = vand.u32 %v1126, 4294901760
        %v1128 = vsub.f32 %v1126, %v1127
        %v1129 = vand.u32 %v1128, 4294901760
        %1130 = vmatmul.mubr.f32.gmra.mxu0 %v1129
        %v1131 = vpop.f32.mrf.mxu0
        %v1132 = vadd.f32 0.0, %v1131
        %v1133 = vpop.f32.mrf.mxu0
        %1134 = vmatprep.mubr.f32.mxu0 0.0
        %v1135 = vand.u32 %v948, 4294901760
        %v1136 = vsub.f32 %v948, %v1135
        %v1137 = vand.u32 %v1136, 4294901760
        %v1138 = vsub.f32 %v1136, %v1137
        %v1139 = vand.u32 %v1138, 4294901760
        %1140 = vmatmul.mubr.f32.gmra.mxu0 %v1139
        %v1141 = vpop.f32.mrf.mxu0
        %v1142 = vadd.f32 0.0, %v1141
        %v1143 = vpop.f32.mrf.mxu0
        %1144 = vmatprep.mubr.f32.mxu0 0.0
        %v1145 = vand.u32 %v951, 4294901760
        %v1146 = vsub.f32 %v951, %v1145
        %v1147 = vand.u32 %v1146, 4294901760
        %v1148 = vsub.f32 %v1146, %v1147
        %v1149 = vand.u32 %v1148, 4294901760
        %1150 = vmatmul.mubr.f32.gmra.mxu0 %v1149
        %v1151 = vpop.f32.mrf.mxu0
        %v1152 = vadd.f32 0.0, %v1151
        %v1153 = vpop.f32.mrf.mxu0
        %1154 = vmatprep.mubr.f32.mxu0 0.0
        %v1155 = vand.u32 %v954, 4294901760
        %v1156 = vsub.f32 %v954, %v1155
        %v1157 = vand.u32 %v1156, 4294901760
        %v1158 = vsub.f32 %v1156, %v1157
        %v1159 = vand.u32 %v1158, 4294901760
        %1160 = vmatmul.mubr.f32.gmra.mxu0 %v1159
        %v1161 = vpop.f32.mrf.mxu0
        %v1162 = vadd.f32 0.0, %v1161
        %v1163 = vpop.f32.mrf.mxu0
        %1164 = vmatprep.mubr.f32.mxu0 0.0
        %v1165 = vand.u32 %v957, 4294901760
        %v1166 = vsub.f32 %v957, %v1165
        %v1167 = vand.u32 %v1166, 4294901760
        %v1168 = vsub.f32 %v1166, %v1167
        %v1169 = vand.u32 %v1168, 4294901760
        %1170 = vmatmul.mubr.f32.gmra.mxu0 %v1169
        %v1171 = vpop.f32.mrf.mxu0
        %v1172 = vadd.f32 0.0, %v1171
        %v1173 = vpop.f32.mrf.mxu0
        %1174 = vmatprep.mubr.f32.mxu0 0.0
        %v1175 = vand.u32 %v960, 4294901760
        %v1176 = vsub.f32 %v960, %v1175
        %v1177 = vand.u32 %v1176, 4294901760
        %v1178 = vsub.f32 %v1176, %v1177
        %v1179 = vand.u32 %v1178, 4294901760
        %1180 = vmatmul.mubr.f32.gmra.mxu0 %v1179
        %v1181 = vpop.f32.mrf.mxu0
        %v1182 = vadd.f32 0.0, %v1181
        %v1183 = vpop.f32.mrf.mxu0
        %1184 = vmatprep.mubr.f32.mxu0 0.0
        %v1185 = vand.u32 %v963, 4294901760
        %v1186 = vsub.f32 %v963, %v1185
        %v1187 = vand.u32 %v1186, 4294901760
        %v1188 = vsub.f32 %v1186, %v1187
        %v1189 = vand.u32 %v1188, 4294901760
        %1190 = vmatmul.mubr.f32.gmra.mxu0 %v1189
        %v1191 = vpop.f32.mrf.mxu0
        %v1192 = vadd.f32 0.0, %v1191
        %v1193 = vpop.f32.mrf.mxu0
        %1194 = vdwg.mxu0
        %1195 = vmatprep.subr.mxu0 0.0
        %1196 = vmatpush1.msra.mxu0 0.0
        %1197 = vmatprep.subr.mxu0 0.0
        %1198 = vmatpush1.msra.mxu0 0.0
        %1199 = vmatprep.subr.mxu0 0.0
        %1200 = vmatpush1.msra.mxu0 0.0
        %1201 = vmatprep.subr.mxu0 0.0
        %1202 = vmatpush1.msra.mxu0 0.0
        %1203 = vmatprep.subr.mxu0 0.0
        %1204 = vmatpush1.msra.mxu0 0.0
        %1205 = vmatprep.subr.mxu0 0.0
        %1206 = vmatpush1.msra.mxu0 0.0
        %1207 = vmatprep.subr.mxu0 0.0
        %1208 = vmatpush1.msra.mxu0 0.0
        %1209 = vmatprep.subr.mxu0 0.0
        %1210 = vmatpush1.msra.mxu0 0.0
        %1211 = vmatprep.subr.mxu0 0.0
        %1212 = vmatpush1.msra.mxu0 0.0
        %1213 = vmatprep.subr.mxu0 0.0
        %1214 = vmatpush1.msra.mxu0 0.0
        %1215 = vmatprep.subr.mxu0 0.0
        %1216 = vmatpush1.msra.mxu0 0.0
        %1217 = vmatprep.subr.mxu0 0.0
        %1218 = vmatpush1.msra.mxu0 0.0
        %1219 = vmatprep.subr.mxu0 0.0
        %1220 = vmatpush1.msra.mxu0 0.0
        %1221 = vmatprep.subr.mxu0 0.0
        %1222 = vmatpush1.msra.mxu0 0.0
        %1223 = vmatprep.subr.mxu0 0.0
        %1224 = vmatpush1.msra.mxu0 0.0
        %1225 = vmatprep.subr.mxu0 0.0
        %v1226 = vand.u32 %v967, 4294901760
        %v1227 = vsub.f32 %v967, %v1226
        %v1228 = vand.u32 %v1227, 4294901760
        %v1229 = vsub.f32 %v1227, %v1228
        %v1230 = vand.u32 %v1229, 4294901760
        %1231 = vmatpush1.msra.mxu0 %v1230
        %1232 = vmatprep.subr.mxu0 0.0
        %1233 = vmatpush2.msra.mxu0 0.0
        %1234 = vmatprep.subr.mxu0 0.0
        %1235 = vmatpush2.msra.mxu0 0.0
        %1236 = vmatprep.subr.mxu0 0.0
        %1237 = vmatpush2.msra.mxu0 0.0
        %1238 = vmatprep.subr.mxu0 0.0
        %1239 = vmatpush2.msra.mxu0 0.0
        %1240 = vmatprep.subr.mxu0 0.0
        %1241 = vmatpush2.msra.mxu0 0.0
        %1242 = vmatprep.subr.mxu0 0.0
        %1243 = vmatpush2.msra.mxu0 0.0
        %1244 = vmatprep.subr.mxu0 0.0
        %1245 = vmatpush2.msra.mxu0 0.0
        %1246 = vmatprep.subr.mxu0 0.0
        %1247 = vmatpush2.msra.mxu0 0.0
        %1248 = vmatprep.subr.mxu0 0.0
        %1249 = vmatpush2.msra.mxu0 0.0
        %1250 = vmatprep.subr.mxu0 0.0
        %1251 = vmatpush2.msra.mxu0 0.0
        %1252 = vmatprep.subr.mxu0 0.0
        %1253 = vmatpush2.msra.mxu0 0.0
        %1254 = vmatprep.subr.mxu0 0.0
        %1255 = vmatpush2.msra.mxu0 0.0
        %1256 = vmatprep.subr.mxu0 0.0
        %1257 = vmatpush2.msra.mxu0 0.0
        %1258 = vmatprep.subr.mxu0 0.0
        %1259 = vmatpush2.msra.mxu0 0.0
        %1260 = vmatprep.subr.mxu0 0.0
        %1261 = vmatpush2.msra.mxu0 0.0
        %1262 = vmatprep.subr.mxu0 0.0
        %1263 = vmatpush2.msra.mxu0 0.0
        %1264 = vmatprep.mubr.f32.mxu0 0.0
        %v1265 = vand.u32 %v918, 4294901760
        %1266 = vmatmul.mubr.f32.gmra.mxu0 %v1265
        %v1267 = vpop.f32.mrf.mxu0
        %v1268 = vadd.f32 %v1042, %v1267
        %v1269 = vpop.f32.mrf.mxu0
        %1270 = vmatprep.mubr.f32.mxu0 0.0
        %v1271 = vand.u32 %v921, 4294901760
        %1272 = vmatmul.mubr.f32.gmra.mxu0 %v1271
        %v1273 = vpop.f32.mrf.mxu0
        %v1274 = vadd.f32 %v1052, %v1273
        %v1275 = vpop.f32.mrf.mxu0
        %1276 = vmatprep.mubr.f32.mxu0 0.0
        %v1277 = vand.u32 %v924, 4294901760
        %1278 = vmatmul.mubr.f32.gmra.mxu0 %v1277
        %v1279 = vpop.f32.mrf.mxu0
        %v1280 = vadd.f32 %v1062, %v1279
        %v1281 = vpop.f32.mrf.mxu0
        %1282 = vmatprep.mubr.f32.mxu0 0.0
        %v1283 = vand.u32 %v927, 4294901760
        %1284 = vmatmul.mubr.f32.gmra.mxu0 %v1283
        %v1285 = vpop.f32.mrf.mxu0
        %v1286 = vadd.f32 %v1072, %v1285
        %v1287 = vpop.f32.mrf.mxu0
        %1288 = vmatprep.mubr.f32.mxu0 0.0
        %v1289 = vand.u32 %v930, 4294901760
        %1290 = vmatmul.mubr.f32.gmra.mxu0 %v1289
        %v1291 = vpop.f32.mrf.mxu0
        %v1292 = vadd.f32 %v1082, %v1291
        %v1293 = vpop.f32.mrf.mxu0
        %1294 = vmatprep.mubr.f32.mxu0 0.0
        %v1295 = vand.u32 %v933, 4294901760
        %1296 = vmatmul.mubr.f32.gmra.mxu0 %v1295
        %v1297 = vpop.f32.mrf.mxu0
        %v1298 = vadd.f32 %v1092, %v1297
        %v1299 = vpop.f32.mrf.mxu0
        %1300 = vmatprep.mubr.f32.mxu0 0.0
        %v1301 = vand.u32 %v936, 4294901760
        %1302 = vmatmul.mubr.f32.gmra.mxu0 %v1301
        %v1303 = vpop.f32.mrf.mxu0
        %v1304 = vadd.f32 %v1102, %v1303
        %v1305 = vpop.f32.mrf.mxu0
        %1306 = vmatprep.mubr.f32.mxu0 0.0
        %v1307 = vand.u32 %v939, 4294901760
        %1308 = vmatmul.mubr.f32.gmra.mxu0 %v1307
        %v1309 = vpop.f32.mrf.mxu0
        %v1310 = vadd.f32 %v1112, %v1309
        %v1311 = vpop.f32.mrf.mxu0
        %1312 = vmatprep.mubr.f32.mxu0 0.0
        %v1313 = vand.u32 %v942, 4294901760
        %1314 = vmatmul.mubr.f32.gmra.mxu0 %v1313
        %v1315 = vpop.f32.mrf.mxu0
        %v1316 = vadd.f32 %v1122, %v1315
        %v1317 = vpop.f32.mrf.mxu0
        %1318 = vmatprep.mubr.f32.mxu0 0.0
        %v1319 = vand.u32 %v945, 4294901760
        %1320 = vmatmul.mubr.f32.gmra.mxu0 %v1319
        %v1321 = vpop.f32.mrf.mxu0
        %v1322 = vadd.f32 %v1132, %v1321
        %v1323 = vpop.f32.mrf.mxu0
        %1324 = vmatprep.mubr.f32.mxu0 0.0
        %v1325 = vand.u32 %v948, 4294901760
        %1326 = vmatmul.mubr.f32.gmra.mxu0 %v1325
        %v1327 = vpop.f32.mrf.mxu0
        %v1328 = vadd.f32 %v1142, %v1327
        %v1329 = vpop.f32.mrf.mxu0
        %1330 = vmatprep.mubr.f32.mxu0 0.0
        %v1331 = vand.u32 %v951, 4294901760
        %1332 = vmatmul.mubr.f32.gmra.mxu0 %v1331
        %v1333 = vpop.f32.mrf.mxu0
        %v1334 = vadd.f32 %v1152, %v1333
        %v1335 = vpop.f32.mrf.mxu0
        %1336 = vmatprep.mubr.f32.mxu0 0.0
        %v1337 = vand.u32 %v954, 4294901760
        %1338 = vmatmul.mubr.f32.gmra.mxu0 %v1337
        %v1339 = vpop.f32.mrf.mxu0
        %v1340 = vadd.f32 %v1162, %v1339
        %v1341 = vpop.f32.mrf.mxu0
        %1342 = vmatprep.mubr.f32.mxu0 0.0
        %v1343 = vand.u32 %v957, 4294901760
        %1344 = vmatmul.mubr.f32.gmra.mxu0 %v1343
        %v1345 = vpop.f32.mrf.mxu0
        %v1346 = vadd.f32 %v1172, %v1345
        %v1347 = vpop.f32.mrf.mxu0
        %1348 = vmatprep.mubr.f32.mxu0 0.0
        %v1349 = vand.u32 %v960, 4294901760
        %1350 = vmatmul.mubr.f32.gmra.mxu0 %v1349
        %v1351 = vpop.f32.mrf.mxu0
        %v1352 = vadd.f32 %v1182, %v1351
        %v1353 = vpop.f32.mrf.mxu0
        %1354 = vmatprep.mubr.f32.mxu0 0.0
        %v1355 = vand.u32 %v963, 4294901760
        %1356 = vmatmul.mubr.f32.gmra.mxu0 %v1355
        %v1357 = vpop.f32.mrf.mxu0
        %v1358 = vadd.f32 %v1192, %v1357
        %v1359 = vpop.f32.mrf.mxu0
        %1360 = vdwg.mxu0
        %1361 = vmatprep.subr.mxu0 0.0
        %1362 = vmatpush1.msra.mxu0 0.0
        %1363 = vmatprep.subr.mxu0 0.0
        %1364 = vmatpush1.msra.mxu0 0.0
        %1365 = vmatprep.subr.mxu0 0.0
        %1366 = vmatpush1.msra.mxu0 0.0
        %1367 = vmatprep.subr.mxu0 0.0
        %1368 = vmatpush1.msra.mxu0 0.0
        %1369 = vmatprep.subr.mxu0 0.0
        %1370 = vmatpush1.msra.mxu0 0.0
        %1371 = vmatprep.subr.mxu0 0.0
        %1372 = vmatpush1.msra.mxu0 0.0
        %1373 = vmatprep.subr.mxu0 0.0
        %1374 = vmatpush1.msra.mxu0 0.0
        %1375 = vmatprep.subr.mxu0 0.0
        %1376 = vmatpush1.msra.mxu0 0.0
        %1377 = vmatprep.subr.mxu0 0.0
        %1378 = vmatpush1.msra.mxu0 0.0
        %1379 = vmatprep.subr.mxu0 0.0
        %1380 = vmatpush1.msra.mxu0 0.0
        %1381 = vmatprep.subr.mxu0 0.0
        %1382 = vmatpush1.msra.mxu0 0.0
        %1383 = vmatprep.subr.mxu0 0.0
        %1384 = vmatpush1.msra.mxu0 0.0
        %1385 = vmatprep.subr.mxu0 0.0
        %1386 = vmatpush1.msra.mxu0 0.0
        %1387 = vmatprep.subr.mxu0 0.0
        %1388 = vmatpush1.msra.mxu0 0.0
        %1389 = vmatprep.subr.mxu0 0.0
        %1390 = vmatpush1.msra.mxu0 0.0
        %1391 = vmatprep.subr.mxu0 0.0
        %v1392 = vand.u32 %v967, 4294901760
        %v1393 = vsub.f32 %v967, %v1392
        %1394 = vmatpush1.msra.mxu0 %v1393
        %1395 = vmatprep.subr.mxu0 0.0
        %1396 = vmatpush2.msra.mxu0 0.0
        %1397 = vmatprep.subr.mxu0 0.0
        %1398 = vmatpush2.msra.mxu0 0.0
        %1399 = vmatprep.subr.mxu0 0.0
        %1400 = vmatpush2.msra.mxu0 0.0
        %1401 = vmatprep.subr.mxu0 0.0
        %1402 = vmatpush2.msra.mxu0 0.0
        %1403 = vmatprep.subr.mxu0 0.0
        %1404 = vmatpush2.msra.mxu0 0.0
        %1405 = vmatprep.subr.mxu0 0.0
        %1406 = vmatpush2.msra.mxu0 0.0
        %1407 = vmatprep.subr.mxu0 0.0
        %1408 = vmatpush2.msra.mxu0 0.0
        %1409 = vmatprep.subr.mxu0 0.0
        %1410 = vmatpush2.msra.mxu0 0.0
        %1411 = vmatprep.subr.mxu0 0.0
        %1412 = vmatpush2.msra.mxu0 0.0
        %1413 = vmatprep.subr.mxu0 0.0
        %1414 = vmatpush2.msra.mxu0 0.0
        %1415 = vmatprep.subr.mxu0 0.0
        %1416 = vmatpush2.msra.mxu0 0.0
        %1417 = vmatprep.subr.mxu0 0.0
        %1418 = vmatpush2.msra.mxu0 0.0
        %1419 = vmatprep.subr.mxu0 0.0
        %1420 = vmatpush2.msra.mxu0 0.0
        %1421 = vmatprep.subr.mxu0 0.0
        %1422 = vmatpush2.msra.mxu0 0.0
        %1423 = vmatprep.subr.mxu0 0.0
        %1424 = vmatpush2.msra.mxu0 0.0
        %1425 = vmatprep.subr.mxu0 0.0
        %1426 = vmatpush2.msra.mxu0 0.0
        %1427 = vmatprep.mubr.f32.mxu0 0.0
        %v1428 = vand.u32 %v918, 4294901760
        %v1429 = vsub.f32 %v918, %v1428
        %1430 = vmatmul.mubr.f32.gmra.mxu0 %v1429
        %v1431 = vpop.f32.mrf.mxu0
        %v1432 = vadd.f32 %v1268, %v1431
        %v1433 = vpop.f32.mrf.mxu0
        %1434 = vmatprep.mubr.f32.mxu0 0.0
        %v1435 = vand.u32 %v921, 4294901760
        %v1436 = vsub.f32 %v921, %v1435
        %1437 = vmatmul.mubr.f32.gmra.mxu0 %v1436
        %v1438 = vpop.f32.mrf.mxu0
        %v1439 = vadd.f32 %v1274, %v1438
        %v1440 = vpop.f32.mrf.mxu0
        %1441 = vmatprep.mubr.f32.mxu0 0.0
        %v1442 = vand.u32 %v924, 4294901760
        %v1443 = vsub.f32 %v924, %v1442
        %1444 = vmatmul.mubr.f32.gmra.mxu0 %v1443
        %v1445 = vpop.f32.mrf.mxu0
        %v1446 = vadd.f32 %v1280, %v1445
        %v1447 = vpop.f32.mrf.mxu0
        %1448 = vmatprep.mubr.f32.mxu0 0.0
        %v1449 = vand.u32 %v927, 4294901760
        %v1450 = vsub.f32 %v927, %v1449
        %1451 = vmatmul.mubr.f32.gmra.mxu0 %v1450
        %v1452 = vpop.f32.mrf.mxu0
        %v1453 = vadd.f32 %v1286, %v1452
        %v1454 = vpop.f32.mrf.mxu0
        %1455 = vmatprep.mubr.f32.mxu0 0.0
        %v1456 = vand.u32 %v930, 4294901760
        %v1457 = vsub.f32 %v930, %v1456
        %1458 = vmatmul.mubr.f32.gmra.mxu0 %v1457
        %v1459 = vpop.f32.mrf.mxu0
        %v1460 = vadd.f32 %v1292, %v1459
        %v1461 = vpop.f32.mrf.mxu0
        %1462 = vmatprep.mubr.f32.mxu0 0.0
        %v1463 = vand.u32 %v933, 4294901760
        %v1464 = vsub.f32 %v933, %v1463
        %1465 = vmatmul.mubr.f32.gmra.mxu0 %v1464
        %v1466 = vpop.f32.mrf.mxu0
        %v1467 = vadd.f32 %v1298, %v1466
        %v1468 = vpop.f32.mrf.mxu0
        %1469 = vmatprep.mubr.f32.mxu0 0.0
        %v1470 = vand.u32 %v936, 4294901760
        %v1471 = vsub.f32 %v936, %v1470
        %1472 = vmatmul.mubr.f32.gmra.mxu0 %v1471
        %v1473 = vpop.f32.mrf.mxu0
        %v1474 = vadd.f32 %v1304, %v1473
        %v1475 = vpop.f32.mrf.mxu0
        %1476 = vmatprep.mubr.f32.mxu0 0.0
        %v1477 = vand.u32 %v939, 4294901760
        %v1478 = vsub.f32 %v939, %v1477
        %1479 = vmatmul.mubr.f32.gmra.mxu0 %v1478
        %v1480 = vpop.f32.mrf.mxu0
        %v1481 = vadd.f32 %v1310, %v1480
        %v1482 = vpop.f32.mrf.mxu0
        %1483 = vmatprep.mubr.f32.mxu0 0.0
        %v1484 = vand.u32 %v942, 4294901760
        %v1485 = vsub.f32 %v942, %v1484
        %1486 = vmatmul.mubr.f32.gmra.mxu0 %v1485
        %v1487 = vpop.f32.mrf.mxu0
        %v1488 = vadd.f32 %v1316, %v1487
        %v1489 = vpop.f32.mrf.mxu0
        %1490 = vmatprep.mubr.f32.mxu0 0.0
        %v1491 = vand.u32 %v945, 4294901760
        %v1492 = vsub.f32 %v945, %v1491
        %1493 = vmatmul.mubr.f32.gmra.mxu0 %v1492
        %v1494 = vpop.f32.mrf.mxu0
        %v1495 = vadd.f32 %v1322, %v1494
        %v1496 = vpop.f32.mrf.mxu0
        %1497 = vmatprep.mubr.f32.mxu0 0.0
        %v1498 = vand.u32 %v948, 4294901760
        %v1499 = vsub.f32 %v948, %v1498
        %1500 = vmatmul.mubr.f32.gmra.mxu0 %v1499
        %v1501 = vpop.f32.mrf.mxu0
        %v1502 = vadd.f32 %v1328, %v1501
        %v1503 = vpop.f32.mrf.mxu0
        %1504 = vmatprep.mubr.f32.mxu0 0.0
        %v1505 = vand.u32 %v951, 4294901760
        %v1506 = vsub.f32 %v951, %v1505
        %1507 = vmatmul.mubr.f32.gmra.mxu0 %v1506
        %v1508 = vpop.f32.mrf.mxu0
        %v1509 = vadd.f32 %v1334, %v1508
        %v1510 = vpop.f32.mrf.mxu0
        %1511 = vmatprep.mubr.f32.mxu0 0.0
        %v1512 = vand.u32 %v954, 4294901760
        %v1513 = vsub.f32 %v954, %v1512
        %1514 = vmatmul.mubr.f32.gmra.mxu0 %v1513
        %v1515 = vpop.f32.mrf.mxu0
        %v1516 = vadd.f32 %v1340, %v1515
        %v1517 = vpop.f32.mrf.mxu0
        %1518 = vmatprep.mubr.f32.mxu0 0.0
        %v1519 = vand.u32 %v957, 4294901760
        %v1520 = vsub.f32 %v957, %v1519
        %1521 = vmatmul.mubr.f32.gmra.mxu0 %v1520
        %v1522 = vpop.f32.mrf.mxu0
        %v1523 = vadd.f32 %v1346, %v1522
        %v1524 = vpop.f32.mrf.mxu0
        %1525 = vmatprep.mubr.f32.mxu0 0.0
        %v1526 = vand.u32 %v960, 4294901760
        %v1527 = vsub.f32 %v960, %v1526
        %1528 = vmatmul.mubr.f32.gmra.mxu0 %v1527
        %v1529 = vpop.f32.mrf.mxu0
        %v1530 = vadd.f32 %v1352, %v1529
        %v1531 = vpop.f32.mrf.mxu0
        %1532 = vmatprep.mubr.f32.mxu0 0.0
        %v1533 = vand.u32 %v963, 4294901760
        %v1534 = vsub.f32 %v963, %v1533
        %1535 = vmatmul.mubr.f32.gmra.mxu0 %v1534
        %v1536 = vpop.f32.mrf.mxu0
        %v1537 = vadd.f32 %v1358, %v1536
        %v1538 = vpop.f32.mrf.mxu0
        %1539 = vdwg.mxu0
        %1540 = vmatprep.subr.mxu0 0.0
        %1541 = vmatpush1.msra.mxu0 0.0
        %1542 = vmatprep.subr.mxu0 0.0
        %1543 = vmatpush1.msra.mxu0 0.0
        %1544 = vmatprep.subr.mxu0 0.0
        %1545 = vmatpush1.msra.mxu0 0.0
        %1546 = vmatprep.subr.mxu0 0.0
        %1547 = vmatpush1.msra.mxu0 0.0
        %1548 = vmatprep.subr.mxu0 0.0
        %1549 = vmatpush1.msra.mxu0 0.0
        %1550 = vmatprep.subr.mxu0 0.0
        %1551 = vmatpush1.msra.mxu0 0.0
        %1552 = vmatprep.subr.mxu0 0.0
        %1553 = vmatpush1.msra.mxu0 0.0
        %1554 = vmatprep.subr.mxu0 0.0
        %1555 = vmatpush1.msra.mxu0 0.0
        %1556 = vmatprep.subr.mxu0 0.0
        %1557 = vmatpush1.msra.mxu0 0.0
        %1558 = vmatprep.subr.mxu0 0.0
        %1559 = vmatpush1.msra.mxu0 0.0
        %1560 = vmatprep.subr.mxu0 0.0
        %1561 = vmatpush1.msra.mxu0 0.0
        %1562 = vmatprep.subr.mxu0 0.0
        %1563 = vmatpush1.msra.mxu0 0.0
        %1564 = vmatprep.subr.mxu0 0.0
        %1565 = vmatpush1.msra.mxu0 0.0
        %1566 = vmatprep.subr.mxu0 0.0
        %1567 = vmatpush1.msra.mxu0 0.0
        %1568 = vmatprep.subr.mxu0 0.0
        %1569 = vmatpush1.msra.mxu0 0.0
        %1570 = vmatprep.subr.mxu0 0.0
        %v1571 = vand.u32 %v967, 4294901760
        %1572 = vmatpush1.msra.mxu0 %v1571
        %1573 = vmatprep.subr.mxu0 0.0
        %1574 = vmatpush2.msra.mxu0 0.0
        %1575 = vmatprep.subr.mxu0 0.0
        %1576 = vmatpush2.msra.mxu0 0.0
        %1577 = vmatprep.subr.mxu0 0.0
        %1578 = vmatpush2.msra.mxu0 0.0
        %1579 = vmatprep.subr.mxu0 0.0
        %1580 = vmatpush2.msra.mxu0 0.0
        %1581 = vmatprep.subr.mxu0 0.0
        %1582 = vmatpush2.msra.mxu0 0.0
        %1583 = vmatprep.subr.mxu0 0.0
        %1584 = vmatpush2.msra.mxu0 0.0
        %1585 = vmatprep.subr.mxu0 0.0
        %1586 = vmatpush2.msra.mxu0 0.0
        %1587 = vmatprep.subr.mxu0 0.0
        %1588 = vmatpush2.msra.mxu0 0.0
        %1589 = vmatprep.subr.mxu0 0.0
        %1590 = vmatpush2.msra.mxu0 0.0
        %1591 = vmatprep.subr.mxu0 0.0
        %1592 = vmatpush2.msra.mxu0 0.0
        %1593 = vmatprep.subr.mxu0 0.0
        %1594 = vmatpush2.msra.mxu0 0.0
        %1595 = vmatprep.subr.mxu0 0.0
        %1596 = vmatpush2.msra.mxu0 0.0
        %1597 = vmatprep.subr.mxu0 0.0
        %1598 = vmatpush2.msra.mxu0 0.0
        %1599 = vmatprep.subr.mxu0 0.0
        %1600 = vmatpush2.msra.mxu0 0.0
        %1601 = vmatprep.subr.mxu0 0.0
        %1602 = vmatpush2.msra.mxu0 0.0
        %1603 = vmatprep.subr.mxu0 0.0
        %1604 = vmatpush2.msra.mxu0 0.0
        %1605 = vmatprep.mubr.f32.mxu0 0.0
        %v1606 = vand.u32 %v918, 4294901760
        %v1607 = vsub.f32 %v918, %v1606
        %v1608 = vand.u32 %v1607, 4294901760
        %1609 = vmatmul.mubr.f32.gmra.mxu0 %v1608
        %v1610 = vpop.f32.mrf.mxu0
        %v1611 = vadd.f32 %v1432, %v1610
        %v1612 = vpop.f32.mrf.mxu0
        %1613 = vmatprep.mubr.f32.mxu0 0.0
        %v1614 = vand.u32 %v921, 4294901760
        %v1615 = vsub.f32 %v921, %v1614
        %v1616 = vand.u32 %v1615, 4294901760
        %1617 = vmatmul.mubr.f32.gmra.mxu0 %v1616
        %v1618 = vpop.f32.mrf.mxu0
        %v1619 = vadd.f32 %v1439, %v1618
        %v1620 = vpop.f32.mrf.mxu0
        %1621 = vmatprep.mubr.f32.mxu0 0.0
        %v1622 = vand.u32 %v924, 4294901760
        %v1623 = vsub.f32 %v924, %v1622
        %v1624 = vand.u32 %v1623, 4294901760
        %1625 = vmatmul.mubr.f32.gmra.mxu0 %v1624
        %v1626 = vpop.f32.mrf.mxu0
        %v1627 = vadd.f32 %v1446, %v1626
        %v1628 = vpop.f32.mrf.mxu0
        %1629 = vmatprep.mubr.f32.mxu0 0.0
        %v1630 = vand.u32 %v927, 4294901760
        %v1631 = vsub.f32 %v927, %v1630
        %v1632 = vand.u32 %v1631, 4294901760
        %1633 = vmatmul.mubr.f32.gmra.mxu0 %v1632
        %v1634 = vpop.f32.mrf.mxu0
        %v1635 = vadd.f32 %v1453, %v1634
        %v1636 = vpop.f32.mrf.mxu0
        %1637 = vmatprep.mubr.f32.mxu0 0.0
        %v1638 = vand.u32 %v930, 4294901760
        %v1639 = vsub.f32 %v930, %v1638
        %v1640 = vand.u32 %v1639, 4294901760
        %1641 = vmatmul.mubr.f32.gmra.mxu0 %v1640
        %v1642 = vpop.f32.mrf.mxu0
        %v1643 = vadd.f32 %v1460, %v1642
        %v1644 = vpop.f32.mrf.mxu0
        %1645 = vmatprep.mubr.f32.mxu0 0.0
        %v1646 = vand.u32 %v933, 4294901760
        %v1647 = vsub.f32 %v933, %v1646
        %v1648 = vand.u32 %v1647, 4294901760
        %1649 = vmatmul.mubr.f32.gmra.mxu0 %v1648
        %v1650 = vpop.f32.mrf.mxu0
        %v1651 = vadd.f32 %v1467, %v1650
        %v1652 = vpop.f32.mrf.mxu0
        %1653 = vmatprep.mubr.f32.mxu0 0.0
        %v1654 = vand.u32 %v936, 4294901760
        %v1655 = vsub.f32 %v936, %v1654
        %v1656 = vand.u32 %v1655, 4294901760
        %1657 = vmatmul.mubr.f32.gmra.mxu0 %v1656
        %v1658 = vpop.f32.mrf.mxu0
        %v1659 = vadd.f32 %v1474, %v1658
        %v1660 = vpop.f32.mrf.mxu0
        %1661 = vmatprep.mubr.f32.mxu0 0.0
        %v1662 = vand.u32 %v939, 4294901760
        %v1663 = vsub.f32 %v939, %v1662
        %v1664 = vand.u32 %v1663, 4294901760
        %1665 = vmatmul.mubr.f32.gmra.mxu0 %v1664
        %v1666 = vpop.f32.mrf.mxu0
        %v1667 = vadd.f32 %v1481, %v1666
        %v1668 = vpop.f32.mrf.mxu0
        %1669 = vmatprep.mubr.f32.mxu0 0.0
        %v1670 = vand.u32 %v942, 4294901760
        %v1671 = vsub.f32 %v942, %v1670
        %v1672 = vand.u32 %v1671, 4294901760
        %1673 = vmatmul.mubr.f32.gmra.mxu0 %v1672
        %v1674 = vpop.f32.mrf.mxu0
        %v1675 = vadd.f32 %v1488, %v1674
        %v1676 = vpop.f32.mrf.mxu0
        %1677 = vmatprep.mubr.f32.mxu0 0.0
        %v1678 = vand.u32 %v945, 4294901760
        %v1679 = vsub.f32 %v945, %v1678
        %v1680 = vand.u32 %v1679, 4294901760
        %1681 = vmatmul.mubr.f32.gmra.mxu0 %v1680
        %v1682 = vpop.f32.mrf.mxu0
        %v1683 = vadd.f32 %v1495, %v1682
        %v1684 = vpop.f32.mrf.mxu0
        %1685 = vmatprep.mubr.f32.mxu0 0.0
        %v1686 = vand.u32 %v948, 4294901760
        %v1687 = vsub.f32 %v948, %v1686
        %v1688 = vand.u32 %v1687, 4294901760
        %1689 = vmatmul.mubr.f32.gmra.mxu0 %v1688
        %v1690 = vpop.f32.mrf.mxu0
        %v1691 = vadd.f32 %v1502, %v1690
        %v1692 = vpop.f32.mrf.mxu0
        %1693 = vmatprep.mubr.f32.mxu0 0.0
        %v1694 = vand.u32 %v951, 4294901760
        %v1695 = vsub.f32 %v951, %v1694
        %v1696 = vand.u32 %v1695, 4294901760
        %1697 = vmatmul.mubr.f32.gmra.mxu0 %v1696
        %v1698 = vpop.f32.mrf.mxu0
        %v1699 = vadd.f32 %v1509, %v1698
        %v1700 = vpop.f32.mrf.mxu0
        %1701 = vmatprep.mubr.f32.mxu0 0.0
        %v1702 = vand.u32 %v954, 4294901760
        %v1703 = vsub.f32 %v954, %v1702
        %v1704 = vand.u32 %v1703, 4294901760
        %1705 = vmatmul.mubr.f32.gmra.mxu0 %v1704
        %v1706 = vpop.f32.mrf.mxu0
        %v1707 = vadd.f32 %v1516, %v1706
        %v1708 = vpop.f32.mrf.mxu0
        %1709 = vmatprep.mubr.f32.mxu0 0.0
        %v1710 = vand.u32 %v957, 4294901760
        %v1711 = vsub.f32 %v957, %v1710
        %v1712 = vand.u32 %v1711, 4294901760
        %1713 = vmatmul.mubr.f32.gmra.mxu0 %v1712
        %v1714 = vpop.f32.mrf.mxu0
        %v1715 = vadd.f32 %v1523, %v1714
        %v1716 = vpop.f32.mrf.mxu0
        %1717 = vmatprep.mubr.f32.mxu0 0.0
        %v1718 = vand.u32 %v960, 4294901760
        %v1719 = vsub.f32 %v960, %v1718
        %v1720 = vand.u32 %v1719, 4294901760
        %1721 = vmatmul.mubr.f32.gmra.mxu0 %v1720
        %v1722 = vpop.f32.mrf.mxu0
        %v1723 = vadd.f32 %v1530, %v1722
        %v1724 = vpop.f32.mrf.mxu0
        %1725 = vmatprep.mubr.f32.mxu0 0.0
        %v1726 = vand.u32 %v963, 4294901760
        %v1727 = vsub.f32 %v963, %v1726
        %v1728 = vand.u32 %v1727, 4294901760
        %1729 = vmatmul.mubr.f32.gmra.mxu0 %v1728
        %v1730 = vpop.f32.mrf.mxu0
        %v1731 = vadd.f32 %v1537, %v1730
        %v1732 = vpop.f32.mrf.mxu0
        %1733 = vdwg.mxu0
        %1734 = vmatprep.subr.mxu0 0.0
        %1735 = vmatpush1.msra.mxu0 0.0
        %1736 = vmatprep.subr.mxu0 0.0
        %1737 = vmatpush1.msra.mxu0 0.0
        %1738 = vmatprep.subr.mxu0 0.0
        %1739 = vmatpush1.msra.mxu0 0.0
        %1740 = vmatprep.subr.mxu0 0.0
        %1741 = vmatpush1.msra.mxu0 0.0
        %1742 = vmatprep.subr.mxu0 0.0
        %1743 = vmatpush1.msra.mxu0 0.0
        %1744 = vmatprep.subr.mxu0 0.0
        %1745 = vmatpush1.msra.mxu0 0.0
        %1746 = vmatprep.subr.mxu0 0.0
        %1747 = vmatpush1.msra.mxu0 0.0
        %1748 = vmatprep.subr.mxu0 0.0
        %1749 = vmatpush1.msra.mxu0 0.0
        %1750 = vmatprep.subr.mxu0 0.0
        %1751 = vmatpush1.msra.mxu0 0.0
        %1752 = vmatprep.subr.mxu0 0.0
        %1753 = vmatpush1.msra.mxu0 0.0
        %1754 = vmatprep.subr.mxu0 0.0
        %1755 = vmatpush1.msra.mxu0 0.0
        %1756 = vmatprep.subr.mxu0 0.0
        %1757 = vmatpush1.msra.mxu0 0.0
        %1758 = vmatprep.subr.mxu0 0.0
        %1759 = vmatpush1.msra.mxu0 0.0
        %1760 = vmatprep.subr.mxu0 0.0
        %1761 = vmatpush1.msra.mxu0 0.0
        %1762 = vmatprep.subr.mxu0 0.0
        %1763 = vmatpush1.msra.mxu0 0.0
        %1764 = vmatprep.subr.mxu0 0.0
        %v1765 = vand.u32 %v967, 4294901760
        %v1766 = vsub.f32 %v967, %v1765
        %v1767 = vand.u32 %v1766, 4294901760
        %1768 = vmatpush1.msra.mxu0 %v1767
        %1769 = vmatprep.subr.mxu0 0.0
        %1770 = vmatpush2.msra.mxu0 0.0
        %1771 = vmatprep.subr.mxu0 0.0
        %1772 = vmatpush2.msra.mxu0 0.0
        %1773 = vmatprep.subr.mxu0 0.0
        %1774 = vmatpush2.msra.mxu0 0.0
        %1775 = vmatprep.subr.mxu0 0.0
        %1776 = vmatpush2.msra.mxu0 0.0
        %1777 = vmatprep.subr.mxu0 0.0
        %1778 = vmatpush2.msra.mxu0 0.0
        %1779 = vmatprep.subr.mxu0 0.0
        %1780 = vmatpush2.msra.mxu0 0.0
        %1781 = vmatprep.subr.mxu0 0.0
        %1782 = vmatpush2.msra.mxu0 0.0
        %1783 = vmatprep.subr.mxu0 0.0
        %1784 = vmatpush2.msra.mxu0 0.0
        %1785 = vmatprep.subr.mxu0 0.0
        %1786 = vmatpush2.msra.mxu0 0.0
        %1787 = vmatprep.subr.mxu0 0.0
        %1788 = vmatpush2.msra.mxu0 0.0
        %1789 = vmatprep.subr.mxu0 0.0
        %1790 = vmatpush2.msra.mxu0 0.0
        %1791 = vmatprep.subr.mxu0 0.0
        %1792 = vmatpush2.msra.mxu0 0.0
        %1793 = vmatprep.subr.mxu0 0.0
        %1794 = vmatpush2.msra.mxu0 0.0
        %1795 = vmatprep.subr.mxu0 0.0
        %1796 = vmatpush2.msra.mxu0 0.0
        %1797 = vmatprep.subr.mxu0 0.0
        %1798 = vmatpush2.msra.mxu0 0.0
        %1799 = vmatprep.subr.mxu0 0.0
        %1800 = vmatpush2.msra.mxu0 0.0
        %1801 = vmatprep.mubr.f32.mxu0 0.0
        %v1802 = vand.u32 %v918, 4294901760
        %1803 = vmatmul.mubr.f32.gmra.mxu0 %v1802
        %v1804 = vpop.f32.mrf.mxu0
        %v1805 = vadd.f32 %v1611, %v1804
        %v1806 = vpop.f32.mrf.mxu0
        %1807 = vmatprep.mubr.f32.mxu0 0.0
        %v1808 = vand.u32 %v921, 4294901760
        %1809 = vmatmul.mubr.f32.gmra.mxu0 %v1808
        %v1810 = vpop.f32.mrf.mxu0
        %v1811 = vadd.f32 %v1619, %v1810
        %v1812 = vpop.f32.mrf.mxu0
        %1813 = vmatprep.mubr.f32.mxu0 0.0
        %v1814 = vand.u32 %v924, 4294901760
        %1815 = vmatmul.mubr.f32.gmra.mxu0 %v1814
        %v1816 = vpop.f32.mrf.mxu0
        %v1817 = vadd.f32 %v1627, %v1816
        %v1818 = vpop.f32.mrf.mxu0
        %1819 = vmatprep.mubr.f32.mxu0 0.0
        %v1820 = vand.u32 %v927, 4294901760
        %1821 = vmatmul.mubr.f32.gmra.mxu0 %v1820
        %v1822 = vpop.f32.mrf.mxu0
        %v1823 = vadd.f32 %v1635, %v1822
        %v1824 = vpop.f32.mrf.mxu0
        %1825 = vmatprep.mubr.f32.mxu0 0.0
        %v1826 = vand.u32 %v930, 4294901760
        %1827 = vmatmul.mubr.f32.gmra.mxu0 %v1826
        %v1828 = vpop.f32.mrf.mxu0
        %v1829 = vadd.f32 %v1643, %v1828
        %v1830 = vpop.f32.mrf.mxu0
        %1831 = vmatprep.mubr.f32.mxu0 0.0
        %v1832 = vand.u32 %v933, 4294901760
        %1833 = vmatmul.mubr.f32.gmra.mxu0 %v1832
        %v1834 = vpop.f32.mrf.mxu0
        %v1835 = vadd.f32 %v1651, %v1834
        %v1836 = vpop.f32.mrf.mxu0
        %1837 = vmatprep.mubr.f32.mxu0 0.0
        %v1838 = vand.u32 %v936, 4294901760
        %1839 = vmatmul.mubr.f32.gmra.mxu0 %v1838
        %v1840 = vpop.f32.mrf.mxu0
        %v1841 = vadd.f32 %v1659, %v1840
        %v1842 = vpop.f32.mrf.mxu0
        %1843 = vmatprep.mubr.f32.mxu0 0.0
        %v1844 = vand.u32 %v939, 4294901760
        %1845 = vmatmul.mubr.f32.gmra.mxu0 %v1844
        %v1846 = vpop.f32.mrf.mxu0
        %v1847 = vadd.f32 %v1667, %v1846
        %v1848 = vpop.f32.mrf.mxu0
        %1849 = vmatprep.mubr.f32.mxu0 0.0
        %v1850 = vand.u32 %v942, 4294901760
        %1851 = vmatmul.mubr.f32.gmra.mxu0 %v1850
        %v1852 = vpop.f32.mrf.mxu0
        %v1853 = vadd.f32 %v1675, %v1852
        %v1854 = vpop.f32.mrf.mxu0
        %1855 = vmatprep.mubr.f32.mxu0 0.0
        %v1856 = vand.u32 %v945, 4294901760
        %1857 = vmatmul.mubr.f32.gmra.mxu0 %v1856
        %v1858 = vpop.f32.mrf.mxu0
        %v1859 = vadd.f32 %v1683, %v1858
        %v1860 = vpop.f32.mrf.mxu0
        %1861 = vmatprep.mubr.f32.mxu0 0.0
        %v1862 = vand.u32 %v948, 4294901760
        %1863 = vmatmul.mubr.f32.gmra.mxu0 %v1862
        %v1864 = vpop.f32.mrf.mxu0
        %v1865 = vadd.f32 %v1691, %v1864
        %v1866 = vpop.f32.mrf.mxu0
        %1867 = vmatprep.mubr.f32.mxu0 0.0
        %v1868 = vand.u32 %v951, 4294901760
        %1869 = vmatmul.mubr.f32.gmra.mxu0 %v1868
        %v1870 = vpop.f32.mrf.mxu0
        %v1871 = vadd.f32 %v1699, %v1870
        %v1872 = vpop.f32.mrf.mxu0
        %1873 = vmatprep.mubr.f32.mxu0 0.0
        %v1874 = vand.u32 %v954, 4294901760
        %1875 = vmatmul.mubr.f32.gmra.mxu0 %v1874
        %v1876 = vpop.f32.mrf.mxu0
        %v1877 = vadd.f32 %v1707, %v1876
        %v1878 = vpop.f32.mrf.mxu0
        %1879 = vmatprep.mubr.f32.mxu0 0.0
        %v1880 = vand.u32 %v957, 4294901760
        %1881 = vmatmul.mubr.f32.gmra.mxu0 %v1880
        %v1882 = vpop.f32.mrf.mxu0
        %v1883 = vadd.f32 %v1715, %v1882
        %v1884 = vpop.f32.mrf.mxu0
        %1885 = vmatprep.mubr.f32.mxu0 0.0
        %v1886 = vand.u32 %v960, 4294901760
        %1887 = vmatmul.mubr.f32.gmra.mxu0 %v1886
        %v1888 = vpop.f32.mrf.mxu0
        %v1889 = vadd.f32 %v1723, %v1888
        %v1890 = vpop.f32.mrf.mxu0
        %1891 = vmatprep.mubr.f32.mxu0 0.0
        %v1892 = vand.u32 %v963, 4294901760
        %1893 = vmatmul.mubr.f32.gmra.mxu0 %v1892
        %v1894 = vpop.f32.mrf.mxu0
        %v1895 = vadd.f32 %v1731, %v1894
        %v1896 = vpop.f32.mrf.mxu0
        %1897 = vdwg.mxu0
        %1898 = vmatprep.subr.mxu0 0.0
        %1899 = vmatpush1.msra.mxu0 0.0
        %1900 = vmatprep.subr.mxu0 0.0
        %1901 = vmatpush1.msra.mxu0 0.0
        %1902 = vmatprep.subr.mxu0 0.0
        %1903 = vmatpush1.msra.mxu0 0.0
        %1904 = vmatprep.subr.mxu0 0.0
        %1905 = vmatpush1.msra.mxu0 0.0
        %1906 = vmatprep.subr.mxu0 0.0
        %1907 = vmatpush1.msra.mxu0 0.0
        %1908 = vmatprep.subr.mxu0 0.0
        %1909 = vmatpush1.msra.mxu0 0.0
        %1910 = vmatprep.subr.mxu0 0.0
        %1911 = vmatpush1.msra.mxu0 0.0
        %1912 = vmatprep.subr.mxu0 0.0
        %1913 = vmatpush1.msra.mxu0 0.0
        %1914 = vmatprep.subr.mxu0 0.0
        %1915 = vmatpush1.msra.mxu0 0.0
        %1916 = vmatprep.subr.mxu0 0.0
        %1917 = vmatpush1.msra.mxu0 0.0
        %1918 = vmatprep.subr.mxu0 0.0
        %1919 = vmatpush1.msra.mxu0 0.0
        %1920 = vmatprep.subr.mxu0 0.0
        %1921 = vmatpush1.msra.mxu0 0.0
        %1922 = vmatprep.subr.mxu0 0.0
        %1923 = vmatpush1.msra.mxu0 0.0
        %1924 = vmatprep.subr.mxu0 0.0
        %1925 = vmatpush1.msra.mxu0 0.0
        %1926 = vmatprep.subr.mxu0 0.0
        %1927 = vmatpush1.msra.mxu0 0.0
        %1928 = vmatprep.subr.mxu0 0.0
        %v1929 = vand.u32 %v967, 4294901760
        %1930 = vmatpush1.msra.mxu0 %v1929
        %1931 = vmatprep.subr.mxu0 0.0
        %1932 = vmatpush2.msra.mxu0 0.0
        %1933 = vmatprep.subr.mxu0 0.0
        %1934 = vmatpush2.msra.mxu0 0.0
        %1935 = vmatprep.subr.mxu0 0.0
        %1936 = vmatpush2.msra.mxu0 0.0
        %1937 = vmatprep.subr.mxu0 0.0
        %1938 = vmatpush2.msra.mxu0 0.0
        %1939 = vmatprep.subr.mxu0 0.0
        %1940 = vmatpush2.msra.mxu0 0.0
        %1941 = vmatprep.subr.mxu0 0.0
        %1942 = vmatpush2.msra.mxu0 0.0
        %1943 = vmatprep.subr.mxu0 0.0
        %1944 = vmatpush2.msra.mxu0 0.0
        %1945 = vmatprep.subr.mxu0 0.0
        %1946 = vmatpush2.msra.mxu0 0.0
        %1947 = vmatprep.subr.mxu0 0.0
        %1948 = vmatpush2.msra.mxu0 0.0
        %1949 = vmatprep.subr.mxu0 0.0
        %1950 = vmatpush2.msra.mxu0 0.0
        %1951 = vmatprep.subr.mxu0 0.0
        %1952 = vmatpush2.msra.mxu0 0.0
        %1953 = vmatprep.subr.mxu0 0.0
        %1954 = vmatpush2.msra.mxu0 0.0
        %1955 = vmatprep.subr.mxu0 0.0
        %1956 = vmatpush2.msra.mxu0 0.0
        %1957 = vmatprep.subr.mxu0 0.0
        %1958 = vmatpush2.msra.mxu0 0.0
        %1959 = vmatprep.subr.mxu0 0.0
        %1960 = vmatpush2.msra.mxu0 0.0
        %1961 = vmatprep.subr.mxu0 0.0
        %1962 = vmatpush2.msra.mxu0 0.0
        %1963 = vmatprep.mubr.f32.mxu0 0.0
        %v1964 = vand.u32 %v918, 4294901760
        %1965 = vmatmul.mubr.f32.gmra.mxu0 %v1964
        %v1966 = vpop.f32.mrf.mxu0
        %v1967 = vadd.f32 %v1805, %v1966
        %v1968 = vpop.f32.mrf.mxu0
        %1969 = vmatprep.mubr.f32.mxu0 0.0
        %v1970 = vand.u32 %v921, 4294901760
        %1971 = vmatmul.mubr.f32.gmra.mxu0 %v1970
        %v1972 = vpop.f32.mrf.mxu0
        %v1973 = vadd.f32 %v1811, %v1972
        %v1974 = vpop.f32.mrf.mxu0
        %1975 = vmatprep.mubr.f32.mxu0 0.0
        %v1976 = vand.u32 %v924, 4294901760
        %1977 = vmatmul.mubr.f32.gmra.mxu0 %v1976
        %v1978 = vpop.f32.mrf.mxu0
        %v1979 = vadd.f32 %v1817, %v1978
        %v1980 = vpop.f32.mrf.mxu0
        %1981 = vmatprep.mubr.f32.mxu0 0.0
        %v1982 = vand.u32 %v927, 4294901760
        %1983 = vmatmul.mubr.f32.gmra.mxu0 %v1982
        %v1984 = vpop.f32.mrf.mxu0
        %v1985 = vadd.f32 %v1823, %v1984
        %v1986 = vpop.f32.mrf.mxu0
        %1987 = vmatprep.mubr.f32.mxu0 0.0
        %v1988 = vand.u32 %v930, 4294901760
        %1989 = vmatmul.mubr.f32.gmra.mxu0 %v1988
        %v1990 = vpop.f32.mrf.mxu0
        %v1991 = vadd.f32 %v1829, %v1990
        %v1992 = vpop.f32.mrf.mxu0
        %1993 = vmatprep.mubr.f32.mxu0 0.0
        %v1994 = vand.u32 %v933, 4294901760
        %1995 = vmatmul.mubr.f32.gmra.mxu0 %v1994
        %v1996 = vpop.f32.mrf.mxu0
        %v1997 = vadd.f32 %v1835, %v1996
        %v1998 = vpop.f32.mrf.mxu0
        %1999 = vmatprep.mubr.f32.mxu0 0.0
        %v2000 = vand.u32 %v936, 4294901760
        %2001 = vmatmul.mubr.f32.gmra.mxu0 %v2000
        %v2002 = vpop.f32.mrf.mxu0
        %v2003 = vadd.f32 %v1841, %v2002
        %v2004 = vpop.f32.mrf.mxu0
        %2005 = vmatprep.mubr.f32.mxu0 0.0
        %v2006 = vand.u32 %v939, 4294901760
        %2007 = vmatmul.mubr.f32.gmra.mxu0 %v2006
        %v2008 = vpop.f32.mrf.mxu0
        %v2009 = vadd.f32 %v1847, %v2008
        %v2010 = vpop.f32.mrf.mxu0
        %2011 = vmatprep.mubr.f32.mxu0 0.0
        %v2012 = vand.u32 %v942, 4294901760
        %2013 = vmatmul.mubr.f32.gmra.mxu0 %v2012
        %v2014 = vpop.f32.mrf.mxu0
        %v2015 = vadd.f32 %v1853, %v2014
        %v2016 = vpop.f32.mrf.mxu0
        %2017 = vmatprep.mubr.f32.mxu0 0.0
        %v2018 = vand.u32 %v945, 4294901760
        %2019 = vmatmul.mubr.f32.gmra.mxu0 %v2018
        %v2020 = vpop.f32.mrf.mxu0
        %v2021 = vadd.f32 %v1859, %v2020
        %v2022 = vpop.f32.mrf.mxu0
        %2023 = vmatprep.mubr.f32.mxu0 0.0
        %v2024 = vand.u32 %v948, 4294901760
        %2025 = vmatmul.mubr.f32.gmra.mxu0 %v2024
        %v2026 = vpop.f32.mrf.mxu0
        %v2027 = vadd.f32 %v1865, %v2026
        %v2028 = vpop.f32.mrf.mxu0
        %2029 = vmatprep.mubr.f32.mxu0 0.0
        %v2030 = vand.u32 %v951, 4294901760
        %2031 = vmatmul.mubr.f32.gmra.mxu0 %v2030
        %v2032 = vpop.f32.mrf.mxu0
        %v2033 = vadd.f32 %v1871, %v2032
        %v2034 = vpop.f32.mrf.mxu0
        %2035 = vmatprep.mubr.f32.mxu0 0.0
        %v2036 = vand.u32 %v954, 4294901760
        %2037 = vmatmul.mubr.f32.gmra.mxu0 %v2036
        %v2038 = vpop.f32.mrf.mxu0
        %v2039 = vadd.f32 %v1877, %v2038
        %v2040 = vpop.f32.mrf.mxu0
        %2041 = vmatprep.mubr.f32.mxu0 0.0
        %v2042 = vand.u32 %v957, 4294901760
        %2043 = vmatmul.mubr.f32.gmra.mxu0 %v2042
        %v2044 = vpop.f32.mrf.mxu0
        %v2045 = vadd.f32 %v1883, %v2044
        %v2046 = vpop.f32.mrf.mxu0
        %2047 = vmatprep.mubr.f32.mxu0 0.0
        %v2048 = vand.u32 %v960, 4294901760
        %2049 = vmatmul.mubr.f32.gmra.mxu0 %v2048
        %v2050 = vpop.f32.mrf.mxu0
        %v2051 = vadd.f32 %v1889, %v2050
        %v2052 = vpop.f32.mrf.mxu0
        %2053 = vmatprep.mubr.f32.mxu0 0.0
        %v2054 = vand.u32 %v963, 4294901760
        %2055 = vmatmul.mubr.f32.gmra.mxu0 %v2054
        %v2056 = vpop.f32.mrf.mxu0
        %v2057 = vadd.f32 %v1895, %v2056
        %v2058 = vpop.f32.mrf.mxu0
        %2059 = vdwg.mxu0
        %v2061 = vsel %vm916, %v511, 0
        %v2064 = vsel %vm916, %v512, 0
        %v2067 = vsel %vm916, %v513, 0
        %v2070 = vsel %vm916, %v514, 0
        %v2073 = vsel %vm916, %v515, 0
        %v2076 = vsel %vm916, %v516, 0
        %v2079 = vsel %vm916, %v517, 0
        %v2082 = vsel %vm916, %v518, 0
        %v2085 = vsel %vm916, %v519, 0
        %v2088 = vsel %vm916, %v520, 0
        %v2091 = vsel %vm916, %v521, 0
        %v2094 = vsel %vm916, %v522, 0
        %v2097 = vsel %vm916, %v523, 0
        %v2100 = vsel %vm916, %v524, 0
        %v2103 = vsel %vm916, %v525, 0
        %v2106 = vsel %vm916, %v526, 0
        %v2109 = vsel %vm965, %v544, 0
        %2111 = vmatprep.subr.mxu0 0.0
        %2112 = vmatpush1.msra.mxu0 0.0
        %2113 = vmatprep.subr.mxu0 0.0
        %2114 = vmatpush1.msra.mxu0 0.0
        %2115 = vmatprep.subr.mxu0 0.0
        %2116 = vmatpush1.msra.mxu0 0.0
        %2117 = vmatprep.subr.mxu0 0.0
        %2118 = vmatpush1.msra.mxu0 0.0
        %2119 = vmatprep.subr.mxu0 0.0
        %2120 = vmatpush1.msra.mxu0 0.0
        %2121 = vmatprep.subr.mxu0 0.0
        %2122 = vmatpush1.msra.mxu0 0.0
        %2123 = vmatprep.subr.mxu0 0.0
        %2124 = vmatpush1.msra.mxu0 0.0
        %2125 = vmatprep.subr.mxu0 0.0
        %2126 = vmatpush1.msra.mxu0 0.0
        %2127 = vmatprep.subr.mxu0 0.0
        %2128 = vmatpush1.msra.mxu0 0.0
        %2129 = vmatprep.subr.mxu0 0.0
        %2130 = vmatpush1.msra.mxu0 0.0
        %2131 = vmatprep.subr.mxu0 0.0
        %2132 = vmatpush1.msra.mxu0 0.0
        %2133 = vmatprep.subr.mxu0 0.0
        %2134 = vmatpush1.msra.mxu0 0.0
        %2135 = vmatprep.subr.mxu0 0.0
        %2136 = vmatpush1.msra.mxu0 0.0
        %2137 = vmatprep.subr.mxu0 0.0
        %2138 = vmatpush1.msra.mxu0 0.0
        %2139 = vmatprep.subr.mxu0 0.0
        %2140 = vmatpush1.msra.mxu0 0.0
        %2141 = vmatprep.subr.mxu0 0.0
        %v2142 = vand.u32 %v2109, 4294901760
        %2143 = vmatpush1.msra.mxu0 %v2142
        %2144 = vmatprep.subr.mxu0 0.0
        %2145 = vmatpush2.msra.mxu0 0.0
        %2146 = vmatprep.subr.mxu0 0.0
        %2147 = vmatpush2.msra.mxu0 0.0
        %2148 = vmatprep.subr.mxu0 0.0
        %2149 = vmatpush2.msra.mxu0 0.0
        %2150 = vmatprep.subr.mxu0 0.0
        %2151 = vmatpush2.msra.mxu0 0.0
        %2152 = vmatprep.subr.mxu0 0.0
        %2153 = vmatpush2.msra.mxu0 0.0
        %2154 = vmatprep.subr.mxu0 0.0
        %2155 = vmatpush2.msra.mxu0 0.0
        %2156 = vmatprep.subr.mxu0 0.0
        %2157 = vmatpush2.msra.mxu0 0.0
        %2158 = vmatprep.subr.mxu0 0.0
        %2159 = vmatpush2.msra.mxu0 0.0
        %2160 = vmatprep.subr.mxu0 0.0
        %2161 = vmatpush2.msra.mxu0 0.0
        %2162 = vmatprep.subr.mxu0 0.0
        %2163 = vmatpush2.msra.mxu0 0.0
        %2164 = vmatprep.subr.mxu0 0.0
        %2165 = vmatpush2.msra.mxu0 0.0
        %2166 = vmatprep.subr.mxu0 0.0
        %2167 = vmatpush2.msra.mxu0 0.0
        %2168 = vmatprep.subr.mxu0 0.0
        %2169 = vmatpush2.msra.mxu0 0.0
        %2170 = vmatprep.subr.mxu0 0.0
        %2171 = vmatpush2.msra.mxu0 0.0
        %2172 = vmatprep.subr.mxu0 0.0
        %2173 = vmatpush2.msra.mxu0 0.0
        %2174 = vmatprep.subr.mxu0 0.0
        %2175 = vmatpush2.msra.mxu0 0.0
        %2176 = vmatprep.mubr.f32.mxu0 0.0
        %v2177 = vand.u32 %v2061, 4294901760
        %v2178 = vsub.f32 %v2061, %v2177
        %v2179 = vand.u32 %v2178, 4294901760
        %v2180 = vsub.f32 %v2178, %v2179
        %v2181 = vand.u32 %v2180, 4294901760
        %2182 = vmatmul.mubr.f32.gmra.mxu0 %v2181
        %v2183 = vpop.f32.mrf.mxu0
        %v2184 = vadd.f32 0.0, %v2183
        %v2185 = vpop.f32.mrf.mxu0
        %2186 = vmatprep.mubr.f32.mxu0 0.0
        %v2187 = vand.u32 %v2064, 4294901760
        %v2188 = vsub.f32 %v2064, %v2187
        %v2189 = vand.u32 %v2188, 4294901760
        %v2190 = vsub.f32 %v2188, %v2189
        %v2191 = vand.u32 %v2190, 4294901760
        %2192 = vmatmul.mubr.f32.gmra.mxu0 %v2191
        %v2193 = vpop.f32.mrf.mxu0
        %v2194 = vadd.f32 0.0, %v2193
        %v2195 = vpop.f32.mrf.mxu0
        %2196 = vmatprep.mubr.f32.mxu0 0.0
        %v2197 = vand.u32 %v2067, 4294901760
        %v2198 = vsub.f32 %v2067, %v2197
        %v2199 = vand.u32 %v2198, 4294901760
        %v2200 = vsub.f32 %v2198, %v2199
        %v2201 = vand.u32 %v2200, 4294901760
        %2202 = vmatmul.mubr.f32.gmra.mxu0 %v2201
        %v2203 = vpop.f32.mrf.mxu0
        %v2204 = vadd.f32 0.0, %v2203
        %v2205 = vpop.f32.mrf.mxu0
        %2206 = vmatprep.mubr.f32.mxu0 0.0
        %v2207 = vand.u32 %v2070, 4294901760
        %v2208 = vsub.f32 %v2070, %v2207
        %v2209 = vand.u32 %v2208, 4294901760
        %v2210 = vsub.f32 %v2208, %v2209
        %v2211 = vand.u32 %v2210, 4294901760
        %2212 = vmatmul.mubr.f32.gmra.mxu0 %v2211
        %v2213 = vpop.f32.mrf.mxu0
        %v2214 = vadd.f32 0.0, %v2213
        %v2215 = vpop.f32.mrf.mxu0
        %2216 = vmatprep.mubr.f32.mxu0 0.0
        %v2217 = vand.u32 %v2073, 4294901760
        %v2218 = vsub.f32 %v2073, %v2217
        %v2219 = vand.u32 %v2218, 4294901760
        %v2220 = vsub.f32 %v2218, %v2219
        %v2221 = vand.u32 %v2220, 4294901760
        %2222 = vmatmul.mubr.f32.gmra.mxu0 %v2221
        %v2223 = vpop.f32.mrf.mxu0
        %v2224 = vadd.f32 0.0, %v2223
        %v2225 = vpop.f32.mrf.mxu0
        %2226 = vmatprep.mubr.f32.mxu0 0.0
        %v2227 = vand.u32 %v2076, 4294901760
        %v2228 = vsub.f32 %v2076, %v2227
        %v2229 = vand.u32 %v2228, 4294901760
        %v2230 = vsub.f32 %v2228, %v2229
        %v2231 = vand.u32 %v2230, 4294901760
        %2232 = vmatmul.mubr.f32.gmra.mxu0 %v2231
        %v2233 = vpop.f32.mrf.mxu0
        %v2234 = vadd.f32 0.0, %v2233
        %v2235 = vpop.f32.mrf.mxu0
        %2236 = vmatprep.mubr.f32.mxu0 0.0
        %v2237 = vand.u32 %v2079, 4294901760
        %v2238 = vsub.f32 %v2079, %v2237
        %v2239 = vand.u32 %v2238, 4294901760
        %v2240 = vsub.f32 %v2238, %v2239
        %v2241 = vand.u32 %v2240, 4294901760
        %2242 = vmatmul.mubr.f32.gmra.mxu0 %v2241
        %v2243 = vpop.f32.mrf.mxu0
        %v2244 = vadd.f32 0.0, %v2243
        %v2245 = vpop.f32.mrf.mxu0
        %2246 = vmatprep.mubr.f32.mxu0 0.0
        %v2247 = vand.u32 %v2082, 4294901760
        %v2248 = vsub.f32 %v2082, %v2247
        %v2249 = vand.u32 %v2248, 4294901760
        %v2250 = vsub.f32 %v2248, %v2249
        %v2251 = vand.u32 %v2250, 4294901760
        %2252 = vmatmul.mubr.f32.gmra.mxu0 %v2251
        %v2253 = vpop.f32.mrf.mxu0
        %v2254 = vadd.f32 0.0, %v2253
        %v2255 = vpop.f32.mrf.mxu0
        %2256 = vmatprep.mubr.f32.mxu0 0.0
        %v2257 = vand.u32 %v2085, 4294901760
        %v2258 = vsub.f32 %v2085, %v2257
        %v2259 = vand.u32 %v2258, 4294901760
        %v2260 = vsub.f32 %v2258, %v2259
        %v2261 = vand.u32 %v2260, 4294901760
        %2262 = vmatmul.mubr.f32.gmra.mxu0 %v2261
        %v2263 = vpop.f32.mrf.mxu0
        %v2264 = vadd.f32 0.0, %v2263
        %v2265 = vpop.f32.mrf.mxu0
        %2266 = vmatprep.mubr.f32.mxu0 0.0
        %v2267 = vand.u32 %v2088, 4294901760
        %v2268 = vsub.f32 %v2088, %v2267
        %v2269 = vand.u32 %v2268, 4294901760
        %v2270 = vsub.f32 %v2268, %v2269
        %v2271 = vand.u32 %v2270, 4294901760
        %2272 = vmatmul.mubr.f32.gmra.mxu0 %v2271
        %v2273 = vpop.f32.mrf.mxu0
        %v2274 = vadd.f32 0.0, %v2273
        %v2275 = vpop.f32.mrf.mxu0
        %2276 = vmatprep.mubr.f32.mxu0 0.0
        %v2277 = vand.u32 %v2091, 4294901760
        %v2278 = vsub.f32 %v2091, %v2277
        %v2279 = vand.u32 %v2278, 4294901760
        %v2280 = vsub.f32 %v2278, %v2279
        %v2281 = vand.u32 %v2280, 4294901760
        %2282 = vmatmul.mubr.f32.gmra.mxu0 %v2281
        %v2283 = vpop.f32.mrf.mxu0
        %v2284 = vadd.f32 0.0, %v2283
        %v2285 = vpop.f32.mrf.mxu0
        %2286 = vmatprep.mubr.f32.mxu0 0.0
        %v2287 = vand.u32 %v2094, 4294901760
        %v2288 = vsub.f32 %v2094, %v2287
        %v2289 = vand.u32 %v2288, 4294901760
        %v2290 = vsub.f32 %v2288, %v2289
        %v2291 = vand.u32 %v2290, 4294901760
        %2292 = vmatmul.mubr.f32.gmra.mxu0 %v2291
        %v2293 = vpop.f32.mrf.mxu0
        %v2294 = vadd.f32 0.0, %v2293
        %v2295 = vpop.f32.mrf.mxu0
        %2296 = vmatprep.mubr.f32.mxu0 0.0
        %v2297 = vand.u32 %v2097, 4294901760
        %v2298 = vsub.f32 %v2097, %v2297
        %v2299 = vand.u32 %v2298, 4294901760
        %v2300 = vsub.f32 %v2298, %v2299
        %v2301 = vand.u32 %v2300, 4294901760
        %2302 = vmatmul.mubr.f32.gmra.mxu0 %v2301
        %v2303 = vpop.f32.mrf.mxu0
        %v2304 = vadd.f32 0.0, %v2303
        %v2305 = vpop.f32.mrf.mxu0
        %2306 = vmatprep.mubr.f32.mxu0 0.0
        %v2307 = vand.u32 %v2100, 4294901760
        %v2308 = vsub.f32 %v2100, %v2307
        %v2309 = vand.u32 %v2308, 4294901760
        %v2310 = vsub.f32 %v2308, %v2309
        %v2311 = vand.u32 %v2310, 4294901760
        %2312 = vmatmul.mubr.f32.gmra.mxu0 %v2311
        %v2313 = vpop.f32.mrf.mxu0
        %v2314 = vadd.f32 0.0, %v2313
        %v2315 = vpop.f32.mrf.mxu0
        %2316 = vmatprep.mubr.f32.mxu0 0.0
        %v2317 = vand.u32 %v2103, 4294901760
        %v2318 = vsub.f32 %v2103, %v2317
        %v2319 = vand.u32 %v2318, 4294901760
        %v2320 = vsub.f32 %v2318, %v2319
        %v2321 = vand.u32 %v2320, 4294901760
        %2322 = vmatmul.mubr.f32.gmra.mxu0 %v2321
        %v2323 = vpop.f32.mrf.mxu0
        %v2324 = vadd.f32 0.0, %v2323
        %v2325 = vpop.f32.mrf.mxu0
        %2326 = vmatprep.mubr.f32.mxu0 0.0
        %v2327 = vand.u32 %v2106, 4294901760
        %v2328 = vsub.f32 %v2106, %v2327
        %v2329 = vand.u32 %v2328, 4294901760
        %v2330 = vsub.f32 %v2328, %v2329
        %v2331 = vand.u32 %v2330, 4294901760
        %2332 = vmatmul.mubr.f32.gmra.mxu0 %v2331
        %v2333 = vpop.f32.mrf.mxu0
        %v2334 = vadd.f32 0.0, %v2333
        %v2335 = vpop.f32.mrf.mxu0
        %2336 = vdwg.mxu0
        %2337 = vmatprep.subr.mxu0 0.0
        %2338 = vmatpush1.msra.mxu0 0.0
        %2339 = vmatprep.subr.mxu0 0.0
        %2340 = vmatpush1.msra.mxu0 0.0
        %2341 = vmatprep.subr.mxu0 0.0
        %2342 = vmatpush1.msra.mxu0 0.0
        %2343 = vmatprep.subr.mxu0 0.0
        %2344 = vmatpush1.msra.mxu0 0.0
        %2345 = vmatprep.subr.mxu0 0.0
        %2346 = vmatpush1.msra.mxu0 0.0
        %2347 = vmatprep.subr.mxu0 0.0
        %2348 = vmatpush1.msra.mxu0 0.0
        %2349 = vmatprep.subr.mxu0 0.0
        %2350 = vmatpush1.msra.mxu0 0.0
        %2351 = vmatprep.subr.mxu0 0.0
        %2352 = vmatpush1.msra.mxu0 0.0
        %2353 = vmatprep.subr.mxu0 0.0
        %2354 = vmatpush1.msra.mxu0 0.0
        %2355 = vmatprep.subr.mxu0 0.0
        %2356 = vmatpush1.msra.mxu0 0.0
        %2357 = vmatprep.subr.mxu0 0.0
        %2358 = vmatpush1.msra.mxu0 0.0
        %2359 = vmatprep.subr.mxu0 0.0
        %2360 = vmatpush1.msra.mxu0 0.0
        %2361 = vmatprep.subr.mxu0 0.0
        %2362 = vmatpush1.msra.mxu0 0.0
        %2363 = vmatprep.subr.mxu0 0.0
        %2364 = vmatpush1.msra.mxu0 0.0
        %2365 = vmatprep.subr.mxu0 0.0
        %2366 = vmatpush1.msra.mxu0 0.0
        %2367 = vmatprep.subr.mxu0 0.0
        %v2368 = vand.u32 %v2109, 4294901760
        %v2369 = vsub.f32 %v2109, %v2368
        %v2370 = vand.u32 %v2369, 4294901760
        %v2371 = vsub.f32 %v2369, %v2370
        %v2372 = vand.u32 %v2371, 4294901760
        %2373 = vmatpush1.msra.mxu0 %v2372
        %2374 = vmatprep.subr.mxu0 0.0
        %2375 = vmatpush2.msra.mxu0 0.0
        %2376 = vmatprep.subr.mxu0 0.0
        %2377 = vmatpush2.msra.mxu0 0.0
        %2378 = vmatprep.subr.mxu0 0.0
        %2379 = vmatpush2.msra.mxu0 0.0
        %2380 = vmatprep.subr.mxu0 0.0
        %2381 = vmatpush2.msra.mxu0 0.0
        %2382 = vmatprep.subr.mxu0 0.0
        %2383 = vmatpush2.msra.mxu0 0.0
        %2384 = vmatprep.subr.mxu0 0.0
        %2385 = vmatpush2.msra.mxu0 0.0
        %2386 = vmatprep.subr.mxu0 0.0
        %2387 = vmatpush2.msra.mxu0 0.0
        %2388 = vmatprep.subr.mxu0 0.0
        %2389 = vmatpush2.msra.mxu0 0.0
        %2390 = vmatprep.subr.mxu0 0.0
        %2391 = vmatpush2.msra.mxu0 0.0
        %2392 = vmatprep.subr.mxu0 0.0
        %2393 = vmatpush2.msra.mxu0 0.0
        %2394 = vmatprep.subr.mxu0 0.0
        %2395 = vmatpush2.msra.mxu0 0.0
        %2396 = vmatprep.subr.mxu0 0.0
        %2397 = vmatpush2.msra.mxu0 0.0
        %2398 = vmatprep.subr.mxu0 0.0
        %2399 = vmatpush2.msra.mxu0 0.0
        %2400 = vmatprep.subr.mxu0 0.0
        %2401 = vmatpush2.msra.mxu0 0.0
        %2402 = vmatprep.subr.mxu0 0.0
        %2403 = vmatpush2.msra.mxu0 0.0
        %2404 = vmatprep.subr.mxu0 0.0
        %2405 = vmatpush2.msra.mxu0 0.0
        %2406 = vmatprep.mubr.f32.mxu0 0.0
        %v2407 = vand.u32 %v2061, 4294901760
        %2408 = vmatmul.mubr.f32.gmra.mxu0 %v2407
        %v2409 = vpop.f32.mrf.mxu0
        %v2410 = vadd.f32 %v2184, %v2409
        %v2411 = vpop.f32.mrf.mxu0
        %2412 = vmatprep.mubr.f32.mxu0 0.0
        %v2413 = vand.u32 %v2064, 4294901760
        %2414 = vmatmul.mubr.f32.gmra.mxu0 %v2413
        %v2415 = vpop.f32.mrf.mxu0
        %v2416 = vadd.f32 %v2194, %v2415
        %v2417 = vpop.f32.mrf.mxu0
        %2418 = vmatprep.mubr.f32.mxu0 0.0
        %v2419 = vand.u32 %v2067, 4294901760
        %2420 = vmatmul.mubr.f32.gmra.mxu0 %v2419
        %v2421 = vpop.f32.mrf.mxu0
        %v2422 = vadd.f32 %v2204, %v2421
        %v2423 = vpop.f32.mrf.mxu0
        %2424 = vmatprep.mubr.f32.mxu0 0.0
        %v2425 = vand.u32 %v2070, 4294901760
        %2426 = vmatmul.mubr.f32.gmra.mxu0 %v2425
        %v2427 = vpop.f32.mrf.mxu0
        %v2428 = vadd.f32 %v2214, %v2427
        %v2429 = vpop.f32.mrf.mxu0
        %2430 = vmatprep.mubr.f32.mxu0 0.0
        %v2431 = vand.u32 %v2073, 4294901760
        %2432 = vmatmul.mubr.f32.gmra.mxu0 %v2431
        %v2433 = vpop.f32.mrf.mxu0
        %v2434 = vadd.f32 %v2224, %v2433
        %v2435 = vpop.f32.mrf.mxu0
        %2436 = vmatprep.mubr.f32.mxu0 0.0
        %v2437 = vand.u32 %v2076, 4294901760
        %2438 = vmatmul.mubr.f32.gmra.mxu0 %v2437
        %v2439 = vpop.f32.mrf.mxu0
        %v2440 = vadd.f32 %v2234, %v2439
        %v2441 = vpop.f32.mrf.mxu0
        %2442 = vmatprep.mubr.f32.mxu0 0.0
        %v2443 = vand.u32 %v2079, 4294901760
        %2444 = vmatmul.mubr.f32.gmra.mxu0 %v2443
        %v2445 = vpop.f32.mrf.mxu0
        %v2446 = vadd.f32 %v2244, %v2445
        %v2447 = vpop.f32.mrf.mxu0
        %2448 = vmatprep.mubr.f32.mxu0 0.0
        %v2449 = vand.u32 %v2082, 4294901760
        %2450 = vmatmul.mubr.f32.gmra.mxu0 %v2449
        %v2451 = vpop.f32.mrf.mxu0
        %v2452 = vadd.f32 %v2254, %v2451
        %v2453 = vpop.f32.mrf.mxu0
        %2454 = vmatprep.mubr.f32.mxu0 0.0
        %v2455 = vand.u32 %v2085, 4294901760
        %2456 = vmatmul.mubr.f32.gmra.mxu0 %v2455
        %v2457 = vpop.f32.mrf.mxu0
        %v2458 = vadd.f32 %v2264, %v2457
        %v2459 = vpop.f32.mrf.mxu0
        %2460 = vmatprep.mubr.f32.mxu0 0.0
        %v2461 = vand.u32 %v2088, 4294901760
        %2462 = vmatmul.mubr.f32.gmra.mxu0 %v2461
        %v2463 = vpop.f32.mrf.mxu0
        %v2464 = vadd.f32 %v2274, %v2463
        %v2465 = vpop.f32.mrf.mxu0
        %2466 = vmatprep.mubr.f32.mxu0 0.0
        %v2467 = vand.u32 %v2091, 4294901760
        %2468 = vmatmul.mubr.f32.gmra.mxu0 %v2467
        %v2469 = vpop.f32.mrf.mxu0
        %v2470 = vadd.f32 %v2284, %v2469
        %v2471 = vpop.f32.mrf.mxu0
        %2472 = vmatprep.mubr.f32.mxu0 0.0
        %v2473 = vand.u32 %v2094, 4294901760
        %2474 = vmatmul.mubr.f32.gmra.mxu0 %v2473
        %v2475 = vpop.f32.mrf.mxu0
        %v2476 = vadd.f32 %v2294, %v2475
        %v2477 = vpop.f32.mrf.mxu0
        %2478 = vmatprep.mubr.f32.mxu0 0.0
        %v2479 = vand.u32 %v2097, 4294901760
        %2480 = vmatmul.mubr.f32.gmra.mxu0 %v2479
        %v2481 = vpop.f32.mrf.mxu0
        %v2482 = vadd.f32 %v2304, %v2481
        %v2483 = vpop.f32.mrf.mxu0
        %2484 = vmatprep.mubr.f32.mxu0 0.0
        %v2485 = vand.u32 %v2100, 4294901760
        %2486 = vmatmul.mubr.f32.gmra.mxu0 %v2485
        %v2487 = vpop.f32.mrf.mxu0
        %v2488 = vadd.f32 %v2314, %v2487
        %v2489 = vpop.f32.mrf.mxu0
        %2490 = vmatprep.mubr.f32.mxu0 0.0
        %v2491 = vand.u32 %v2103, 4294901760
        %2492 = vmatmul.mubr.f32.gmra.mxu0 %v2491
        %v2493 = vpop.f32.mrf.mxu0
        %v2494 = vadd.f32 %v2324, %v2493
        %v2495 = vpop.f32.mrf.mxu0
        %2496 = vmatprep.mubr.f32.mxu0 0.0
        %v2497 = vand.u32 %v2106, 4294901760
        %2498 = vmatmul.mubr.f32.gmra.mxu0 %v2497
        %v2499 = vpop.f32.mrf.mxu0
        %v2500 = vadd.f32 %v2334, %v2499
        %v2501 = vpop.f32.mrf.mxu0
        %2502 = vdwg.mxu0
        %2503 = vmatprep.subr.mxu0 0.0
        %2504 = vmatpush1.msra.mxu0 0.0
        %2505 = vmatprep.subr.mxu0 0.0
        %2506 = vmatpush1.msra.mxu0 0.0
        %2507 = vmatprep.subr.mxu0 0.0
        %2508 = vmatpush1.msra.mxu0 0.0
        %2509 = vmatprep.subr.mxu0 0.0
        %2510 = vmatpush1.msra.mxu0 0.0
        %2511 = vmatprep.subr.mxu0 0.0
        %2512 = vmatpush1.msra.mxu0 0.0
        %2513 = vmatprep.subr.mxu0 0.0
        %2514 = vmatpush1.msra.mxu0 0.0
        %2515 = vmatprep.subr.mxu0 0.0
        %2516 = vmatpush1.msra.mxu0 0.0
        %2517 = vmatprep.subr.mxu0 0.0
        %2518 = vmatpush1.msra.mxu0 0.0
        %2519 = vmatprep.subr.mxu0 0.0
        %2520 = vmatpush1.msra.mxu0 0.0
        %2521 = vmatprep.subr.mxu0 0.0
        %2522 = vmatpush1.msra.mxu0 0.0
        %2523 = vmatprep.subr.mxu0 0.0
        %2524 = vmatpush1.msra.mxu0 0.0
        %2525 = vmatprep.subr.mxu0 0.0
        %2526 = vmatpush1.msra.mxu0 0.0
        %2527 = vmatprep.subr.mxu0 0.0
        %2528 = vmatpush1.msra.mxu0 0.0
        %2529 = vmatprep.subr.mxu0 0.0
        %2530 = vmatpush1.msra.mxu0 0.0
        %2531 = vmatprep.subr.mxu0 0.0
        %2532 = vmatpush1.msra.mxu0 0.0
        %2533 = vmatprep.subr.mxu0 0.0
        %v2534 = vand.u32 %v2109, 4294901760
        %v2535 = vsub.f32 %v2109, %v2534
        %2536 = vmatpush1.msra.mxu0 %v2535
        %2537 = vmatprep.subr.mxu0 0.0
        %2538 = vmatpush2.msra.mxu0 0.0
        %2539 = vmatprep.subr.mxu0 0.0
        %2540 = vmatpush2.msra.mxu0 0.0
        %2541 = vmatprep.subr.mxu0 0.0
        %2542 = vmatpush2.msra.mxu0 0.0
        %2543 = vmatprep.subr.mxu0 0.0
        %2544 = vmatpush2.msra.mxu0 0.0
        %2545 = vmatprep.subr.mxu0 0.0
        %2546 = vmatpush2.msra.mxu0 0.0
        %2547 = vmatprep.subr.mxu0 0.0
        %2548 = vmatpush2.msra.mxu0 0.0
        %2549 = vmatprep.subr.mxu0 0.0
        %2550 = vmatpush2.msra.mxu0 0.0
        %2551 = vmatprep.subr.mxu0 0.0
        %2552 = vmatpush2.msra.mxu0 0.0
        %2553 = vmatprep.subr.mxu0 0.0
        %2554 = vmatpush2.msra.mxu0 0.0
        %2555 = vmatprep.subr.mxu0 0.0
        %2556 = vmatpush2.msra.mxu0 0.0
        %2557 = vmatprep.subr.mxu0 0.0
        %2558 = vmatpush2.msra.mxu0 0.0
        %2559 = vmatprep.subr.mxu0 0.0
        %2560 = vmatpush2.msra.mxu0 0.0
        %2561 = vmatprep.subr.mxu0 0.0
        %2562 = vmatpush2.msra.mxu0 0.0
        %2563 = vmatprep.subr.mxu0 0.0
        %2564 = vmatpush2.msra.mxu0 0.0
        %2565 = vmatprep.subr.mxu0 0.0
        %2566 = vmatpush2.msra.mxu0 0.0
        %2567 = vmatprep.subr.mxu0 0.0
        %2568 = vmatpush2.msra.mxu0 0.0
        %2569 = vmatprep.mubr.f32.mxu0 0.0
        %v2570 = vand.u32 %v2061, 4294901760
        %v2571 = vsub.f32 %v2061, %v2570
        %2572 = vmatmul.mubr.f32.gmra.mxu0 %v2571
        %v2573 = vpop.f32.mrf.mxu0
        %v2574 = vadd.f32 %v2410, %v2573
        %v2575 = vpop.f32.mrf.mxu0
        %2576 = vmatprep.mubr.f32.mxu0 0.0
        %v2577 = vand.u32 %v2064, 4294901760
        %v2578 = vsub.f32 %v2064, %v2577
        %2579 = vmatmul.mubr.f32.gmra.mxu0 %v2578
        %v2580 = vpop.f32.mrf.mxu0
        %v2581 = vadd.f32 %v2416, %v2580
        %v2582 = vpop.f32.mrf.mxu0
        %2583 = vmatprep.mubr.f32.mxu0 0.0
        %v2584 = vand.u32 %v2067, 4294901760
        %v2585 = vsub.f32 %v2067, %v2584
        %2586 = vmatmul.mubr.f32.gmra.mxu0 %v2585
        %v2587 = vpop.f32.mrf.mxu0
        %v2588 = vadd.f32 %v2422, %v2587
        %v2589 = vpop.f32.mrf.mxu0
        %2590 = vmatprep.mubr.f32.mxu0 0.0
        %v2591 = vand.u32 %v2070, 4294901760
        %v2592 = vsub.f32 %v2070, %v2591
        %2593 = vmatmul.mubr.f32.gmra.mxu0 %v2592
        %v2594 = vpop.f32.mrf.mxu0
        %v2595 = vadd.f32 %v2428, %v2594
        %v2596 = vpop.f32.mrf.mxu0
        %2597 = vmatprep.mubr.f32.mxu0 0.0
        %v2598 = vand.u32 %v2073, 4294901760
        %v2599 = vsub.f32 %v2073, %v2598
        %2600 = vmatmul.mubr.f32.gmra.mxu0 %v2599
        %v2601 = vpop.f32.mrf.mxu0
        %v2602 = vadd.f32 %v2434, %v2601
        %v2603 = vpop.f32.mrf.mxu0
        %2604 = vmatprep.mubr.f32.mxu0 0.0
        %v2605 = vand.u32 %v2076, 4294901760
        %v2606 = vsub.f32 %v2076, %v2605
        %2607 = vmatmul.mubr.f32.gmra.mxu0 %v2606
        %v2608 = vpop.f32.mrf.mxu0
        %v2609 = vadd.f32 %v2440, %v2608
        %v2610 = vpop.f32.mrf.mxu0
        %2611 = vmatprep.mubr.f32.mxu0 0.0
        %v2612 = vand.u32 %v2079, 4294901760
        %v2613 = vsub.f32 %v2079, %v2612
        %2614 = vmatmul.mubr.f32.gmra.mxu0 %v2613
        %v2615 = vpop.f32.mrf.mxu0
        %v2616 = vadd.f32 %v2446, %v2615
        %v2617 = vpop.f32.mrf.mxu0
        %2618 = vmatprep.mubr.f32.mxu0 0.0
        %v2619 = vand.u32 %v2082, 4294901760
        %v2620 = vsub.f32 %v2082, %v2619
        %2621 = vmatmul.mubr.f32.gmra.mxu0 %v2620
        %v2622 = vpop.f32.mrf.mxu0
        %v2623 = vadd.f32 %v2452, %v2622
        %v2624 = vpop.f32.mrf.mxu0
        %2625 = vmatprep.mubr.f32.mxu0 0.0
        %v2626 = vand.u32 %v2085, 4294901760
        %v2627 = vsub.f32 %v2085, %v2626
        %2628 = vmatmul.mubr.f32.gmra.mxu0 %v2627
        %v2629 = vpop.f32.mrf.mxu0
        %v2630 = vadd.f32 %v2458, %v2629
        %v2631 = vpop.f32.mrf.mxu0
        %2632 = vmatprep.mubr.f32.mxu0 0.0
        %v2633 = vand.u32 %v2088, 4294901760
        %v2634 = vsub.f32 %v2088, %v2633
        %2635 = vmatmul.mubr.f32.gmra.mxu0 %v2634
        %v2636 = vpop.f32.mrf.mxu0
        %v2637 = vadd.f32 %v2464, %v2636
        %v2638 = vpop.f32.mrf.mxu0
        %2639 = vmatprep.mubr.f32.mxu0 0.0
        %v2640 = vand.u32 %v2091, 4294901760
        %v2641 = vsub.f32 %v2091, %v2640
        %2642 = vmatmul.mubr.f32.gmra.mxu0 %v2641
        %v2643 = vpop.f32.mrf.mxu0
        %v2644 = vadd.f32 %v2470, %v2643
        %v2645 = vpop.f32.mrf.mxu0
        %2646 = vmatprep.mubr.f32.mxu0 0.0
        %v2647 = vand.u32 %v2094, 4294901760
        %v2648 = vsub.f32 %v2094, %v2647
        %2649 = vmatmul.mubr.f32.gmra.mxu0 %v2648
        %v2650 = vpop.f32.mrf.mxu0
        %v2651 = vadd.f32 %v2476, %v2650
        %v2652 = vpop.f32.mrf.mxu0
        %2653 = vmatprep.mubr.f32.mxu0 0.0
        %v2654 = vand.u32 %v2097, 4294901760
        %v2655 = vsub.f32 %v2097, %v2654
        %2656 = vmatmul.mubr.f32.gmra.mxu0 %v2655
        %v2657 = vpop.f32.mrf.mxu0
        %v2658 = vadd.f32 %v2482, %v2657
        %v2659 = vpop.f32.mrf.mxu0
        %2660 = vmatprep.mubr.f32.mxu0 0.0
        %v2661 = vand.u32 %v2100, 4294901760
        %v2662 = vsub.f32 %v2100, %v2661
        %2663 = vmatmul.mubr.f32.gmra.mxu0 %v2662
        %v2664 = vpop.f32.mrf.mxu0
        %v2665 = vadd.f32 %v2488, %v2664
        %v2666 = vpop.f32.mrf.mxu0
        %2667 = vmatprep.mubr.f32.mxu0 0.0
        %v2668 = vand.u32 %v2103, 4294901760
        %v2669 = vsub.f32 %v2103, %v2668
        %2670 = vmatmul.mubr.f32.gmra.mxu0 %v2669
        %v2671 = vpop.f32.mrf.mxu0
        %v2672 = vadd.f32 %v2494, %v2671
        %v2673 = vpop.f32.mrf.mxu0
        %2674 = vmatprep.mubr.f32.mxu0 0.0
        %v2675 = vand.u32 %v2106, 4294901760
        %v2676 = vsub.f32 %v2106, %v2675
        %2677 = vmatmul.mubr.f32.gmra.mxu0 %v2676
        %v2678 = vpop.f32.mrf.mxu0
        %v2679 = vadd.f32 %v2500, %v2678
        %v2680 = vpop.f32.mrf.mxu0
        %2681 = vdwg.mxu0
        %2682 = vmatprep.subr.mxu0 0.0
        %2683 = vmatpush1.msra.mxu0 0.0
        %2684 = vmatprep.subr.mxu0 0.0
        %2685 = vmatpush1.msra.mxu0 0.0
        %2686 = vmatprep.subr.mxu0 0.0
        %2687 = vmatpush1.msra.mxu0 0.0
        %2688 = vmatprep.subr.mxu0 0.0
        %2689 = vmatpush1.msra.mxu0 0.0
        %2690 = vmatprep.subr.mxu0 0.0
        %2691 = vmatpush1.msra.mxu0 0.0
        %2692 = vmatprep.subr.mxu0 0.0
        %2693 = vmatpush1.msra.mxu0 0.0
        %2694 = vmatprep.subr.mxu0 0.0
        %2695 = vmatpush1.msra.mxu0 0.0
        %2696 = vmatprep.subr.mxu0 0.0
        %2697 = vmatpush1.msra.mxu0 0.0
        %2698 = vmatprep.subr.mxu0 0.0
        %2699 = vmatpush1.msra.mxu0 0.0
        %2700 = vmatprep.subr.mxu0 0.0
        %2701 = vmatpush1.msra.mxu0 0.0
        %2702 = vmatprep.subr.mxu0 0.0
        %2703 = vmatpush1.msra.mxu0 0.0
        %2704 = vmatprep.subr.mxu0 0.0
        %2705 = vmatpush1.msra.mxu0 0.0
        %2706 = vmatprep.subr.mxu0 0.0
        %2707 = vmatpush1.msra.mxu0 0.0
        %2708 = vmatprep.subr.mxu0 0.0
        %2709 = vmatpush1.msra.mxu0 0.0
        %2710 = vmatprep.subr.mxu0 0.0
        %2711 = vmatpush1.msra.mxu0 0.0
        %2712 = vmatprep.subr.mxu0 0.0
        %v2713 = vand.u32 %v2109, 4294901760
        %2714 = vmatpush1.msra.mxu0 %v2713
        %2715 = vmatprep.subr.mxu0 0.0
        %2716 = vmatpush2.msra.mxu0 0.0
        %2717 = vmatprep.subr.mxu0 0.0
        %2718 = vmatpush2.msra.mxu0 0.0
        %2719 = vmatprep.subr.mxu0 0.0
        %2720 = vmatpush2.msra.mxu0 0.0
        %2721 = vmatprep.subr.mxu0 0.0
        %2722 = vmatpush2.msra.mxu0 0.0
        %2723 = vmatprep.subr.mxu0 0.0
        %2724 = vmatpush2.msra.mxu0 0.0
        %2725 = vmatprep.subr.mxu0 0.0
        %2726 = vmatpush2.msra.mxu0 0.0
        %2727 = vmatprep.subr.mxu0 0.0
        %2728 = vmatpush2.msra.mxu0 0.0
        %2729 = vmatprep.subr.mxu0 0.0
        %2730 = vmatpush2.msra.mxu0 0.0
        %2731 = vmatprep.subr.mxu0 0.0
        %2732 = vmatpush2.msra.mxu0 0.0
        %2733 = vmatprep.subr.mxu0 0.0
        %2734 = vmatpush2.msra.mxu0 0.0
        %2735 = vmatprep.subr.mxu0 0.0
        %2736 = vmatpush2.msra.mxu0 0.0
        %2737 = vmatprep.subr.mxu0 0.0
        %2738 = vmatpush2.msra.mxu0 0.0
        %2739 = vmatprep.subr.mxu0 0.0
        %2740 = vmatpush2.msra.mxu0 0.0
        %2741 = vmatprep.subr.mxu0 0.0
        %2742 = vmatpush2.msra.mxu0 0.0
        %2743 = vmatprep.subr.mxu0 0.0
        %2744 = vmatpush2.msra.mxu0 0.0
        %2745 = vmatprep.subr.mxu0 0.0
        %2746 = vmatpush2.msra.mxu0 0.0
        %2747 = vmatprep.mubr.f32.mxu0 0.0
        %v2748 = vand.u32 %v2061, 4294901760
        %v2749 = vsub.f32 %v2061, %v2748
        %v2750 = vand.u32 %v2749, 4294901760
        %2751 = vmatmul.mubr.f32.gmra.mxu0 %v2750
        %v2752 = vpop.f32.mrf.mxu0
        %v2753 = vadd.f32 %v2574, %v2752
        %v2754 = vpop.f32.mrf.mxu0
        %2755 = vmatprep.mubr.f32.mxu0 0.0
        %v2756 = vand.u32 %v2064, 4294901760
        %v2757 = vsub.f32 %v2064, %v2756
        %v2758 = vand.u32 %v2757, 4294901760
        %2759 = vmatmul.mubr.f32.gmra.mxu0 %v2758
        %v2760 = vpop.f32.mrf.mxu0
        %v2761 = vadd.f32 %v2581, %v2760
        %v2762 = vpop.f32.mrf.mxu0
        %2763 = vmatprep.mubr.f32.mxu0 0.0
        %v2764 = vand.u32 %v2067, 4294901760
        %v2765 = vsub.f32 %v2067, %v2764
        %v2766 = vand.u32 %v2765, 4294901760
        %2767 = vmatmul.mubr.f32.gmra.mxu0 %v2766
        %v2768 = vpop.f32.mrf.mxu0
        %v2769 = vadd.f32 %v2588, %v2768
        %v2770 = vpop.f32.mrf.mxu0
        %2771 = vmatprep.mubr.f32.mxu0 0.0
        %v2772 = vand.u32 %v2070, 4294901760
        %v2773 = vsub.f32 %v2070, %v2772
        %v2774 = vand.u32 %v2773, 4294901760
        %2775 = vmatmul.mubr.f32.gmra.mxu0 %v2774
        %v2776 = vpop.f32.mrf.mxu0
        %v2777 = vadd.f32 %v2595, %v2776
        %v2778 = vpop.f32.mrf.mxu0
        %2779 = vmatprep.mubr.f32.mxu0 0.0
        %v2780 = vand.u32 %v2073, 4294901760
        %v2781 = vsub.f32 %v2073, %v2780
        %v2782 = vand.u32 %v2781, 4294901760
        %2783 = vmatmul.mubr.f32.gmra.mxu0 %v2782
        %v2784 = vpop.f32.mrf.mxu0
        %v2785 = vadd.f32 %v2602, %v2784
        %v2786 = vpop.f32.mrf.mxu0
        %2787 = vmatprep.mubr.f32.mxu0 0.0
        %v2788 = vand.u32 %v2076, 4294901760
        %v2789 = vsub.f32 %v2076, %v2788
        %v2790 = vand.u32 %v2789, 4294901760
        %2791 = vmatmul.mubr.f32.gmra.mxu0 %v2790
        %v2792 = vpop.f32.mrf.mxu0
        %v2793 = vadd.f32 %v2609, %v2792
        %v2794 = vpop.f32.mrf.mxu0
        %2795 = vmatprep.mubr.f32.mxu0 0.0
        %v2796 = vand.u32 %v2079, 4294901760
        %v2797 = vsub.f32 %v2079, %v2796
        %v2798 = vand.u32 %v2797, 4294901760
        %2799 = vmatmul.mubr.f32.gmra.mxu0 %v2798
        %v2800 = vpop.f32.mrf.mxu0
        %v2801 = vadd.f32 %v2616, %v2800
        %v2802 = vpop.f32.mrf.mxu0
        %2803 = vmatprep.mubr.f32.mxu0 0.0
        %v2804 = vand.u32 %v2082, 4294901760
        %v2805 = vsub.f32 %v2082, %v2804
        %v2806 = vand.u32 %v2805, 4294901760
        %2807 = vmatmul.mubr.f32.gmra.mxu0 %v2806
        %v2808 = vpop.f32.mrf.mxu0
        %v2809 = vadd.f32 %v2623, %v2808
        %v2810 = vpop.f32.mrf.mxu0
        %2811 = vmatprep.mubr.f32.mxu0 0.0
        %v2812 = vand.u32 %v2085, 4294901760
        %v2813 = vsub.f32 %v2085, %v2812
        %v2814 = vand.u32 %v2813, 4294901760
        %2815 = vmatmul.mubr.f32.gmra.mxu0 %v2814
        %v2816 = vpop.f32.mrf.mxu0
        %v2817 = vadd.f32 %v2630, %v2816
        %v2818 = vpop.f32.mrf.mxu0
        %2819 = vmatprep.mubr.f32.mxu0 0.0
        %v2820 = vand.u32 %v2088, 4294901760
        %v2821 = vsub.f32 %v2088, %v2820
        %v2822 = vand.u32 %v2821, 4294901760
        %2823 = vmatmul.mubr.f32.gmra.mxu0 %v2822
        %v2824 = vpop.f32.mrf.mxu0
        %v2825 = vadd.f32 %v2637, %v2824
        %v2826 = vpop.f32.mrf.mxu0
        %2827 = vmatprep.mubr.f32.mxu0 0.0
        %v2828 = vand.u32 %v2091, 4294901760
        %v2829 = vsub.f32 %v2091, %v2828
        %v2830 = vand.u32 %v2829, 4294901760
        %2831 = vmatmul.mubr.f32.gmra.mxu0 %v2830
        %v2832 = vpop.f32.mrf.mxu0
        %v2833 = vadd.f32 %v2644, %v2832
        %v2834 = vpop.f32.mrf.mxu0
        %2835 = vmatprep.mubr.f32.mxu0 0.0
        %v2836 = vand.u32 %v2094, 4294901760
        %v2837 = vsub.f32 %v2094, %v2836
        %v2838 = vand.u32 %v2837, 4294901760
        %2839 = vmatmul.mubr.f32.gmra.mxu0 %v2838
        %v2840 = vpop.f32.mrf.mxu0
        %v2841 = vadd.f32 %v2651, %v2840
        %v2842 = vpop.f32.mrf.mxu0
        %2843 = vmatprep.mubr.f32.mxu0 0.0
        %v2844 = vand.u32 %v2097, 4294901760
        %v2845 = vsub.f32 %v2097, %v2844
        %v2846 = vand.u32 %v2845, 4294901760
        %2847 = vmatmul.mubr.f32.gmra.mxu0 %v2846
        %v2848 = vpop.f32.mrf.mxu0
        %v2849 = vadd.f32 %v2658, %v2848
        %v2850 = vpop.f32.mrf.mxu0
        %2851 = vmatprep.mubr.f32.mxu0 0.0
        %v2852 = vand.u32 %v2100, 4294901760
        %v2853 = vsub.f32 %v2100, %v2852
        %v2854 = vand.u32 %v2853, 4294901760
        %2855 = vmatmul.mubr.f32.gmra.mxu0 %v2854
        %v2856 = vpop.f32.mrf.mxu0
        %v2857 = vadd.f32 %v2665, %v2856
        %v2858 = vpop.f32.mrf.mxu0
        %2859 = vmatprep.mubr.f32.mxu0 0.0
        %v2860 = vand.u32 %v2103, 4294901760
        %v2861 = vsub.f32 %v2103, %v2860
        %v2862 = vand.u32 %v2861, 4294901760
        %2863 = vmatmul.mubr.f32.gmra.mxu0 %v2862
        %v2864 = vpop.f32.mrf.mxu0
        %v2865 = vadd.f32 %v2672, %v2864
        %v2866 = vpop.f32.mrf.mxu0
        %2867 = vmatprep.mubr.f32.mxu0 0.0
        %v2868 = vand.u32 %v2106, 4294901760
        %v2869 = vsub.f32 %v2106, %v2868
        %v2870 = vand.u32 %v2869, 4294901760
        %2871 = vmatmul.mubr.f32.gmra.mxu0 %v2870
        %v2872 = vpop.f32.mrf.mxu0
        %v2873 = vadd.f32 %v2679, %v2872
        %v2874 = vpop.f32.mrf.mxu0
        %2875 = vdwg.mxu0
        %2876 = vmatprep.subr.mxu0 0.0
        %2877 = vmatpush1.msra.mxu0 0.0
        %2878 = vmatprep.subr.mxu0 0.0
        %2879 = vmatpush1.msra.mxu0 0.0
        %2880 = vmatprep.subr.mxu0 0.0
        %2881 = vmatpush1.msra.mxu0 0.0
        %2882 = vmatprep.subr.mxu0 0.0
        %2883 = vmatpush1.msra.mxu0 0.0
        %2884 = vmatprep.subr.mxu0 0.0
        %2885 = vmatpush1.msra.mxu0 0.0
        %2886 = vmatprep.subr.mxu0 0.0
        %2887 = vmatpush1.msra.mxu0 0.0
        %2888 = vmatprep.subr.mxu0 0.0
        %2889 = vmatpush1.msra.mxu0 0.0
        %2890 = vmatprep.subr.mxu0 0.0
        %2891 = vmatpush1.msra.mxu0 0.0
        %2892 = vmatprep.subr.mxu0 0.0
        %2893 = vmatpush1.msra.mxu0 0.0
        %2894 = vmatprep.subr.mxu0 0.0
        %2895 = vmatpush1.msra.mxu0 0.0
        %2896 = vmatprep.subr.mxu0 0.0
        %2897 = vmatpush1.msra.mxu0 0.0
        %2898 = vmatprep.subr.mxu0 0.0
        %2899 = vmatpush1.msra.mxu0 0.0
        %2900 = vmatprep.subr.mxu0 0.0
        %2901 = vmatpush1.msra.mxu0 0.0
        %2902 = vmatprep.subr.mxu0 0.0
        %2903 = vmatpush1.msra.mxu0 0.0
        %2904 = vmatprep.subr.mxu0 0.0
        %2905 = vmatpush1.msra.mxu0 0.0
        %2906 = vmatprep.subr.mxu0 0.0
        %v2907 = vand.u32 %v2109, 4294901760
        %v2908 = vsub.f32 %v2109, %v2907
        %v2909 = vand.u32 %v2908, 4294901760
        %2910 = vmatpush1.msra.mxu0 %v2909
        %2911 = vmatprep.subr.mxu0 0.0
        %2912 = vmatpush2.msra.mxu0 0.0
        %2913 = vmatprep.subr.mxu0 0.0
        %2914 = vmatpush2.msra.mxu0 0.0
        %2915 = vmatprep.subr.mxu0 0.0
        %2916 = vmatpush2.msra.mxu0 0.0
        %2917 = vmatprep.subr.mxu0 0.0
        %2918 = vmatpush2.msra.mxu0 0.0
        %2919 = vmatprep.subr.mxu0 0.0
        %2920 = vmatpush2.msra.mxu0 0.0
        %2921 = vmatprep.subr.mxu0 0.0
        %2922 = vmatpush2.msra.mxu0 0.0
        %2923 = vmatprep.subr.mxu0 0.0
        %2924 = vmatpush2.msra.mxu0 0.0
        %2925 = vmatprep.subr.mxu0 0.0
        %2926 = vmatpush2.msra.mxu0 0.0
        %2927 = vmatprep.subr.mxu0 0.0
        %2928 = vmatpush2.msra.mxu0 0.0
        %2929 = vmatprep.subr.mxu0 0.0
        %2930 = vmatpush2.msra.mxu0 0.0
        %2931 = vmatprep.subr.mxu0 0.0
        %2932 = vmatpush2.msra.mxu0 0.0
        %2933 = vmatprep.subr.mxu0 0.0
        %2934 = vmatpush2.msra.mxu0 0.0
        %2935 = vmatprep.subr.mxu0 0.0
        %2936 = vmatpush2.msra.mxu0 0.0
        %2937 = vmatprep.subr.mxu0 0.0
        %2938 = vmatpush2.msra.mxu0 0.0
        %2939 = vmatprep.subr.mxu0 0.0
        %2940 = vmatpush2.msra.mxu0 0.0
        %2941 = vmatprep.subr.mxu0 0.0
        %2942 = vmatpush2.msra.mxu0 0.0
        %2943 = vmatprep.mubr.f32.mxu0 0.0
        %v2944 = vand.u32 %v2061, 4294901760
        %2945 = vmatmul.mubr.f32.gmra.mxu0 %v2944
        %v2946 = vpop.f32.mrf.mxu0
        %v2947 = vadd.f32 %v2753, %v2946
        %v2948 = vpop.f32.mrf.mxu0
        %2949 = vmatprep.mubr.f32.mxu0 0.0
        %v2950 = vand.u32 %v2064, 4294901760
        %2951 = vmatmul.mubr.f32.gmra.mxu0 %v2950
        %v2952 = vpop.f32.mrf.mxu0
        %v2953 = vadd.f32 %v2761, %v2952
        %v2954 = vpop.f32.mrf.mxu0
        %2955 = vmatprep.mubr.f32.mxu0 0.0
        %v2956 = vand.u32 %v2067, 4294901760
        %2957 = vmatmul.mubr.f32.gmra.mxu0 %v2956
        %v2958 = vpop.f32.mrf.mxu0
        %v2959 = vadd.f32 %v2769, %v2958
        %v2960 = vpop.f32.mrf.mxu0
        %2961 = vmatprep.mubr.f32.mxu0 0.0
        %v2962 = vand.u32 %v2070, 4294901760
        %2963 = vmatmul.mubr.f32.gmra.mxu0 %v2962
        %v2964 = vpop.f32.mrf.mxu0
        %v2965 = vadd.f32 %v2777, %v2964
        %v2966 = vpop.f32.mrf.mxu0
        %2967 = vmatprep.mubr.f32.mxu0 0.0
        %v2968 = vand.u32 %v2073, 4294901760
        %2969 = vmatmul.mubr.f32.gmra.mxu0 %v2968
        %v2970 = vpop.f32.mrf.mxu0
        %v2971 = vadd.f32 %v2785, %v2970
        %v2972 = vpop.f32.mrf.mxu0
        %2973 = vmatprep.mubr.f32.mxu0 0.0
        %v2974 = vand.u32 %v2076, 4294901760
        %2975 = vmatmul.mubr.f32.gmra.mxu0 %v2974
        %v2976 = vpop.f32.mrf.mxu0
        %v2977 = vadd.f32 %v2793, %v2976
        %v2978 = vpop.f32.mrf.mxu0
        %2979 = vmatprep.mubr.f32.mxu0 0.0
        %v2980 = vand.u32 %v2079, 4294901760
        %2981 = vmatmul.mubr.f32.gmra.mxu0 %v2980
        %v2982 = vpop.f32.mrf.mxu0
        %v2983 = vadd.f32 %v2801, %v2982
        %v2984 = vpop.f32.mrf.mxu0
        %2985 = vmatprep.mubr.f32.mxu0 0.0
        %v2986 = vand.u32 %v2082, 4294901760
        %2987 = vmatmul.mubr.f32.gmra.mxu0 %v2986
        %v2988 = vpop.f32.mrf.mxu0
        %v2989 = vadd.f32 %v2809, %v2988
        %v2990 = vpop.f32.mrf.mxu0
        %2991 = vmatprep.mubr.f32.mxu0 0.0
        %v2992 = vand.u32 %v2085, 4294901760
        %2993 = vmatmul.mubr.f32.gmra.mxu0 %v2992
        %v2994 = vpop.f32.mrf.mxu0
        %v2995 = vadd.f32 %v2817, %v2994
        %v2996 = vpop.f32.mrf.mxu0
        %2997 = vmatprep.mubr.f32.mxu0 0.0
        %v2998 = vand.u32 %v2088, 4294901760
        %2999 = vmatmul.mubr.f32.gmra.mxu0 %v2998
        %v3000 = vpop.f32.mrf.mxu0
        %v3001 = vadd.f32 %v2825, %v3000
        %v3002 = vpop.f32.mrf.mxu0
        %3003 = vmatprep.mubr.f32.mxu0 0.0
        %v3004 = vand.u32 %v2091, 4294901760
        %3005 = vmatmul.mubr.f32.gmra.mxu0 %v3004
        %v3006 = vpop.f32.mrf.mxu0
        %v3007 = vadd.f32 %v2833, %v3006
        %v3008 = vpop.f32.mrf.mxu0
        %3009 = vmatprep.mubr.f32.mxu0 0.0
        %v3010 = vand.u32 %v2094, 4294901760
        %3011 = vmatmul.mubr.f32.gmra.mxu0 %v3010
        %v3012 = vpop.f32.mrf.mxu0
        %v3013 = vadd.f32 %v2841, %v3012
        %v3014 = vpop.f32.mrf.mxu0
        %3015 = vmatprep.mubr.f32.mxu0 0.0
        %v3016 = vand.u32 %v2097, 4294901760
        %3017 = vmatmul.mubr.f32.gmra.mxu0 %v3016
        %v3018 = vpop.f32.mrf.mxu0
        %v3019 = vadd.f32 %v2849, %v3018
        %v3020 = vpop.f32.mrf.mxu0
        %3021 = vmatprep.mubr.f32.mxu0 0.0
        %v3022 = vand.u32 %v2100, 4294901760
        %3023 = vmatmul.mubr.f32.gmra.mxu0 %v3022
        %v3024 = vpop.f32.mrf.mxu0
        %v3025 = vadd.f32 %v2857, %v3024
        %v3026 = vpop.f32.mrf.mxu0
        %3027 = vmatprep.mubr.f32.mxu0 0.0
        %v3028 = vand.u32 %v2103, 4294901760
        %3029 = vmatmul.mubr.f32.gmra.mxu0 %v3028
        %v3030 = vpop.f32.mrf.mxu0
        %v3031 = vadd.f32 %v2865, %v3030
        %v3032 = vpop.f32.mrf.mxu0
        %3033 = vmatprep.mubr.f32.mxu0 0.0
        %v3034 = vand.u32 %v2106, 4294901760
        %3035 = vmatmul.mubr.f32.gmra.mxu0 %v3034
        %v3036 = vpop.f32.mrf.mxu0
        %v3037 = vadd.f32 %v2873, %v3036
        %v3038 = vpop.f32.mrf.mxu0
        %3039 = vdwg.mxu0
        %3040 = vmatprep.subr.mxu0 0.0
        %3041 = vmatpush1.msra.mxu0 0.0
        %3042 = vmatprep.subr.mxu0 0.0
        %3043 = vmatpush1.msra.mxu0 0.0
        %3044 = vmatprep.subr.mxu0 0.0
        %3045 = vmatpush1.msra.mxu0 0.0
        %3046 = vmatprep.subr.mxu0 0.0
        %3047 = vmatpush1.msra.mxu0 0.0
        %3048 = vmatprep.subr.mxu0 0.0
        %3049 = vmatpush1.msra.mxu0 0.0
        %3050 = vmatprep.subr.mxu0 0.0
        %3051 = vmatpush1.msra.mxu0 0.0
        %3052 = vmatprep.subr.mxu0 0.0
        %3053 = vmatpush1.msra.mxu0 0.0
        %3054 = vmatprep.subr.mxu0 0.0
        %3055 = vmatpush1.msra.mxu0 0.0
        %3056 = vmatprep.subr.mxu0 0.0
        %3057 = vmatpush1.msra.mxu0 0.0
        %3058 = vmatprep.subr.mxu0 0.0
        %3059 = vmatpush1.msra.mxu0 0.0
        %3060 = vmatprep.subr.mxu0 0.0
        %3061 = vmatpush1.msra.mxu0 0.0
        %3062 = vmatprep.subr.mxu0 0.0
        %3063 = vmatpush1.msra.mxu0 0.0
        %3064 = vmatprep.subr.mxu0 0.0
        %3065 = vmatpush1.msra.mxu0 0.0
        %3066 = vmatprep.subr.mxu0 0.0
        %3067 = vmatpush1.msra.mxu0 0.0
        %3068 = vmatprep.subr.mxu0 0.0
        %3069 = vmatpush1.msra.mxu0 0.0
        %3070 = vmatprep.subr.mxu0 0.0
        %v3071 = vand.u32 %v2109, 4294901760
        %3072 = vmatpush1.msra.mxu0 %v3071
        %3073 = vmatprep.subr.mxu0 0.0
        %3074 = vmatpush2.msra.mxu0 0.0
        %3075 = vmatprep.subr.mxu0 0.0
        %3076 = vmatpush2.msra.mxu0 0.0
        %3077 = vmatprep.subr.mxu0 0.0
        %3078 = vmatpush2.msra.mxu0 0.0
        %3079 = vmatprep.subr.mxu0 0.0
        %3080 = vmatpush2.msra.mxu0 0.0
        %3081 = vmatprep.subr.mxu0 0.0
        %3082 = vmatpush2.msra.mxu0 0.0
        %3083 = vmatprep.subr.mxu0 0.0
        %3084 = vmatpush2.msra.mxu0 0.0
        %3085 = vmatprep.subr.mxu0 0.0
        %3086 = vmatpush2.msra.mxu0 0.0
        %3087 = vmatprep.subr.mxu0 0.0
        %3088 = vmatpush2.msra.mxu0 0.0
        %3089 = vmatprep.subr.mxu0 0.0
        %3090 = vmatpush2.msra.mxu0 0.0
        %3091 = vmatprep.subr.mxu0 0.0
        %3092 = vmatpush2.msra.mxu0 0.0
        %3093 = vmatprep.subr.mxu0 0.0
        %3094 = vmatpush2.msra.mxu0 0.0
        %3095 = vmatprep.subr.mxu0 0.0
        %3096 = vmatpush2.msra.mxu0 0.0
        %3097 = vmatprep.subr.mxu0 0.0
        %3098 = vmatpush2.msra.mxu0 0.0
        %3099 = vmatprep.subr.mxu0 0.0
        %3100 = vmatpush2.msra.mxu0 0.0
        %3101 = vmatprep.subr.mxu0 0.0
        %3102 = vmatpush2.msra.mxu0 0.0
        %3103 = vmatprep.subr.mxu0 0.0
        %3104 = vmatpush2.msra.mxu0 0.0
        %3105 = vmatprep.mubr.f32.mxu0 0.0
        %v3106 = vand.u32 %v2061, 4294901760
        %3107 = vmatmul.mubr.f32.gmra.mxu0 %v3106
        %v3108 = vpop.f32.mrf.mxu0
        %v3109 = vadd.f32 %v2947, %v3108
        %v3110 = vpop.f32.mrf.mxu0
        %3111 = vmatprep.mubr.f32.mxu0 0.0
        %v3112 = vand.u32 %v2064, 4294901760
        %3113 = vmatmul.mubr.f32.gmra.mxu0 %v3112
        %v3114 = vpop.f32.mrf.mxu0
        %v3115 = vadd.f32 %v2953, %v3114
        %v3116 = vpop.f32.mrf.mxu0
        %3117 = vmatprep.mubr.f32.mxu0 0.0
        %v3118 = vand.u32 %v2067, 4294901760
        %3119 = vmatmul.mubr.f32.gmra.mxu0 %v3118
        %v3120 = vpop.f32.mrf.mxu0
        %v3121 = vadd.f32 %v2959, %v3120
        %v3122 = vpop.f32.mrf.mxu0
        %3123 = vmatprep.mubr.f32.mxu0 0.0
        %v3124 = vand.u32 %v2070, 4294901760
        %3125 = vmatmul.mubr.f32.gmra.mxu0 %v3124
        %v3126 = vpop.f32.mrf.mxu0
        %v3127 = vadd.f32 %v2965, %v3126
        %v3128 = vpop.f32.mrf.mxu0
        %3129 = vmatprep.mubr.f32.mxu0 0.0
        %v3130 = vand.u32 %v2073, 4294901760
        %3131 = vmatmul.mubr.f32.gmra.mxu0 %v3130
        %v3132 = vpop.f32.mrf.mxu0
        %v3133 = vadd.f32 %v2971, %v3132
        %v3134 = vpop.f32.mrf.mxu0
        %3135 = vmatprep.mubr.f32.mxu0 0.0
        %v3136 = vand.u32 %v2076, 4294901760
        %3137 = vmatmul.mubr.f32.gmra.mxu0 %v3136
        %v3138 = vpop.f32.mrf.mxu0
        %v3139 = vadd.f32 %v2977, %v3138
        %v3140 = vpop.f32.mrf.mxu0
        %3141 = vmatprep.mubr.f32.mxu0 0.0
        %v3142 = vand.u32 %v2079, 4294901760
        %3143 = vmatmul.mubr.f32.gmra.mxu0 %v3142
        %v3144 = vpop.f32.mrf.mxu0
        %v3145 = vadd.f32 %v2983, %v3144
        %v3146 = vpop.f32.mrf.mxu0
        %3147 = vmatprep.mubr.f32.mxu0 0.0
        %v3148 = vand.u32 %v2082, 4294901760
        %3149 = vmatmul.mubr.f32.gmra.mxu0 %v3148
        %v3150 = vpop.f32.mrf.mxu0
        %v3151 = vadd.f32 %v2989, %v3150
        %v3152 = vpop.f32.mrf.mxu0
        %3153 = vmatprep.mubr.f32.mxu0 0.0
        %v3154 = vand.u32 %v2085, 4294901760
        %3155 = vmatmul.mubr.f32.gmra.mxu0 %v3154
        %v3156 = vpop.f32.mrf.mxu0
        %v3157 = vadd.f32 %v2995, %v3156
        %v3158 = vpop.f32.mrf.mxu0
        %3159 = vmatprep.mubr.f32.mxu0 0.0
        %v3160 = vand.u32 %v2088, 4294901760
        %3161 = vmatmul.mubr.f32.gmra.mxu0 %v3160
        %v3162 = vpop.f32.mrf.mxu0
        %v3163 = vadd.f32 %v3001, %v3162
        %v3164 = vpop.f32.mrf.mxu0
        %3165 = vmatprep.mubr.f32.mxu0 0.0
        %v3166 = vand.u32 %v2091, 4294901760
        %3167 = vmatmul.mubr.f32.gmra.mxu0 %v3166
        %v3168 = vpop.f32.mrf.mxu0
        %v3169 = vadd.f32 %v3007, %v3168
        %v3170 = vpop.f32.mrf.mxu0
        %3171 = vmatprep.mubr.f32.mxu0 0.0
        %v3172 = vand.u32 %v2094, 4294901760
        %3173 = vmatmul.mubr.f32.gmra.mxu0 %v3172
        %v3174 = vpop.f32.mrf.mxu0
        %v3175 = vadd.f32 %v3013, %v3174
        %v3176 = vpop.f32.mrf.mxu0
        %3177 = vmatprep.mubr.f32.mxu0 0.0
        %v3178 = vand.u32 %v2097, 4294901760
        %3179 = vmatmul.mubr.f32.gmra.mxu0 %v3178
        %v3180 = vpop.f32.mrf.mxu0
        %v3181 = vadd.f32 %v3019, %v3180
        %v3182 = vpop.f32.mrf.mxu0
        %3183 = vmatprep.mubr.f32.mxu0 0.0
        %v3184 = vand.u32 %v2100, 4294901760
        %3185 = vmatmul.mubr.f32.gmra.mxu0 %v3184
        %v3186 = vpop.f32.mrf.mxu0
        %v3187 = vadd.f32 %v3025, %v3186
        %v3188 = vpop.f32.mrf.mxu0
        %3189 = vmatprep.mubr.f32.mxu0 0.0
        %v3190 = vand.u32 %v2103, 4294901760
        %3191 = vmatmul.mubr.f32.gmra.mxu0 %v3190
        %v3192 = vpop.f32.mrf.mxu0
        %v3193 = vadd.f32 %v3031, %v3192
        %v3194 = vpop.f32.mrf.mxu0
        %3195 = vmatprep.mubr.f32.mxu0 0.0
        %v3196 = vand.u32 %v2106, 4294901760
        %3197 = vmatmul.mubr.f32.gmra.mxu0 %v3196
        %v3198 = vpop.f32.mrf.mxu0
        %v3199 = vadd.f32 %v3037, %v3198
        %v3200 = vpop.f32.mrf.mxu0
        %3201 = vdwg.mxu0
        %3203 = vset.pattern.permute.xlu0 0
        %3204 = vperm.xlu0 %3203, %v830
        %v3205 = vpop.permute.xlu0 %3204
        %3208 = vset.pattern.permute.xlu0 0
        %3209 = vperm.xlu0 %3208, %v831
        %v3210 = vpop.permute.xlu0 %3209
        %3213 = vset.pattern.permute.xlu0 0
        %3214 = vperm.xlu0 %3213, %v832
        %v3215 = vpop.permute.xlu0 %3214
        %3218 = vset.pattern.permute.xlu0 0
        %3219 = vperm.xlu0 %3218, %v833
        %v3220 = vpop.permute.xlu0 %3219
        %3223 = vset.pattern.permute.xlu0 0
        %3224 = vperm.xlu0 %3223, %v834
        %v3225 = vpop.permute.xlu0 %3224
        %3228 = vset.pattern.permute.xlu0 0
        %3229 = vperm.xlu0 %3228, %v835
        %v3230 = vpop.permute.xlu0 %3229
        %3233 = vset.pattern.permute.xlu0 0
        %3234 = vperm.xlu0 %3233, %v836
        %v3235 = vpop.permute.xlu0 %3234
        %3238 = vset.pattern.permute.xlu0 0
        %3239 = vperm.xlu0 %3238, %v837
        %v3240 = vpop.permute.xlu0 %3239
        %3243 = vset.pattern.permute.xlu0 0
        %3244 = vperm.xlu0 %3243, %v838
        %v3245 = vpop.permute.xlu0 %3244
        %3248 = vset.pattern.permute.xlu0 0
        %3249 = vperm.xlu0 %3248, %v839
        %v3250 = vpop.permute.xlu0 %3249
        %3253 = vset.pattern.permute.xlu0 0
        %3254 = vperm.xlu0 %3253, %v840
        %v3255 = vpop.permute.xlu0 %3254
        %3258 = vset.pattern.permute.xlu0 0
        %3259 = vperm.xlu0 %3258, %v841
        %v3260 = vpop.permute.xlu0 %3259
        %3263 = vset.pattern.permute.xlu0 0
        %3264 = vperm.xlu0 %3263, %v842
        %v3265 = vpop.permute.xlu0 %3264
        %3268 = vset.pattern.permute.xlu0 0
        %3269 = vperm.xlu0 %3268, %v843
        %v3270 = vpop.permute.xlu0 %3269
        %3273 = vset.pattern.permute.xlu0 0
        %3274 = vperm.xlu0 %3273, %v844
        %v3275 = vpop.permute.xlu0 %3274
        %3278 = vset.pattern.permute.xlu0 0
        %3279 = vperm.xlu0 %3278, %v845
        %v3280 = vpop.permute.xlu0 %3279
        %v3282 = vlaneseq
        %v3283 = vshrl.u32 %v3282, 7
        %v3284 = vsub.s32 0, %v3283
        %v3285 = vrot.slane %v912, %v3284
        %v3286 = vadd.f32 %v3205, %v3285
        %v3287 = vadd.f32 %v3210, %v3285
        %v3288 = vadd.f32 %v3215, %v3285
        %v3289 = vadd.f32 %v3220, %v3285
        %v3290 = vadd.f32 %v3225, %v3285
        %v3291 = vadd.f32 %v3230, %v3285
        %v3292 = vadd.f32 %v3235, %v3285
        %v3293 = vadd.f32 %v3240, %v3285
        %v3294 = vadd.f32 %v3245, %v3285
        %v3295 = vadd.f32 %v3250, %v3285
        %v3296 = vadd.f32 %v3255, %v3285
        %v3297 = vadd.f32 %v3260, %v3285
        %v3298 = vadd.f32 %v3265, %v3285
        %v3299 = vadd.f32 %v3270, %v3285
        %v3300 = vadd.f32 %v3275, %v3285
        %v3301 = vadd.f32 %v3280, %v3285
        %v3302 = vmul.f32 %v1967, 2.0
        %v3303 = vmul.f32 %v1973, 2.0
        %v3304 = vmul.f32 %v1979, 2.0
        %v3305 = vmul.f32 %v1985, 2.0
        %v3306 = vmul.f32 %v1991, 2.0
        %v3307 = vmul.f32 %v1997, 2.0
        %v3308 = vmul.f32 %v2003, 2.0
        %v3309 = vmul.f32 %v2009, 2.0
        %v3310 = vmul.f32 %v2015, 2.0
        %v3311 = vmul.f32 %v2021, 2.0
        %v3312 = vmul.f32 %v2027, 2.0
        %v3313 = vmul.f32 %v2033, 2.0
        %v3314 = vmul.f32 %v2039, 2.0
        %v3315 = vmul.f32 %v2045, 2.0
        %v3316 = vmul.f32 %v2051, 2.0
        %v3317 = vmul.f32 %v2057, 2.0
        %v3318 = vsub.f32 %v3286, %v3302
        %v3319 = vsub.f32 %v3287, %v3303
        %v3320 = vsub.f32 %v3288, %v3304
        %v3321 = vsub.f32 %v3289, %v3305
        %v3322 = vsub.f32 %v3290, %v3306
        %v3323 = vsub.f32 %v3291, %v3307
        %v3324 = vsub.f32 %v3292, %v3308
        %v3325 = vsub.f32 %v3293, %v3309
        %v3326 = vsub.f32 %v3294, %v3310
        %v3327 = vsub.f32 %v3295, %v3311
        %v3328 = vsub.f32 %v3296, %v3312
        %v3329 = vsub.f32 %v3297, %v3313
        %v3330 = vsub.f32 %v3298, %v3314
        %v3331 = vsub.f32 %v3299, %v3315
        %v3332 = vsub.f32 %v3300, %v3316
        %v3333 = vsub.f32 %v3301, %v3317
        %v3334 = vmax.f32 %v3318, 0.0
        %v3335 = vmax.f32 %v3319, 0.0
        %v3336 = vmax.f32 %v3320, 0.0
        %v3337 = vmax.f32 %v3321, 0.0
        %v3338 = vmax.f32 %v3322, 0.0
        %v3339 = vmax.f32 %v3323, 0.0
        %v3340 = vmax.f32 %v3324, 0.0
        %v3341 = vmax.f32 %v3325, 0.0
        %v3342 = vmax.f32 %v3326, 0.0
        %v3343 = vmax.f32 %v3327, 0.0
        %v3344 = vmax.f32 %v3328, 0.0
        %v3345 = vmax.f32 %v3329, 0.0
        %v3346 = vmax.f32 %v3330, 0.0
        %v3347 = vmax.f32 %v3331, 0.0
        %v3348 = vmax.f32 %v3332, 0.0
        %v3349 = vmax.f32 %v3333, 0.0
        %v3350 = vrsqrt.pop %v3334
        %v3351 = vmul.f32 %v3334, %v3350
        %vm3352 = vcmp.eq.f32.partialorder %v3334, inf
        %v3353 = vsel %vm3352, %v3334, %v3351
        %vm3354 = vcmp.eq.f32.partialorder %v3334, 0.0
        %v3355 = vand.u32 %v3334, 2147483648
        %v3356 = vsel %vm3354, %v3355, %v3353
        %v3357 = vrsqrt.pop %v3335
        %v3358 = vmul.f32 %v3335, %v3357
        %vm3359 = vcmp.eq.f32.partialorder %v3335, inf
        %v3360 = vsel %vm3359, %v3335, %v3358
        %vm3361 = vcmp.eq.f32.partialorder %v3335, 0.0
        %v3362 = vand.u32 %v3335, 2147483648
        %v3363 = vsel %vm3361, %v3362, %v3360
        %v3364 = vrsqrt.pop %v3336
        %v3365 = vmul.f32 %v3336, %v3364
        %vm3366 = vcmp.eq.f32.partialorder %v3336, inf
        %v3367 = vsel %vm3366, %v3336, %v3365
        %vm3368 = vcmp.eq.f32.partialorder %v3336, 0.0
        %v3369 = vand.u32 %v3336, 2147483648
        %v3370 = vsel %vm3368, %v3369, %v3367
        %v3371 = vrsqrt.pop %v3337
        %v3372 = vmul.f32 %v3337, %v3371
        %vm3373 = vcmp.eq.f32.partialorder %v3337, inf
        %v3374 = vsel %vm3373, %v3337, %v3372
        %vm3375 = vcmp.eq.f32.partialorder %v3337, 0.0
        %v3376 = vand.u32 %v3337, 2147483648
        %v3377 = vsel %vm3375, %v3376, %v3374
        %v3378 = vrsqrt.pop %v3338
        %v3379 = vmul.f32 %v3338, %v3378
        %vm3380 = vcmp.eq.f32.partialorder %v3338, inf
        %v3381 = vsel %vm3380, %v3338, %v3379
        %vm3382 = vcmp.eq.f32.partialorder %v3338, 0.0
        %v3383 = vand.u32 %v3338, 2147483648
        %v3384 = vsel %vm3382, %v3383, %v3381
        %v3385 = vrsqrt.pop %v3339
        %v3386 = vmul.f32 %v3339, %v3385
        %vm3387 = vcmp.eq.f32.partialorder %v3339, inf
        %v3388 = vsel %vm3387, %v3339, %v3386
        %vm3389 = vcmp.eq.f32.partialorder %v3339, 0.0
        %v3390 = vand.u32 %v3339, 2147483648
        %v3391 = vsel %vm3389, %v3390, %v3388
        %v3392 = vrsqrt.pop %v3340
        %v3393 = vmul.f32 %v3340, %v3392
        %vm3394 = vcmp.eq.f32.partialorder %v3340, inf
        %v3395 = vsel %vm3394, %v3340, %v3393
        %vm3396 = vcmp.eq.f32.partialorder %v3340, 0.0
        %v3397 = vand.u32 %v3340, 2147483648
        %v3398 = vsel %vm3396, %v3397, %v3395
        %v3399 = vrsqrt.pop %v3341
        %v3400 = vmul.f32 %v3341, %v3399
        %vm3401 = vcmp.eq.f32.partialorder %v3341, inf
        %v3402 = vsel %vm3401, %v3341, %v3400
        %vm3403 = vcmp.eq.f32.partialorder %v3341, 0.0
        %v3404 = vand.u32 %v3341, 2147483648
        %v3405 = vsel %vm3403, %v3404, %v3402
        %v3406 = vrsqrt.pop %v3342
        %v3407 = vmul.f32 %v3342, %v3406
        %vm3408 = vcmp.eq.f32.partialorder %v3342, inf
        %v3409 = vsel %vm3408, %v3342, %v3407
        %vm3410 = vcmp.eq.f32.partialorder %v3342, 0.0
        %v3411 = vand.u32 %v3342, 2147483648
        %v3412 = vsel %vm3410, %v3411, %v3409
        %v3413 = vrsqrt.pop %v3343
        %v3414 = vmul.f32 %v3343, %v3413
        %vm3415 = vcmp.eq.f32.partialorder %v3343, inf
        %v3416 = vsel %vm3415, %v3343, %v3414
        %vm3417 = vcmp.eq.f32.partialorder %v3343, 0.0
        %v3418 = vand.u32 %v3343, 2147483648
        %v3419 = vsel %vm3417, %v3418, %v3416
        %v3420 = vrsqrt.pop %v3344
        %v3421 = vmul.f32 %v3344, %v3420
        %vm3422 = vcmp.eq.f32.partialorder %v3344, inf
        %v3423 = vsel %vm3422, %v3344, %v3421
        %vm3424 = vcmp.eq.f32.partialorder %v3344, 0.0
        %v3425 = vand.u32 %v3344, 2147483648
        %v3426 = vsel %vm3424, %v3425, %v3423
        %v3427 = vrsqrt.pop %v3345
        %v3428 = vmul.f32 %v3345, %v3427
        %vm3429 = vcmp.eq.f32.partialorder %v3345, inf
        %v3430 = vsel %vm3429, %v3345, %v3428
        %vm3431 = vcmp.eq.f32.partialorder %v3345, 0.0
        %v3432 = vand.u32 %v3345, 2147483648
        %v3433 = vsel %vm3431, %v3432, %v3430
        %v3434 = vrsqrt.pop %v3346
        %v3435 = vmul.f32 %v3346, %v3434
        %vm3436 = vcmp.eq.f32.partialorder %v3346, inf
        %v3437 = vsel %vm3436, %v3346, %v3435
        %vm3438 = vcmp.eq.f32.partialorder %v3346, 0.0
        %v3439 = vand.u32 %v3346, 2147483648
        %v3440 = vsel %vm3438, %v3439, %v3437
        %v3441 = vrsqrt.pop %v3347
        %v3442 = vmul.f32 %v3347, %v3441
        %vm3443 = vcmp.eq.f32.partialorder %v3347, inf
        %v3444 = vsel %vm3443, %v3347, %v3442
        %vm3445 = vcmp.eq.f32.partialorder %v3347, 0.0
        %v3446 = vand.u32 %v3347, 2147483648
        %v3447 = vsel %vm3445, %v3446, %v3444
        %v3448 = vrsqrt.pop %v3348
        %v3449 = vmul.f32 %v3348, %v3448
        %vm3450 = vcmp.eq.f32.partialorder %v3348, inf
        %v3451 = vsel %vm3450, %v3348, %v3449
        %vm3452 = vcmp.eq.f32.partialorder %v3348, 0.0
        %v3453 = vand.u32 %v3348, 2147483648
        %v3454 = vsel %vm3452, %v3453, %v3451
        %v3455 = vrsqrt.pop %v3349
        %v3456 = vmul.f32 %v3349, %v3455
        %vm3457 = vcmp.eq.f32.partialorder %v3349, inf
        %v3458 = vsel %vm3457, %v3349, %v3456
        %vm3459 = vcmp.eq.f32.partialorder %v3349, 0.0
        %v3460 = vand.u32 %v3349, 2147483648
        %v3461 = vsel %vm3459, %v3460, %v3458
        %3463 = vset.pattern.permute.xlu0 0
        %3464 = vperm.xlu0 %3463, %v894
        %v3465 = vpop.permute.xlu0 %3464
        %3468 = vset.pattern.permute.xlu0 0
        %3469 = vperm.xlu0 %3468, %v895
        %v3470 = vpop.permute.xlu0 %3469
        %3473 = vset.pattern.permute.xlu0 0
        %3474 = vperm.xlu0 %3473, %v896
        %v3475 = vpop.permute.xlu0 %3474
        %3478 = vset.pattern.permute.xlu0 0
        %3479 = vperm.xlu0 %3478, %v897
        %v3480 = vpop.permute.xlu0 %3479
        %3483 = vset.pattern.permute.xlu0 0
        %3484 = vperm.xlu0 %3483, %v898
        %v3485 = vpop.permute.xlu0 %3484
        %3488 = vset.pattern.permute.xlu0 0
        %3489 = vperm.xlu0 %3488, %v899
        %v3490 = vpop.permute.xlu0 %3489
        %3493 = vset.pattern.permute.xlu0 0
        %3494 = vperm.xlu0 %3493, %v900
        %v3495 = vpop.permute.xlu0 %3494
        %3498 = vset.pattern.permute.xlu0 0
        %3499 = vperm.xlu0 %3498, %v901
        %v3500 = vpop.permute.xlu0 %3499
        %3503 = vset.pattern.permute.xlu0 0
        %3504 = vperm.xlu0 %3503, %v902
        %v3505 = vpop.permute.xlu0 %3504
        %3508 = vset.pattern.permute.xlu0 0
        %3509 = vperm.xlu0 %3508, %v903
        %v3510 = vpop.permute.xlu0 %3509
        %3513 = vset.pattern.permute.xlu0 0
        %3514 = vperm.xlu0 %3513, %v904
        %v3515 = vpop.permute.xlu0 %3514
        %3518 = vset.pattern.permute.xlu0 0
        %3519 = vperm.xlu0 %3518, %v905
        %v3520 = vpop.permute.xlu0 %3519
        %3523 = vset.pattern.permute.xlu0 0
        %3524 = vperm.xlu0 %3523, %v906
        %v3525 = vpop.permute.xlu0 %3524
        %3528 = vset.pattern.permute.xlu0 0
        %3529 = vperm.xlu0 %3528, %v907
        %v3530 = vpop.permute.xlu0 %3529
        %3533 = vset.pattern.permute.xlu0 0
        %3534 = vperm.xlu0 %3533, %v908
        %v3535 = vpop.permute.xlu0 %3534
        %3538 = vset.pattern.permute.xlu0 0
        %3539 = vperm.xlu0 %3538, %v909
        %v3540 = vpop.permute.xlu0 %3539
        %v3542 = vlaneseq
        %v3543 = vshrl.u32 %v3542, 7
        %v3544 = vsub.s32 0, %v3543
        %v3545 = vrot.slane %v915, %v3544
        %v3546 = vadd.f32 %v3465, %v3545
        %v3547 = vadd.f32 %v3470, %v3545
        %v3548 = vadd.f32 %v3475, %v3545
        %v3549 = vadd.f32 %v3480, %v3545
        %v3550 = vadd.f32 %v3485, %v3545
        %v3551 = vadd.f32 %v3490, %v3545
        %v3552 = vadd.f32 %v3495, %v3545
        %v3553 = vadd.f32 %v3500, %v3545
        %v3554 = vadd.f32 %v3505, %v3545
        %v3555 = vadd.f32 %v3510, %v3545
        %v3556 = vadd.f32 %v3515, %v3545
        %v3557 = vadd.f32 %v3520, %v3545
        %v3558 = vadd.f32 %v3525, %v3545
        %v3559 = vadd.f32 %v3530, %v3545
        %v3560 = vadd.f32 %v3535, %v3545
        %v3561 = vadd.f32 %v3540, %v3545
        %v3562 = vmul.f32 %v3109, 2.0
        %v3563 = vmul.f32 %v3115, 2.0
        %v3564 = vmul.f32 %v3121, 2.0
        %v3565 = vmul.f32 %v3127, 2.0
        %v3566 = vmul.f32 %v3133, 2.0
        %v3567 = vmul.f32 %v3139, 2.0
        %v3568 = vmul.f32 %v3145, 2.0
        %v3569 = vmul.f32 %v3151, 2.0
        %v3570 = vmul.f32 %v3157, 2.0
        %v3571 = vmul.f32 %v3163, 2.0
        %v3572 = vmul.f32 %v3169, 2.0
        %v3573 = vmul.f32 %v3175, 2.0
        %v3574 = vmul.f32 %v3181, 2.0
        %v3575 = vmul.f32 %v3187, 2.0
        %v3576 = vmul.f32 %v3193, 2.0
        %v3577 = vmul.f32 %v3199, 2.0
        %v3578 = vsub.f32 %v3546, %v3562
        %v3579 = vsub.f32 %v3547, %v3563
        %v3580 = vsub.f32 %v3548, %v3564
        %v3581 = vsub.f32 %v3549, %v3565
        %v3582 = vsub.f32 %v3550, %v3566
        %v3583 = vsub.f32 %v3551, %v3567
        %v3584 = vsub.f32 %v3552, %v3568
        %v3585 = vsub.f32 %v3553, %v3569
        %v3586 = vsub.f32 %v3554, %v3570
        %v3587 = vsub.f32 %v3555, %v3571
        %v3588 = vsub.f32 %v3556, %v3572
        %v3589 = vsub.f32 %v3557, %v3573
        %v3590 = vsub.f32 %v3558, %v3574
        %v3591 = vsub.f32 %v3559, %v3575
        %v3592 = vsub.f32 %v3560, %v3576
        %v3593 = vsub.f32 %v3561, %v3577
        %v3594 = vmax.f32 %v3578, 0.0
        %v3595 = vmax.f32 %v3579, 0.0
        %v3596 = vmax.f32 %v3580, 0.0
        %v3597 = vmax.f32 %v3581, 0.0
        %v3598 = vmax.f32 %v3582, 0.0
        %v3599 = vmax.f32 %v3583, 0.0
        %v3600 = vmax.f32 %v3584, 0.0
        %v3601 = vmax.f32 %v3585, 0.0
        %v3602 = vmax.f32 %v3586, 0.0
        %v3603 = vmax.f32 %v3587, 0.0
        %v3604 = vmax.f32 %v3588, 0.0
        %v3605 = vmax.f32 %v3589, 0.0
        %v3606 = vmax.f32 %v3590, 0.0
        %v3607 = vmax.f32 %v3591, 0.0
        %v3608 = vmax.f32 %v3592, 0.0
        %v3609 = vmax.f32 %v3593, 0.0
        %v3610 = vrsqrt.pop %v3594
        %v3611 = vmul.f32 %v3594, %v3610
        %vm3612 = vcmp.eq.f32.partialorder %v3594, inf
        %v3613 = vsel %vm3612, %v3594, %v3611
        %vm3614 = vcmp.eq.f32.partialorder %v3594, 0.0
        %v3615 = vand.u32 %v3594, 2147483648
        %v3616 = vsel %vm3614, %v3615, %v3613
        %v3617 = vrsqrt.pop %v3595
        %v3618 = vmul.f32 %v3595, %v3617
        %vm3619 = vcmp.eq.f32.partialorder %v3595, inf
        %v3620 = vsel %vm3619, %v3595, %v3618
        %vm3621 = vcmp.eq.f32.partialorder %v3595, 0.0
        %v3622 = vand.u32 %v3595, 2147483648
        %v3623 = vsel %vm3621, %v3622, %v3620
        %v3624 = vrsqrt.pop %v3596
        %v3625 = vmul.f32 %v3596, %v3624
        %vm3626 = vcmp.eq.f32.partialorder %v3596, inf
        %v3627 = vsel %vm3626, %v3596, %v3625
        %vm3628 = vcmp.eq.f32.partialorder %v3596, 0.0
        %v3629 = vand.u32 %v3596, 2147483648
        %v3630 = vsel %vm3628, %v3629, %v3627
        %v3631 = vrsqrt.pop %v3597
        %v3632 = vmul.f32 %v3597, %v3631
        %vm3633 = vcmp.eq.f32.partialorder %v3597, inf
        %v3634 = vsel %vm3633, %v3597, %v3632
        %vm3635 = vcmp.eq.f32.partialorder %v3597, 0.0
        %v3636 = vand.u32 %v3597, 2147483648
        %v3637 = vsel %vm3635, %v3636, %v3634
        %v3638 = vrsqrt.pop %v3598
        %v3639 = vmul.f32 %v3598, %v3638
        %vm3640 = vcmp.eq.f32.partialorder %v3598, inf
        %v3641 = vsel %vm3640, %v3598, %v3639
        %vm3642 = vcmp.eq.f32.partialorder %v3598, 0.0
        %v3643 = vand.u32 %v3598, 2147483648
        %v3644 = vsel %vm3642, %v3643, %v3641
        %v3645 = vrsqrt.pop %v3599
        %v3646 = vmul.f32 %v3599, %v3645
        %vm3647 = vcmp.eq.f32.partialorder %v3599, inf
        %v3648 = vsel %vm3647, %v3599, %v3646
        %vm3649 = vcmp.eq.f32.partialorder %v3599, 0.0
        %v3650 = vand.u32 %v3599, 2147483648
        %v3651 = vsel %vm3649, %v3650, %v3648
        %v3652 = vrsqrt.pop %v3600
        %v3653 = vmul.f32 %v3600, %v3652
        %vm3654 = vcmp.eq.f32.partialorder %v3600, inf
        %v3655 = vsel %vm3654, %v3600, %v3653
        %vm3656 = vcmp.eq.f32.partialorder %v3600, 0.0
        %v3657 = vand.u32 %v3600, 2147483648
        %v3658 = vsel %vm3656, %v3657, %v3655
        %v3659 = vrsqrt.pop %v3601
        %v3660 = vmul.f32 %v3601, %v3659
        %vm3661 = vcmp.eq.f32.partialorder %v3601, inf
        %v3662 = vsel %vm3661, %v3601, %v3660
        %vm3663 = vcmp.eq.f32.partialorder %v3601, 0.0
        %v3664 = vand.u32 %v3601, 2147483648
        %v3665 = vsel %vm3663, %v3664, %v3662
        %v3666 = vrsqrt.pop %v3602
        %v3667 = vmul.f32 %v3602, %v3666
        %vm3668 = vcmp.eq.f32.partialorder %v3602, inf
        %v3669 = vsel %vm3668, %v3602, %v3667
        %vm3670 = vcmp.eq.f32.partialorder %v3602, 0.0
        %v3671 = vand.u32 %v3602, 2147483648
        %v3672 = vsel %vm3670, %v3671, %v3669
        %v3673 = vrsqrt.pop %v3603
        %v3674 = vmul.f32 %v3603, %v3673
        %vm3675 = vcmp.eq.f32.partialorder %v3603, inf
        %v3676 = vsel %vm3675, %v3603, %v3674
        %vm3677 = vcmp.eq.f32.partialorder %v3603, 0.0
        %v3678 = vand.u32 %v3603, 2147483648
        %v3679 = vsel %vm3677, %v3678, %v3676
        %v3680 = vrsqrt.pop %v3604
        %v3681 = vmul.f32 %v3604, %v3680
        %vm3682 = vcmp.eq.f32.partialorder %v3604, inf
        %v3683 = vsel %vm3682, %v3604, %v3681
        %vm3684 = vcmp.eq.f32.partialorder %v3604, 0.0
        %v3685 = vand.u32 %v3604, 2147483648
        %v3686 = vsel %vm3684, %v3685, %v3683
        %v3687 = vrsqrt.pop %v3605
        %v3688 = vmul.f32 %v3605, %v3687
        %vm3689 = vcmp.eq.f32.partialorder %v3605, inf
        %v3690 = vsel %vm3689, %v3605, %v3688
        %vm3691 = vcmp.eq.f32.partialorder %v3605, 0.0
        %v3692 = vand.u32 %v3605, 2147483648
        %v3693 = vsel %vm3691, %v3692, %v3690
        %v3694 = vrsqrt.pop %v3606
        %v3695 = vmul.f32 %v3606, %v3694
        %vm3696 = vcmp.eq.f32.partialorder %v3606, inf
        %v3697 = vsel %vm3696, %v3606, %v3695
        %vm3698 = vcmp.eq.f32.partialorder %v3606, 0.0
        %v3699 = vand.u32 %v3606, 2147483648
        %v3700 = vsel %vm3698, %v3699, %v3697
        %v3701 = vrsqrt.pop %v3607
        %v3702 = vmul.f32 %v3607, %v3701
        %vm3703 = vcmp.eq.f32.partialorder %v3607, inf
        %v3704 = vsel %vm3703, %v3607, %v3702
        %vm3705 = vcmp.eq.f32.partialorder %v3607, 0.0
        %v3706 = vand.u32 %v3607, 2147483648
        %v3707 = vsel %vm3705, %v3706, %v3704
        %v3708 = vrsqrt.pop %v3608
        %v3709 = vmul.f32 %v3608, %v3708
        %vm3710 = vcmp.eq.f32.partialorder %v3608, inf
        %v3711 = vsel %vm3710, %v3608, %v3709
        %vm3712 = vcmp.eq.f32.partialorder %v3608, 0.0
        %v3713 = vand.u32 %v3608, 2147483648
        %v3714 = vsel %vm3712, %v3713, %v3711
        %v3715 = vrsqrt.pop %v3609
        %v3716 = vmul.f32 %v3609, %v3715
        %vm3717 = vcmp.eq.f32.partialorder %v3609, inf
        %v3718 = vsel %vm3717, %v3609, %v3716
        %vm3719 = vcmp.eq.f32.partialorder %v3609, 0.0
        %v3720 = vand.u32 %v3609, 2147483648
        %v3721 = vsel %vm3719, %v3720, %v3718
        %v3722 = vsub.f32 %v3616, %v3356
        %v3723 = vsub.f32 %v3623, %v3363
        %v3724 = vsub.f32 %v3630, %v3370
        %v3725 = vsub.f32 %v3637, %v3377
        %v3726 = vsub.f32 %v3644, %v3384
        %v3727 = vsub.f32 %v3651, %v3391
        %v3728 = vsub.f32 %v3658, %v3398
        %v3729 = vsub.f32 %v3665, %v3405
        %v3730 = vsub.f32 %v3672, %v3412
        %v3731 = vsub.f32 %v3679, %v3419
        %v3732 = vsub.f32 %v3686, %v3426
        %v3733 = vsub.f32 %v3693, %v3433
        %v3734 = vsub.f32 %v3700, %v3440
        %v3735 = vsub.f32 %v3707, %v3447
        %v3736 = vsub.f32 %v3714, %v3454
        %v3737 = vsub.f32 %v3721, %v3461
        %v3738 = vlaneseq
        %v3739 = vshrl.u32 %v3738, 7
        %v3740 = vadd.s32 %v3739, 8
        %v3741 = vadd.s32 %v3739, 16
        %v3742 = vadd.s32 %v3739, 24
        %v3743 = vadd.s32 %v3739, 32
        %v3744 = vadd.s32 %v3739, 40
        %v3745 = vadd.s32 %v3739, 48
        %v3746 = vadd.s32 %v3739, 56
        %v3747 = vadd.s32 %v3739, 64
        %v3748 = vadd.s32 %v3739, 72
        %v3749 = vadd.s32 %v3739, 80
        %v3750 = vadd.s32 %v3739, 88
        %v3751 = vadd.s32 %v3739, 96
        %v3752 = vadd.s32 %v3739, 104
        %v3753 = vadd.s32 %v3739, 112
        %v3754 = vadd.s32 %v3739, 120
        %v3755 = vlaneseq
        %v3756 = vand.u32 %v3755, 127
        %vm3757 = vcmp.eq.s32.totalorder %v3739, %v3756
        %vm3758 = vcmp.eq.s32.totalorder %v3740, %v3756
        %vm3759 = vcmp.eq.s32.totalorder %v3741, %v3756
        %vm3760 = vcmp.eq.s32.totalorder %v3742, %v3756
        %vm3761 = vcmp.eq.s32.totalorder %v3743, %v3756
        %vm3762 = vcmp.eq.s32.totalorder %v3744, %v3756
        %vm3763 = vcmp.eq.s32.totalorder %v3745, %v3756
        %vm3764 = vcmp.eq.s32.totalorder %v3746, %v3756
        %vm3765 = vcmp.eq.s32.totalorder %v3747, %v3756
        %vm3766 = vcmp.eq.s32.totalorder %v3748, %v3756
        %vm3767 = vcmp.eq.s32.totalorder %v3749, %v3756
        %vm3768 = vcmp.eq.s32.totalorder %v3750, %v3756
        %vm3769 = vcmp.eq.s32.totalorder %v3751, %v3756
        %vm3770 = vcmp.eq.s32.totalorder %v3752, %v3756
        %vm3771 = vcmp.eq.s32.totalorder %v3753, %v3756
        %vm3772 = vcmp.eq.s32.totalorder %v3754, %v3756
        %v3773 = vsel %vm3757, 1, 0
        %v3774 = vsel %vm3758, 1, 0
        %v3775 = vsel %vm3759, 1, 0
        %v3776 = vsel %vm3760, 1, 0
        %v3777 = vsel %vm3761, 1, 0
        %v3778 = vsel %vm3762, 1, 0
        %v3779 = vsel %vm3763, 1, 0
        %v3780 = vsel %vm3764, 1, 0
        %v3781 = vsel %vm3765, 1, 0
        %v3782 = vsel %vm3766, 1, 0
        %v3783 = vsel %vm3767, 1, 0
        %v3784 = vsel %vm3768, 1, 0
        %v3785 = vsel %vm3769, 1, 0
        %v3786 = vsel %vm3770, 1, 0
        %v3787 = vsel %vm3771, 1, 0
        %v3788 = vsel %vm3772, 1, 0
        %v3789 = vcvt.s32.f32 %v3773
        %v3790 = vcvt.s32.f32 %v3774
        %v3791 = vcvt.s32.f32 %v3775
        %v3792 = vcvt.s32.f32 %v3776
        %v3793 = vcvt.s32.f32 %v3777
        %v3794 = vcvt.s32.f32 %v3778
        %v3795 = vcvt.s32.f32 %v3779
        %v3796 = vcvt.s32.f32 %v3780
        %v3797 = vcvt.s32.f32 %v3781
        %v3798 = vcvt.s32.f32 %v3782
        %v3799 = vcvt.s32.f32 %v3783
        %v3800 = vcvt.s32.f32 %v3784
        %v3801 = vcvt.s32.f32 %v3785
        %v3802 = vcvt.s32.f32 %v3786
        %v3803 = vcvt.s32.f32 %v3787
        %v3804 = vcvt.s32.f32 %v3788
        %p3805 = scmp.eq.s32.totalorder %s482, %s483
        %s3806 = scalar_select %p3805, 1, 0
        %s3807 = scvt.s32.f32 %s3806
        %v3808 = vstv %s3807
        %v3809 = vmul.f32 %v3789, %v3808
        %v3810 = vmul.f32 %v3790, %v3808
        %v3811 = vmul.f32 %v3791, %v3808
        %v3812 = vmul.f32 %v3792, %v3808
        %v3813 = vmul.f32 %v3793, %v3808
        %v3814 = vmul.f32 %v3794, %v3808
        %v3815 = vmul.f32 %v3795, %v3808
        %v3816 = vmul.f32 %v3796, %v3808
        %v3817 = vmul.f32 %v3797, %v3808
        %v3818 = vmul.f32 %v3798, %v3808
        %v3819 = vmul.f32 %v3799, %v3808
        %v3820 = vmul.f32 %v3800, %v3808
        %v3821 = vmul.f32 %v3801, %v3808
        %v3822 = vmul.f32 %v3802, %v3808
        %v3823 = vmul.f32 %v3803, %v3808
        %v3824 = vmul.f32 %v3804, %v3808
        %v3825 = vsub.f32 1.0, %v3809
        %v3826 = vsub.f32 1.0, %v3810
        %v3827 = vsub.f32 1.0, %v3811
        %v3828 = vsub.f32 1.0, %v3812
        %v3829 = vsub.f32 1.0, %v3813
        %v3830 = vsub.f32 1.0, %v3814
        %v3831 = vsub.f32 1.0, %v3815
        %v3832 = vsub.f32 1.0, %v3816
        %v3833 = vsub.f32 1.0, %v3817
        %v3834 = vsub.f32 1.0, %v3818
        %v3835 = vsub.f32 1.0, %v3819
        %v3836 = vsub.f32 1.0, %v3820
        %v3837 = vsub.f32 1.0, %v3821
        %v3838 = vsub.f32 1.0, %v3822
        %v3839 = vsub.f32 1.0, %v3823
        %v3840 = vsub.f32 1.0, %v3824
        %p3841 = scmp.gt.s32.totalorder %s483, %s482
        %s3842 = scalar_select %p3841, 2.0, 1.0
        %v3843 = vmul.f32 %v3722, %v3722
        %v3844 = vmul.f32 %v3723, %v3723
        %v3845 = vmul.f32 %v3724, %v3724
        %v3846 = vmul.f32 %v3725, %v3725
        %v3847 = vmul.f32 %v3726, %v3726
        %v3848 = vmul.f32 %v3727, %v3727
        %v3849 = vmul.f32 %v3728, %v3728
        %v3850 = vmul.f32 %v3729, %v3729
        %v3851 = vmul.f32 %v3730, %v3730
        %v3852 = vmul.f32 %v3731, %v3731
        %v3853 = vmul.f32 %v3732, %v3732
        %v3854 = vmul.f32 %v3733, %v3733
        %v3855 = vmul.f32 %v3734, %v3734
        %v3856 = vmul.f32 %v3735, %v3735
        %v3857 = vmul.f32 %v3736, %v3736
        %v3858 = vmul.f32 %v3737, %v3737
        %3860 = vset.pattern.permute.xlu0 0
        %3861 = vperm.xlu0 %3860, %v527
        %v3862 = vpop.permute.xlu0 %3861
        %3865 = vset.pattern.permute.xlu0 0
        %3866 = vperm.xlu0 %3865, %v528
        %v3867 = vpop.permute.xlu0 %3866
        %3870 = vset.pattern.permute.xlu0 0
        %3871 = vperm.xlu0 %3870, %v529
        %v3872 = vpop.permute.xlu0 %3871
        %3875 = vset.pattern.permute.xlu0 0
        %3876 = vperm.xlu0 %3875, %v530
        %v3877 = vpop.permute.xlu0 %3876
        %3880 = vset.pattern.permute.xlu0 0
        %3881 = vperm.xlu0 %3880, %v531
        %v3882 = vpop.permute.xlu0 %3881
        %3885 = vset.pattern.permute.xlu0 0
        %3886 = vperm.xlu0 %3885, %v532
        %v3887 = vpop.permute.xlu0 %3886
        %3890 = vset.pattern.permute.xlu0 0
        %3891 = vperm.xlu0 %3890, %v533
        %v3892 = vpop.permute.xlu0 %3891
        %3895 = vset.pattern.permute.xlu0 0
        %3896 = vperm.xlu0 %3895, %v534
        %v3897 = vpop.permute.xlu0 %3896
        %3900 = vset.pattern.permute.xlu0 0
        %3901 = vperm.xlu0 %3900, %v535
        %v3902 = vpop.permute.xlu0 %3901
        %3905 = vset.pattern.permute.xlu0 0
        %3906 = vperm.xlu0 %3905, %v536
        %v3907 = vpop.permute.xlu0 %3906
        %3910 = vset.pattern.permute.xlu0 0
        %3911 = vperm.xlu0 %3910, %v537
        %v3912 = vpop.permute.xlu0 %3911
        %3915 = vset.pattern.permute.xlu0 0
        %3916 = vperm.xlu0 %3915, %v538
        %v3917 = vpop.permute.xlu0 %3916
        %3920 = vset.pattern.permute.xlu0 0
        %3921 = vperm.xlu0 %3920, %v539
        %v3922 = vpop.permute.xlu0 %3921
        %3925 = vset.pattern.permute.xlu0 0
        %3926 = vperm.xlu0 %3925, %v540
        %v3927 = vpop.permute.xlu0 %3926
        %3930 = vset.pattern.permute.xlu0 0
        %3931 = vperm.xlu0 %3930, %v541
        %v3932 = vpop.permute.xlu0 %3931
        %3935 = vset.pattern.permute.xlu0 0
        %3936 = vperm.xlu0 %3935, %v542
        %v3937 = vpop.permute.xlu0 %3936
        %v3939 = vmul.f32 %v3825, %v3862
        %v3940 = vmul.f32 %v3826, %v3867
        %v3941 = vmul.f32 %v3827, %v3872
        %v3942 = vmul.f32 %v3828, %v3877
        %v3943 = vmul.f32 %v3829, %v3882
        %v3944 = vmul.f32 %v3830, %v3887
        %v3945 = vmul.f32 %v3831, %v3892
        %v3946 = vmul.f32 %v3832, %v3897
        %v3947 = vmul.f32 %v3833, %v3902
        %v3948 = vmul.f32 %v3834, %v3907
        %v3949 = vmul.f32 %v3835, %v3912
        %v3950 = vmul.f32 %v3836, %v3917
        %v3951 = vmul.f32 %v3837, %v3922
        %v3952 = vmul.f32 %v3838, %v3927
        %v3953 = vmul.f32 %v3839, %v3932
        %v3954 = vmul.f32 %v3840, %v3937
        %v3955 = vmul.f32 %v3843, %v3939
        %v3956 = vmul.f32 %v3844, %v3940
        %v3957 = vmul.f32 %v3845, %v3941
        %v3958 = vmul.f32 %v3846, %v3942
        %v3959 = vmul.f32 %v3847, %v3943
        %v3960 = vmul.f32 %v3848, %v3944
        %v3961 = vmul.f32 %v3849, %v3945
        %v3962 = vmul.f32 %v3850, %v3946
        %v3963 = vmul.f32 %v3851, %v3947
        %v3964 = vmul.f32 %v3852, %v3948
        %v3965 = vmul.f32 %v3853, %v3949
        %v3966 = vmul.f32 %v3854, %v3950
        %v3967 = vmul.f32 %v3855, %v3951
        %v3968 = vmul.f32 %v3856, %v3952
        %v3969 = vmul.f32 %v3857, %v3953
        %v3970 = vmul.f32 %v3858, %v3954
        %v3971 = vadd.f32 %v3955, %v3956
        %v3972 = vadd.f32 %v3971, %v3957
        %v3973 = vadd.f32 %v3972, %v3958
        %v3974 = vadd.f32 %v3973, %v3959
        %v3975 = vadd.f32 %v3974, %v3960
        %v3976 = vadd.f32 %v3975, %v3961
        %v3977 = vadd.f32 %v3976, %v3962
        %v3978 = vadd.f32 %v3977, %v3963
        %v3979 = vadd.f32 %v3978, %v3964
        %v3980 = vadd.f32 %v3979, %v3965
        %v3981 = vadd.f32 %v3980, %v3966
        %v3982 = vadd.f32 %v3981, %v3967
        %v3983 = vadd.f32 %v3982, %v3968
        %v3984 = vadd.f32 %v3983, %v3969
        %v3985 = vadd.f32 %v3984, %v3970
        %v3986 = vrot.slane %v3985, 4
        %v3987 = vadd.f32 %v3985, %v3986
        %v3988 = vrot.slane %v3987, 2
        %v3989 = vadd.f32 %v3987, %v3988
        %v3990 = vrot.slane %v3989, 1
        %v3991 = vadd.f32 %v3989, %v3990
        %v3992 = vld [vmem:[#allocation2] sm:$0x1]
        %v3993 = vstv %s3842
        %v3994 = vmul.f32 %v3993, %v3991
        %v3995 = vmul.f32 %v3994, %v545
        %v3996 = vadd.f32 %v3992, %v3995
        %3997 = vst [vmem:[#allocation2] sm:$0x1] %v3996
      $region52: #{position_mse_loss.1} parent=43 // pred_fallthru
        _
      // Predicated region
      $region53: #{position_mse_loss.1} parent=43 // pred_check
        %p3998 = pneg %p484
      $region54: #{position_mse_loss.1} parent=43 // pred_check_branch
        %4000 = sbr.rel (%p3998) target = $region56
      $region55: #{position_mse_loss.1} parent=43 // pred_region
        %v4001 = vld [vmem:[#allocation2] sm:$0x1]
        %4002 = vst [vmem:[%s481] sm:$0x1] %v4001
      $region56: #{position_mse_loss.1} parent=43 // pred_fallthru
        _
      %p4003 = scmp.lt.s32.totalorder %s32, 1
      %s4004 = scalar_select %p4003, %s32, 1
      %s4005 = scalar_lea.vmem %s9, %s4004
      // Predicated region
      $region57: #{position_mse_loss.1} parent=43 // pred_check
        %p4006 = pneg %p238
      $region58: #{position_mse_loss.1} parent=43 // pred_check_branch
        %4008 = sbr.rel (%p4006) target = $region60
      $region59: #{position_mse_loss.1} parent=43 // pred_region
        _
      $region60: #{position_mse_loss.1} parent=43 // pred_fallthru
        _
    $region44: #{position_mse_loss.1} parent=5 // pred_fallthru
      _
    %p4009 = scmp.le.s32.totalorder 2, %s23
    // Predicated region
    $region61: #{position_mse_loss.1} parent=5 // pred_check
      %p4010 = pneg %p4009
    $region62: #{position_mse_loss.1} parent=5 // pred_check_branch
      %4012 = sbr.rel (%p4010) target = $region64
    $region63: #{position_mse_loss.1} parent=5 // pred_region
      %s4013 = ssub.s32 %s23, 2
      // Predicated region
      $region65: #{position_mse_loss.1} parent=63 // pred_check
        %p4014 = pneg %p244
      $region66: #{position_mse_loss.1} parent=63 // pred_check_branch
        %4016 = sbr.rel (%p4014) target = $region68
      $region67: #{position_mse_loss.1} parent=63 // pred_region
        %p4017 = scmp.lt.s32.totalorder %s34, 1
        %s4018 = scalar_select %p4017, %s34, 1
        %s4019 = scalar_lea.vmem %s9, %s4018
      $region68: #{position_mse_loss.1} parent=63 // pred_fallthru
        _
    $region64: #{position_mse_loss.1} parent=5 // pred_fallthru
      _
  $region6: #{position_mse_loss.1} parent=0 // loop_footer
    %s27 = sadd.s32 1, %s23
  $region7: #{position_mse_loss.1} parent=0 // loop_footer_branch
    %22 = sbr.rel target = $region3
  $region8: #{position_mse_loss.1} parent=0 // loop_exit
    _

</llo_original>
